<compile_context>
chip_gen: v7x
topology: tpu7x:2x2x1
jax: 0.10.0
libtpu: 0.0.40
codegen_flags: <defaults>
</compile_context>

<pallas_src>
import functools

import jax
import jax.numpy as jnp
from jax import lax
from jax.experimental import pallas as pl
from jax.experimental.pallas import tpu as pltpu


# ----------------------------------------------------------------------------
# Fused kernel: BiLSTM (fwd+bwd) + FC emissions + CRF Viterbi forward recursion
# ----------------------------------------------------------------------------
# Per-program layouts (one batch tile of Bt rows, time-major):
#   x_ref     : (T, Bt, E)
#   mask_ref  : (T, Bt, 1)
#   wih_ref   : (E, 8H)   direction-blocked cols [fwd: i f o g | bwd: i f o g],
#                         0.5 sigmoid pre-scale folded into i/f/o columns
#   bih_ref   : (1, 8H)   (b_ih + b_hh), same layout/scaling
#   whhf_ref  : (H, 4H)   fwd recurrent weights, cols [i f o g] (i/f/o pre-scaled)
#   whhb_ref  : (H, 4H)   bwd recurrent weights
#   wfc_ref   : (2H, Nt), bfc_ref: (1, Nt)
#   trans_ref : (Nt, Nt)  transitions[prev, cur]
#   tbos_ref  : (1, Nt) = transitions[BOS, :],  teos_ref: (1, Nt) = transitions[:, EOS]
def _bilstm_crf_kernel(x_ref, mask_ref, wih_ref, bih_ref, whhf_ref, whhb_ref,
                       wfc_ref, bfc_ref, trans_ref, tbos_ref, teos_ref,
                       score_ref, lasttag_ref, bp_ref,
                       pre_scr, hidf_scr, hidb_scr,
                       hf_scr, hb_scr, cf_scr, cb_scr,
                       em_scr, alpha_scr):
    T, Bt, E = x_ref.shape
    H = whhf_ref.shape[0]
    H4 = 4 * H
    Nt = trans_ref.shape[0]
    f32 = jnp.float32
    bf16 = jnp.bfloat16
    UNROLL = 8                                                   # bounded unroll factor

    # ---- 1. input projection for BOTH directions, hoisted out of the recurrence:
    #         one (T*Bt, E) @ (E, 8H) bf16 MXU matmul (f32 accumulate) into VMEM.
    #         (T, Bt=8, E) -> (T*Bt, E) merge is sublane-tile aligned (Bt == 8).
    x_flat = x_ref[...].reshape(T * Bt, E).astype(bf16)
    pre_scr[...] = (jnp.dot(x_flat, wih_ref[...].astype(bf16),
                            preferred_element_type=f32)
                    + bih_ref[...])

    # ---- loop-invariant hoists -----------------------------------------------
    whhf_bf = whhf_ref[...].astype(bf16)
    whhb_bf = whhb_ref[...].astype(bf16)

    # ---- 2. fused forward + backward LSTM recurrence -------------------------
    hf_scr[...] = jnp.zeros_like(hf_scr)
    hb_scr[...] = jnp.zeros_like(hb_scr)
    cf_scr[...] = jnp.zeros_like(cf_scr)
    cb_scr[...] = jnp.zeros_like(cb_scr)

    def lstm_step(t, carry):
        tb = T - 1 - t                                           # backward-dir position
        h_f = hf_scr[...]
        h_b = hb_scr[...]
        c_f = cf_scr[...]
        c_b = cb_scr[...]
        # two per-direction recurrent matmuls (no block-diagonal zero MACs)
        rec_f = jnp.dot(h_f.astype(bf16), whhf_bf, preferred_element_type=f32)
        rec_b = jnp.dot(h_b.astype(bf16), whhb_bf, preferred_element_type=f32)
        off_f = pl.multiple_of(t * Bt, 8)
        off_b = pl.multiple_of(tb * Bt, 8)
        pre_f = pre_scr[pl.ds(off_f, Bt), :]                     # (Bt, 8H), aligned load
        pre_b = pre_scr[pl.ds(off_b, Bt), :]
        # direction-blocked combine: concat at the 4H = 128-lane vreg boundary
        gates = jnp.concatenate([rec_f + pre_f[:, 0:H4],
                                 rec_b + pre_b[:, H4:2 * H4]], axis=1)   # (Bt, 8H)
        # one EUP stream for all gates; sigmoid(z) = 0.5*tanh(0.5 z)+0.5 with the 0.5
        # pre-scale already folded into the i/f/o weight columns.
        y = jnp.tanh(gates)
        sig = y * 0.5 + 0.5                                      # full-width FMA
        i_f, f_f, o_f = sig[:, 0:H], sig[:, H:2 * H], sig[:, 2 * H:3 * H]
        g_f = y[:, 3 * H:4 * H]
        i_b, f_b, o_b = sig[:, H4:H4 + H], sig[:, H4 + H:H4 + 2 * H], sig[:, H4 + 2 * H:H4 + 3 * H]
        g_b = y[:, H4 + 3 * H:2 * H4]

        cf_new = f_f * c_f + i_f * g_f
        cb_new = f_b * c_b + i_b * g_b
        hf_new = o_f * jnp.tanh(cf_new)
        hb_new = o_b * jnp.tanh(cb_new)

        m_f = mask_ref[t]                                        # (Bt, 1)
        m_b = mask_ref[tb]
        # packed-sequence semantics: state does not advance past pads (x + m*(new-x))
        hf_scr[...] = h_f + m_f * (hf_new - h_f)
        hb_scr[...] = h_b + m_b * (hb_new - h_b)
        cf_scr[...] = c_f + m_f * (cf_new - c_f)
        cb_scr[...] = c_b + m_b * (cb_new - c_b)
        # pad positions output zero hiddens
        hidf_scr[pl.ds(off_f, Bt), :] = m_f * hf_new
        hidb_scr[pl.ds(off_b, Bt), :] = m_b * hb_new
        return carry

    lax.fori_loop(0, T, lstm_step, 0, unroll=min(UNROLL, T))

    # ---- 3. FC emissions for all timesteps at once (split 2H contraction,
    #          so the fwd/bwd hiddens never need concatenation) ----------------
    em_scr[...] = (jnp.dot(hidf_scr[...].astype(bf16), wfc_ref[0:H, :].astype(bf16),
                           preferred_element_type=f32)
                   + jnp.dot(hidb_scr[...].astype(bf16), wfc_ref[H:2 * H, :].astype(bf16),
                             preferred_element_type=f32)
                   + bfc_ref[...])

    # ---- 4. CRF Viterbi forward recursion -------------------------------------
    trans_all = trans_ref[...]                                   # (Nt, Nt) [prev, cur]
    trans_rows = [trans_all[p:p + 1, :] for p in range(Nt)]      # hoisted invariant rows
    alpha_scr[...] = tbos_ref[...] + em_scr[pl.ds(0, Bt), :]     # alphas_0
    bp_ref[0] = jnp.zeros((Bt, Nt), jnp.int32)

    def vit_step(t, carry):
        off = pl.multiple_of(t * Bt, 8)
        em_t = em_scr[pl.ds(off, Bt), :]                         # (Bt, Nt)
        alphas = alpha_scr[...]                                  # (Bt, Nt)
        # unrolled VPU max/select chain over the (small) prev-tag axis;
        # strict '>' keeps the smallest prev tag on ties (matches torch.max on CPU).
        best = alphas[:, 0:1] + trans_rows[0]                    # prev = 0
        bptr = jnp.zeros((Bt, Nt), jnp.int32)
        for p in range(1, Nt):
            cand = alphas[:, p:p + 1] + trans_rows[p]
            upd = cand > best
            bptr = jnp.where(upd, jnp.int32(p), bptr)
            best = jnp.maximum(best, cand)
        m = mask_ref[t]                                          # (Bt, 1)
        alpha_scr[...] = alphas + m * (best + em_t - alphas)
        # NOTE: bp at padded timesteps is written from stale alphas; backtracking
        # re-anchors at lengths-1, so those entries are never used.
        bp_ref[t] = bptr
        return carry

    lax.fori_loop(1, T, vit_step, 0, unroll=min(UNROLL, max(T - 1, 1)))

    # ---- 5. terminal transition + final best tag (unrolled VPU) ---------------
    end = alpha_scr[...] + teos_ref[...]                         # (Bt, Nt)
    best_sc = end[:, 0:1]
    best_tag = jnp.zeros((Bt, 1), jnp.int32)
    for c in range(1, Nt):
        cand = end[:, c:c + 1]
        upd = cand > best_sc
        best_tag = jnp.where(upd, jnp.int32(c), best_tag)
        best_sc = jnp.maximum(best_sc, cand)
    score_ref[...] = best_sc
    lasttag_ref[...] = best_tag


def bilstm_crf_fused(x_tbe, mask_tb1, wih_cat, b_cat, whh_f, whh_b, wfc_t, bfc2,
                     trans, t_bos, t_eos, *, batch_tile=8):
    T, Bp, E = x_tbe.shape
    H = whh_f.shape[0]
    Nt = trans.shape[0]
    Bt = batch_tile
    assert Bt % 8 == 0 and Bp % Bt == 0, "batch must be padded to the batch tile"
    nb = Bp // Bt

    def full_spec(a):                                            # un-tiled weight block
        nd = a.ndim
        return pl.BlockSpec(a.shape, lambda i, _nd=nd: (0,) * _nd)

    grid_spec = pltpu.PrefetchScalarGridSpec(
        num_scalar_prefetch=0,
        grid=(nb,),                                              # batch-tiled, parallel
        in_specs=[
            pl.BlockSpec((T, Bt, E), lambda i: (0, i, 0)),       # embeddings
            pl.BlockSpec((T, Bt, 1), lambda i: (0, i, 0)),       # mask
            full_spec(wih_cat), full_spec(b_cat),
            full_spec(whh_f), full_spec(whh_b),
            full_spec(wfc_t), full_spec(bfc2),
            full_spec(trans), full_spec(t_bos), full_spec(t_eos),
        ],
        out_specs=(
            pl.BlockSpec((Bt, 1), lambda i: (i, 0)),             # best final scores
            pl.BlockSpec((Bt, 1), lambda i: (i, 0)),             # best final tags
            pl.BlockSpec((T, Bt, Nt), lambda i: (0, i, 0)),      # backpointers
        ),
        scratch_shapes=[
            pltpu.VMEM((T * Bt, 8 * H), jnp.float32),            # pre-gates (both dirs)
            pltpu.VMEM((T * Bt, H), jnp.float32),                # fwd hiddens
            pltpu.VMEM((T * Bt, H), jnp.float32),                # bwd hiddens
            pltpu.VMEM((Bt, H), jnp.float32),                    # h_fwd state
            pltpu.VMEM((Bt, H), jnp.float32),                    # h_bwd state
            pltpu.VMEM((Bt, H), jnp.float32),                    # c_fwd state
            pltpu.VMEM((Bt, H), jnp.float32),                    # c_bwd state
            pltpu.VMEM((T * Bt, Nt), jnp.float32),               # emissions
            pltpu.VMEM((Bt, Nt), jnp.float32),                   # Viterbi alphas
        ],
    )
    return pl.pallas_call(
        _bilstm_crf_kernel,
        out_shape=(jax.ShapeDtypeStruct((Bp, 1), jnp.float32),
                   jax.ShapeDtypeStruct((Bp, 1), jnp.int32),
                   jax.ShapeDtypeStruct((T, Bp, Nt), jnp.int32)),
        grid_spec=grid_spec,
        compiler_params=pltpu.CompilerParams(
            dimension_semantics=("parallel",),                   # 2 TCs on v7x
            vmem_limit_bytes=32 * 1024 * 1024),                  # explicit, safe on v5e..v7x
    )(x_tbe, mask_tb1, wih_cat, b_cat, whh_f, whh_b, wfc_t, bfc2, trans, t_bos, t_eos)


# ----------------------------------------------------------------------------
# Glue: Viterbi backtracking (data-dependent scalar walk, plain JAX)
# ----------------------------------------------------------------------------
def backtrack_paths(bp, last_tags, lengths, pad_idx):
    # bp: (T, B, Nt), last_tags: (B,), lengths: (B,)  ->  path (B, T), pad-filled
    T = bp.shape[0]

    def step(carry, t):
        prev_cur = carry                                          # tag at position t+1
        t1 = jnp.minimum(t + 1, T - 1)
        bp_t1 = lax.dynamic_index_in_dim(bp, t1, axis=0, keepdims=False)   # (B, Nt)
        cand = jnp.take_along_axis(bp_t1, prev_cur[:, None], axis=1)[:, 0]
        cur = jnp.where(t == lengths - 1, last_tags, cand)
        out = jnp.where(t <= lengths - 1, cur, pad_idx)
        return cur, out

    ts = jnp.arange(T - 1, -1, -1, dtype=jnp.int32)
    _, outs = lax.scan(step, last_tags, ts)                       # (T, B), reverse order
    return outs[::-1].T                                           # (B, T)


# ----------------------------------------------------------------------------
# Weight packing: direction-blocked columns [i f o g] with sigmoid 0.5 folded in
# ----------------------------------------------------------------------------
def _pack_dir_weights(w_ih, w_hh, b):
    # PyTorch gate row order is (i, f, g, o); reorder to (i, f, o, g) and fold the 0.5
    # sigmoid pre-scale into i/f/o so the kernel uses one tanh for every gate.
    H = w_hh.shape[1]
    order = (0, 1, 3, 2)
    scale = (0.5, 0.5, 0.5, 1.0)
    wih_cols, whh_cols, b_parts = [], [], []
    for s, g in zip(scale, order):
        sl = slice(g * H, (g + 1) * H)
        wih_cols.append(s * w_ih[sl].T)                           # (E, H)
        whh_cols.append(s * w_hh[sl].T)                           # (H, H)
        b_parts.append(s * b[sl])
    return (jnp.concatenate(wih_cols, axis=1),                    # (E, 4H)
            jnp.concatenate(whh_cols, axis=1),                    # (H, 4H)
            jnp.concatenate(b_parts))                             # (4H,)


# ----------------------------------------------------------------------------
# Full BilstmCRF forward
# ----------------------------------------------------------------------------
def bilstm_crf_forward(x, params, pad_idx=0, batch_tile=8):
    B, T = x.shape
    Bp = ((B + batch_tile - 1) // batch_tile) * batch_tile        # sublane-aligned batch
    if Bp != B:
        x_p = jnp.concatenate(
            [x, jnp.full((Bp - B, T), pad_idx, dtype=x.dtype)], axis=0)
    else:
        x_p = x

    mask = (x_p != pad_idx).astype(jnp.float32)                   # (Bp, T)
    fmap = params["embedding"][x_p]                               # (Bp, T, E)

    x_tbe = jnp.transpose(fmap, (1, 0, 2))                        # (T, Bp, E) time-major
    mask_tb1 = mask.T[:, :, None]                                 # (T, Bp, 1)

    # TODO(synk): BiLSTM source not shown; pack_padded_sequence semantics assumed
    # (zero outputs at pads, backward direction starts at the last valid token).
    wih_f, whh_f, b_f = _pack_dir_weights(
        params["w_ih_f"], params["w_hh_f"], params["b_ih_f"] + params["b_hh_f"])
    wih_b, whh_b, b_b = _pack_dir_weights(
        params["w_ih_b"], params["w_hh_b"], params["b_ih_b"] + params["b_hh_b"])
    wih_cat = jnp.concatenate([wih_f, wih_b], axis=1)             # (E, 8H) dir-blocked
    b_cat = jnp.concatenate([b_f, b_b])[None, :]                  # (1, 8H)

    trans = params["transitions"]
    score, last_tag, bp = bilstm_crf_fused(
        x_tbe, mask_tb1, wih_cat, b_cat, whh_f, whh_b,
        params["w_fc"].T, params["b_fc"][None, :],
        trans, trans[BOS_ID][None, :], trans[:, EOS_ID][None, :],
        batch_tile=batch_tile)

    lengths = mask.sum(axis=1).astype(jnp.int32)                  # (Bp,)
    path = backtrack_paths(bp, last_tag[:, 0], lengths, pad_idx)  # (Bp, T)
    return score[:B, 0], path[:B]


# ----------------------------------------------------------------------------
# Deterministic parameter init (mirrors nn.Embedding / nn.LSTM / nn.Linear / CRF)
# ----------------------------------------------------------------------------
START_TAG, STOP_TAG = "<start>", "<stop>"
TAG_TO_IDX = {"<pad>": 0, "O": 1, "B-PER": 2, "I-PER": 3, "B-LOC": 4, "I-LOC": 5,
              START_TAG: 6, STOP_TAG: 7}
PAD_ID = 0
BOS_ID = TAG_TO_IDX[START_TAG]
EOS_ID = TAG_TO_IDX[STOP_TAG]


def init_params(vocab_size, embedding_dim, hidden_dim, n_tags, pad_idx=0):
    keys = jax.random.split(jax.random.PRNGKey(42), 16)
    E, H = embedding_dim, hidden_dim
    emb = jax.random.normal(keys[0], (vocab_size, E), jnp.float32)
    emb = emb.at[pad_idx].set(0.0)                                # padding_idx=0

    k = 1.0 / jnp.sqrt(jnp.float32(H))
    u = lambda key, shape: jax.random.uniform(key, shape, jnp.float32, -k, k)
    w_ih_f, w_hh_f = u(keys[1], (4 * H, E)), u(keys[2], (4 * H, H))
    b_ih_f, b_hh_f = u(keys[3], (4 * H,)), u(keys[4], (4 * H,))
    w_ih_b, w_hh_b = u(keys[5], (4 * H, E)), u(keys[6], (4 * H, H))
    b_ih_b, b_hh_b = u(keys[7], (4 * H,)), u(keys[8], (4 * H,))

    kf = 1.0 / jnp.sqrt(jnp.float32(2 * H))
    w_fc = jax.random.uniform(keys[9], (n_tags, 2 * H), jnp.float32, -kf, kf)
    b_fc = jax.random.uniform(keys[10], (n_tags,), jnp.float32, -kf, kf)

    trans = jax.random.uniform(keys[11], (n_tags, n_tags), jnp.float32, -0.1, 0.1)
    trans = trans.at[:, BOS_ID].set(-10000.0)
    trans = trans.at[EOS_ID, :].set(-10000.0)
    trans = trans.at[PAD_ID, :].set(-10000.0)
    trans = trans.at[:, PAD_ID].set(-10000.0)
    trans = trans.at[PAD_ID, EOS_ID].set(0.0)
    trans = trans.at[PAD_ID, PAD_ID].set(0.0)

    return dict(embedding=emb,
                w_ih_f=w_ih_f, w_hh_f=w_hh_f, b_ih_f=b_ih_f, b_hh_f=b_hh_f,
                w_ih_b=w_ih_b, w_hh_b=w_hh_b, b_ih_b=b_ih_b, b_hh_b=b_hh_b,
                w_fc=w_fc, b_fc=b_fc, transitions=trans)


if __name__ == "__main__":
    B, T = 2, 8
    VOCAB, E, H = 50, 32, 32
    N_TAGS = len(TAG_TO_IDX)

    params = init_params(VOCAB, E, H, N_TAGS, pad_idx=PAD_ID)

    key = jax.random.PRNGKey(0)
    x = jax.random.randint(key, (B, T), 1, VOCAB, dtype=jnp.int32)
    x = x.at[1, 5:].set(0)                                        # pad tail of 2nd sample

    fwd = jax.jit(functools.partial(bilstm_crf_forward, params=params, pad_idx=PAD_ID))
    score, path = fwd(x)
    jax.block_until_ready((score, path))
    print("KERNEL_OK")
</pallas_src>

<mosaic_0001>
module attributes {stable_mosaic.version = 11 : i64} {
  func.func @_bilstm_crf_kernel(%arg0: i32, %arg1: memref<8x8x32xf32, #tpu.memory_space<vmem>>, %arg2: memref<8x8x1xf32, #tpu.memory_space<vmem>>, %arg3: memref<32x256xf32, #tpu.memory_space<vmem>>, %arg4: memref<1x256xf32, #tpu.memory_space<vmem>>, %arg5: memref<32x128xf32, #tpu.memory_space<vmem>>, %arg6: memref<32x128xf32, #tpu.memory_space<vmem>>, %arg7: memref<64x8xf32, #tpu.memory_space<vmem>>, %arg8: memref<1x8xf32, #tpu.memory_space<vmem>>, %arg9: memref<8x8xf32, #tpu.memory_space<vmem>>, %arg10: memref<1x8xf32, #tpu.memory_space<vmem>>, %arg11: memref<1x8xf32, #tpu.memory_space<vmem>>, %arg12: memref<8x1xf32, #tpu.memory_space<vmem>>, %arg13: memref<8x1xi32, #tpu.memory_space<vmem>>, %arg14: memref<8x8x8xi32, #tpu.memory_space<vmem>>, %arg15: memref<64x256xf32, #tpu.memory_space<vmem>>, %arg16: memref<64x32xf32, #tpu.memory_space<vmem>>, %arg17: memref<64x32xf32, #tpu.memory_space<vmem>>, %arg18: memref<8x32xf32, #tpu.memory_space<vmem>>, %arg19: memref<8x32xf32, #tpu.memory_space<vmem>>, %arg20: memref<8x32xf32, #tpu.memory_space<vmem>>, %arg21: memref<8x32xf32, #tpu.memory_space<vmem>>, %arg22: memref<64x8xf32, #tpu.memory_space<vmem>>, %arg23: memref<8x8xf32, #tpu.memory_space<vmem>>) attributes {dimension_semantics = [#tpu.dimension_semantics<parallel>], iteration_bounds = array<i64: 1>, scalar_prefetch = 0 : i64, scratch_operands = 9 : i64, tpu.core_type = #tpu.core_type<tc>, window_params = [{transform_indices = @transform_0, window_bounds = array<i64: 8, 8, 32>}, {transform_indices = @transform_1, window_bounds = array<i64: 8, 8, 1>}, {pipeline_mode = #tpu.pipeline_mode<synchronous>, transform_indices = @transform_2, window_bounds = array<i64: 32, 256>}, {pipeline_mode = #tpu.pipeline_mode<synchronous>, transform_indices = @transform_3, window_bounds = array<i64: 1, 256>}, {pipeline_mode = #tpu.pipeline_mode<synchronous>, transform_indices = @transform_4, window_bounds = array<i64: 32, 128>}, {pipeline_mode = #tpu.pipeline_mode<synchronous>, transform_indices = @transform_5, window_bounds = array<i64: 32, 128>}, {pipeline_mode = #tpu.pipeline_mode<synchronous>, transform_indices = @transform_6, window_bounds = array<i64: 64, 8>}, {pipeline_mode = #tpu.pipeline_mode<synchronous>, transform_indices = @transform_7, window_bounds = array<i64: 1, 8>}, {pipeline_mode = #tpu.pipeline_mode<synchronous>, transform_indices = @transform_8, window_bounds = array<i64: 8, 8>}, {pipeline_mode = #tpu.pipeline_mode<synchronous>, transform_indices = @transform_9, window_bounds = array<i64: 1, 8>}, {pipeline_mode = #tpu.pipeline_mode<synchronous>, transform_indices = @transform_10, window_bounds = array<i64: 1, 8>}, {transform_indices = @transform_11, window_bounds = array<i64: 8, 1>}, {transform_indices = @transform_12, window_bounds = array<i64: 8, 1>}, {transform_indices = @transform_13, window_bounds = array<i64: 8, 8, 8>}]} {
    %c0 = arith.constant 0 : index
    %c0_0 = arith.constant 0 : index
    %c0_1 = arith.constant 0 : index
    %0 = vector.load %arg1[%c0, %c0_0, %c0_1] : memref<8x8x32xf32, #tpu.memory_space<vmem>>, vector<8x8x32xf32>
    %1 = vector.shape_cast %0 : vector<8x8x32xf32> to vector<64x32xf32>
    %2 = arith.truncf %1 : vector<64x32xf32> to vector<64x32xbf16>
    %c0_2 = arith.constant 0 : index
    %c0_3 = arith.constant 0 : index
    %3 = vector.load %arg3[%c0_2, %c0_3] : memref<32x256xf32, #tpu.memory_space<vmem>>, vector<32x256xf32>
    %4 = arith.truncf %3 : vector<32x256xf32> to vector<32x256xbf16>
    %cst = arith.constant dense<0.000000e+00> : vector<64x256xf32>
    %5 = tpu.matmul %2, %4, %cst {dimension_numbers = #tpu.dot_dimension_numbers<[1], [0], [0], [1], [0, 0, 1, 1], [], []>} : vector<64x32xbf16>, vector<32x256xbf16>, vector<64x256xf32> -> vector<64x256xf32>
    %c0_4 = arith.constant 0 : index
    %c0_5 = arith.constant 0 : index
    %6 = vector.load %arg4[%c0_4, %c0_5] : memref<1x256xf32, #tpu.memory_space<vmem>>, vector<1x256xf32>
    %7 = vector.broadcast %6 : vector<1x256xf32> to vector<64x256xf32>
    %8 = arith.addf %5, %7 : vector<64x256xf32>
    %c0_6 = arith.constant 0 : index
    %c0_7 = arith.constant 0 : index
    %9 = vector.load %arg15[%c0_6, %c0_7] : memref<64x256xf32, #tpu.memory_space<vmem>>, vector<64x256xf32>
    tpu.vector_store %arg15[%c0_6, %c0_7], %8 {strides = array<i32>} : memref<64x256xf32, #tpu.memory_space<vmem>>, vector<64x256xf32>,
    %c0_8 = arith.constant 0 : index
    %c0_9 = arith.constant 0 : index
    %10 = vector.load %arg5[%c0_8, %c0_9] : memref<32x128xf32, #tpu.memory_space<vmem>>, vector<32x128xf32>
    %11 = arith.truncf %10 : vector<32x128xf32> to vector<32x128xbf16>
    %c0_10 = arith.constant 0 : index
    %c0_11 = arith.constant 0 : index
    %12 = vector.load %arg6[%c0_10, %c0_11] : memref<32x128xf32, #tpu.memory_space<vmem>>, vector<32x128xf32>
    %13 = arith.truncf %12 : vector<32x128xf32> to vector<32x128xbf16>
    %cst_12 = arith.constant 0.000000e+00 : f32
    %14 = vector.broadcast %cst_12 : f32 to vector<8x32xf32>
    %c0_13 = arith.constant 0 : index
    %c0_14 = arith.constant 0 : index
    %15 = vector.load %arg18[%c0_13, %c0_14] : memref<8x32xf32, #tpu.memory_space<vmem>>, vector<8x32xf32>
    tpu.vector_store %arg18[%c0_13, %c0_14], %14 {strides = array<i32>} : memref<8x32xf32, #tpu.memory_space<vmem>>, vector<8x32xf32>,
    %cst_15 = arith.constant 0.000000e+00 : f32
    %16 = vector.broadcast %cst_15 : f32 to vector<8x32xf32>
    %c0_16 = arith.constant 0 : index
    %c0_17 = arith.constant 0 : index
    %17 = vector.load %arg19[%c0_16, %c0_17] : memref<8x32xf32, #tpu.memory_space<vmem>>, vector<8x32xf32>
    tpu.vector_store %arg19[%c0_16, %c0_17], %16 {strides = array<i32>} : memref<8x32xf32, #tpu.memory_space<vmem>>, vector<8x32xf32>,
    %cst_18 = arith.constant 0.000000e+00 : f32
    %18 = vector.broadcast %cst_18 : f32 to vector<8x32xf32>
    %c0_19 = arith.constant 0 : index
    %c0_20 = arith.constant 0 : index
    %19 = vector.load %arg20[%c0_19, %c0_20] : memref<8x32xf32, #tpu.memory_space<vmem>>, vector<8x32xf32>
    tpu.vector_store %arg20[%c0_19, %c0_20], %18 {strides = array<i32>} : memref<8x32xf32, #tpu.memory_space<vmem>>, vector<8x32xf32>,
    %cst_21 = arith.constant 0.000000e+00 : f32
    %20 = vector.broadcast %cst_21 : f32 to vector<8x32xf32>
    %c0_22 = arith.constant 0 : index
    %c0_23 = arith.constant 0 : index
    %21 = vector.load %arg21[%c0_22, %c0_23] : memref<8x32xf32, #tpu.memory_space<vmem>>, vector<8x32xf32>
    tpu.vector_store %arg21[%c0_22, %c0_23], %20 {strides = array<i32>} : memref<8x32xf32, #tpu.memory_space<vmem>>, vector<8x32xf32>,
    %c0_i32 = arith.constant 0 : i32
    %c7_i32 = arith.constant 7 : i32
    %22 = arith.subi %c7_i32, %c0_i32 : i32
    %c0_24 = arith.constant 0 : index
    %c0_25 = arith.constant 0 : index
    %23 = vector.load %arg18[%c0_24, %c0_25] : memref<8x32xf32, #tpu.memory_space<vmem>>, vector<8x32xf32>
    %c0_26 = arith.constant 0 : index
    %c0_27 = arith.constant 0 : index
    %24 = vector.load %arg19[%c0_26, %c0_27] : memref<8x32xf32, #tpu.memory_space<vmem>>, vector<8x32xf32>
    %c0_28 = arith.constant 0 : index
    %c0_29 = arith.constant 0 : index
    %25 = vector.load %arg20[%c0_28, %c0_29] : memref<8x32xf32, #tpu.memory_space<vmem>>, vector<8x32xf32>
    %c0_30 = arith.constant 0 : index
    %c0_31 = arith.constant 0 : index
    %26 = vector.load %arg21[%c0_30, %c0_31] : memref<8x32xf32, #tpu.memory_space<vmem>>, vector<8x32xf32>
    %27 = arith.truncf %23 : vector<8x32xf32> to vector<8x32xbf16>
    %cst_32 = arith.constant dense<0.000000e+00> : vector<8x128xf32>
    %28 = tpu.matmul %27, %11, %cst_32 {dimension_numbers = #tpu.dot_dimension_numbers<[1], [0], [0], [1], [0, 0, 1, 1], [], []>} : vector<8x32xbf16>, vector<32x128xbf16>, vector<8x128xf32> -> vector<8x128xf32>
    %29 = arith.truncf %24 : vector<8x32xf32> to vector<8x32xbf16>
    %cst_33 = arith.constant dense<0.000000e+00> : vector<8x128xf32>
    %30 = tpu.matmul %29, %13, %cst_33 {dimension_numbers = #tpu.dot_dimension_numbers<[1], [0], [0], [1], [0, 0, 1, 1], [], []>} : vector<8x32xbf16>, vector<32x128xbf16>, vector<8x128xf32> -> vector<8x128xf32>
    %c8_i32 = arith.constant 8 : i32
    %31 = arith.muli %c0_i32, %c8_i32 : i32
    %32 = tpu.assume_multiple %31, 8 : i32
    %c8_i32_34 = arith.constant 8 : i32
    %33 = arith.muli %22, %c8_i32_34 : i32
    %34 = tpu.assume_multiple %33, 8 : i32
    %35 = arith.index_cast %32 : i32 to index
    %c0_35 = arith.constant 0 : index
    %36 = vector.load %arg15[%35, %c0_35] : memref<64x256xf32, #tpu.memory_space<vmem>>, vector<8x256xf32>
    %37 = arith.index_cast %34 : i32 to index
    %c0_36 = arith.constant 0 : index
    %38 = vector.load %arg15[%37, %c0_36] : memref<64x256xf32, #tpu.memory_space<vmem>>, vector<8x256xf32>
    %39 = vector.extract_strided_slice %36 {offsets = [0, 0], sizes = [8, 128], strides = [1, 1]} : vector<8x256xf32> to vector<8x128xf32>
    %40 = arith.addf %28, %39 : vector<8x128xf32>
    %41 = vector.extract_strided_slice %38 {offsets = [0, 128], sizes = [8, 128], strides = [1, 1]} : vector<8x256xf32> to vector<8x128xf32>
    %42 = arith.addf %30, %41 : vector<8x128xf32>
    %43 = tpu.concatenate %40, %42 in 1 : vector<8x128xf32>, vector<8x128xf32> -> vector<8x256xf32>
    %44 = math.tanh %43 : vector<8x256xf32>
    %cst_37 = arith.constant 5.000000e-01 : f32
    %45 = vector.broadcast %cst_37 : f32 to vector<8x256xf32>
    %46 = arith.mulf %44, %45 : vector<8x256xf32>
    %cst_38 = arith.constant 5.000000e-01 : f32
    %47 = vector.broadcast %cst_38 : f32 to vector<8x256xf32>
    %48 = arith.addf %46, %47 : vector<8x256xf32>
    %49 = vector.extract_strided_slice %48 {offsets = [0, 0], sizes = [8, 32], strides = [1, 1]} : vector<8x256xf32> to vector<8x32xf32>
    %50 = vector.extract_strided_slice %48 {offsets = [0, 32], sizes = [8, 32], strides = [1, 1]} : vector<8x256xf32> to vector<8x32xf32>
    %51 = vector.extract_strided_slice %48 {offsets = [0, 64], sizes = [8, 32], strides = [1, 1]} : vector<8x256xf32> to vector<8x32xf32>
    %52 = vector.extract_strided_slice %44 {offsets = [0, 96], sizes = [8, 32], strides = [1, 1]} : vector<8x256xf32> to vector<8x32xf32>
    %53 = vector.extract_strided_slice %48 {offsets = [0, 128], sizes = [8, 32], strides = [1, 1]} : vector<8x256xf32> to vector<8x32xf32>
    %54 = vector.extract_strided_slice %48 {offsets = [0, 160], sizes = [8, 32], strides = [1, 1]} : vector<8x256xf32> to vector<8x32xf32>
    %55 = vector.extract_strided_slice %48 {offsets = [0, 192], sizes = [8, 32], strides = [1, 1]} : vector<8x256xf32> to vector<8x32xf32>
    %56 = vector.extract_strided_slice %44 {offsets = [0, 224], sizes = [8, 32], strides = [1, 1]} : vector<8x256xf32> to vector<8x32xf32>
    %57 = arith.mulf %50, %25 : vector<8x32xf32>
    %58 = arith.mulf %49, %52 : vector<8x32xf32>
    %59 = arith.addf %57, %58 : vector<8x32xf32>
    %60 = arith.mulf %54, %26 : vector<8x32xf32>
    %61 = arith.mulf %53, %56 : vector<8x32xf32>
    %62 = arith.addf %60, %61 : vector<8x32xf32>
    %63 = math.tanh %59 : vector<8x32xf32>
    %64 = arith.mulf %51, %63 : vector<8x32xf32>
    %65 = math.tanh %62 : vector<8x32xf32>
    %66 = arith.mulf %55, %65 : vector<8x32xf32>
    %67 = arith.index_cast %c0_i32 : i32 to index
    %c0_39 = arith.constant 0 : index
    %c0_40 = arith.constant 0 : index
    %68 = vector.load %arg2[%67, %c0_39, %c0_40] : memref<8x8x1xf32, #tpu.memory_space<vmem>>, vector<1x8x1xf32>
    %69 = vector.shape_cast %68 : vector<1x8x1xf32> to vector<8x1xf32>
    %70 = arith.index_cast %22 : i32 to index
    %c0_41 = arith.constant 0 : index
    %c0_42 = arith.constant 0 : index
    %71 = vector.load %arg2[%70, %c0_41, %c0_42] : memref<8x8x1xf32, #tpu.memory_space<vmem>>, vector<1x8x1xf32>
    %72 = vector.shape_cast %71 : vector<1x8x1xf32> to vector<8x1xf32>
    %73 = arith.subf %64, %23 : vector<8x32xf32>
    %74 = vector.broadcast %69 : vector<8x1xf32> to vector<8x32xf32>
    %75 = arith.mulf %74, %73 : vector<8x32xf32>
    %76 = arith.addf %23, %75 : vector<8x32xf32>
    %c0_43 = arith.constant 0 : index
    %c0_44 = arith.constant 0 : index
    %77 = vector.load %arg18[%c0_43, %c0_44] : memref<8x32xf32, #tpu.memory_space<vmem>>, vector<8x32xf32>
    tpu.vector_store %arg18[%c0_43, %c0_44], %76 {strides = array<i32>} : memref<8x32xf32, #tpu.memory_space<vmem>>, vector<8x32xf32>,
    %78 = arith.subf %66, %24 : vector<8x32xf32>
    %79 = vector.broadcast %72 : vector<8x1xf32> to vector<8x32xf32>
    %80 = arith.mulf %79, %78 : vector<8x32xf32>
    %81 = arith.addf %24, %80 : vector<8x32xf32>
    %c0_45 = arith.constant 0 : index
    %c0_46 = arith.constant 0 : index
    %82 = vector.load %arg19[%c0_45, %c0_46] : memref<8x32xf32, #tpu.memory_space<vmem>>, vector<8x32xf32>
    tpu.vector_store %arg19[%c0_45, %c0_46], %81 {strides = array<i32>} : memref<8x32xf32, #tpu.memory_space<vmem>>, vector<8x32xf32>,
    %83 = arith.subf %59, %25 : vector<8x32xf32>
    %84 = vector.broadcast %69 : vector<8x1xf32> to vector<8x32xf32>
    %85 = arith.mulf %84, %83 : vector<8x32xf32>
    %86 = arith.addf %25, %85 : vector<8x32xf32>
    %c0_47 = arith.constant 0 : index
    %c0_48 = arith.constant 0 : index
    %87 = vector.load %arg20[%c0_47, %c0_48] : memref<8x32xf32, #tpu.memory_space<vmem>>, vector<8x32xf32>
    tpu.vector_store %arg20[%c0_47, %c0_48], %86 {strides = array<i32>} : memref<8x32xf32, #tpu.memory_space<vmem>>, vector<8x32xf32>,
    %88 = arith.subf %62, %26 : vector<8x32xf32>
    %89 = vector.broadcast %72 : vector<8x1xf32> to vector<8x32xf32>
    %90 = arith.mulf %89, %88 : vector<8x32xf32>
    %91 = arith.addf %26, %90 : vector<8x32xf32>
    %c0_49 = arith.constant 0 : index
    %c0_50 = arith.constant 0 : index
    %92 = vector.load %arg21[%c0_49, %c0_50] : memref<8x32xf32, #tpu.memory_space<vmem>>, vector<8x32xf32>
    tpu.vector_store %arg21[%c0_49, %c0_50], %91 {strides = array<i32>} : memref<8x32xf32, #tpu.memory_space<vmem>>, vector<8x32xf32>,
    %93 = vector.broadcast %69 : vector<8x1xf32> to vector<8x32xf32>
    %94 = arith.mulf %93, %64 : vector<8x32xf32>
    %95 = arith.index_cast %32 : i32 to index
    %c0_51 = arith.constant 0 : index
    %96 = vector.load %arg16[%95, %c0_51] : memref<64x32xf32, #tpu.memory_space<vmem>>, vector<8x32xf32>
    tpu.vector_store %arg16[%95, %c0_51], %94 {strides = array<i32>} : memref<64x32xf32, #tpu.memory_space<vmem>>, vector<8x32xf32>,
    %97 = vector.broadcast %72 : vector<8x1xf32> to vector<8x32xf32>
    %98 = arith.mulf %97, %66 : vector<8x32xf32>
    %99 = arith.index_cast %34 : i32 to index
    %c0_52 = arith.constant 0 : index
    %100 = vector.load %arg17[%99, %c0_52] : memref<64x32xf32, #tpu.memory_space<vmem>>, vector<8x32xf32>
    tpu.vector_store %arg17[%99, %c0_52], %98 {strides = array<i32>} : memref<64x32xf32, #tpu.memory_space<vmem>>, vector<8x32xf32>,
    %c1_i32 = arith.constant 1 : i32
    %c7_i32_53 = arith.constant 7 : i32
    %101 = arith.subi %c7_i32_53, %c1_i32 : i32
    %c0_54 = arith.constant 0 : index
    %c0_55 = arith.constant 0 : index
    %102 = vector.load %arg18[%c0_54, %c0_55] : memref<8x32xf32, #tpu.memory_space<vmem>>, vector<8x32xf32>
    %c0_56 = arith.constant 0 : index
    %c0_57 = arith.constant 0 : index
    %103 = vector.load %arg19[%c0_56, %c0_57] : memref<8x32xf32, #tpu.memory_space<vmem>>, vector<8x32xf32>
    %c0_58 = arith.constant 0 : index
    %c0_59 = arith.constant 0 : index
    %104 = vector.load %arg20[%c0_58, %c0_59] : memref<8x32xf32, #tpu.memory_space<vmem>>, vector<8x32xf32>
    %c0_60 = arith.constant 0 : index
    %c0_61 = arith.constant 0 : index
    %105 = vector.load %arg21[%c0_60, %c0_61] : memref<8x32xf32, #tpu.memory_space<vmem>>, vector<8x32xf32>
    %106 = arith.truncf %102 : vector<8x32xf32> to vector<8x32xbf16>
    %cst_62 = arith.constant dense<0.000000e+00> : vector<8x128xf32>
    %107 = tpu.matmul %106, %11, %cst_62 {dimension_numbers = #tpu.dot_dimension_numbers<[1], [0], [0], [1], [0, 0, 1, 1], [], []>} : vector<8x32xbf16>, vector<32x128xbf16>, vector<8x128xf32> -> vector<8x128xf32>
    %108 = arith.truncf %103 : vector<8x32xf32> to vector<8x32xbf16>
    %cst_63 = arith.constant dense<0.000000e+00> : vector<8x128xf32>
    %109 = tpu.matmul %108, %13, %cst_63 {dimension_numbers = #tpu.dot_dimension_numbers<[1], [0], [0], [1], [0, 0, 1, 1], [], []>} : vector<8x32xbf16>, vector<32x128xbf16>, vector<8x128xf32> -> vector<8x128xf32>
    %c8_i32_64 = arith.constant 8 : i32
    %110 = arith.muli %c1_i32, %c8_i32_64 : i32
    %111 = tpu.assume_multiple %110, 8 : i32
    %c8_i32_65 = arith.constant 8 : i32
    %112 = arith.muli %101, %c8_i32_65 : i32
    %113 = tpu.assume_multiple %112, 8 : i32
    %114 = arith.index_cast %111 : i32 to index
    %c0_66 = arith.constant 0 : index
    %115 = vector.load %arg15[%114, %c0_66] : memref<64x256xf32, #tpu.memory_space<vmem>>, vector<8x256xf32>
    %116 = arith.index_cast %113 : i32 to index
    %c0_67 = arith.constant 0 : index
    %117 = vector.load %arg15[%116, %c0_67] : memref<64x256xf32, #tpu.memory_space<vmem>>, vector<8x256xf32>
    %118 = vector.extract_strided_slice %115 {offsets = [0, 0], sizes = [8, 128], strides = [1, 1]} : vector<8x256xf32> to vector<8x128xf32>
    %119 = arith.addf %107, %118 : vector<8x128xf32>
    %120 = vector.extract_strided_slice %117 {offsets = [0, 128], sizes = [8, 128], strides = [1, 1]} : vector<8x256xf32> to vector<8x128xf32>
    %121 = arith.addf %109, %120 : vector<8x128xf32>
    %122 = tpu.concatenate %119, %121 in 1 : vector<8x128xf32>, vector<8x128xf32> -> vector<8x256xf32>
    %123 = math.tanh %122 : vector<8x256xf32>
    %cst_68 = arith.constant 5.000000e-01 : f32
    %124 = vector.broadcast %cst_68 : f32 to vector<8x256xf32>
    %125 = arith.mulf %123, %124 : vector<8x256xf32>
    %cst_69 = arith.constant 5.000000e-01 : f32
    %126 = vector.broadcast %cst_69 : f32 to vector<8x256xf32>
    %127 = arith.addf %125, %126 : vector<8x256xf32>
    %128 = vector.extract_strided_slice %127 {offsets = [0, 0], sizes = [8, 32], strides = [1, 1]} : vector<8x256xf32> to vector<8x32xf32>
    %129 = vector.extract_strided_slice %127 {offsets = [0, 32], sizes = [8, 32], strides = [1, 1]} : vector<8x256xf32> to vector<8x32xf32>
    %130 = vector.extract_strided_slice %127 {offsets = [0, 64], sizes = [8, 32], strides = [1, 1]} : vector<8x256xf32> to vector<8x32xf32>
    %131 = vector.extract_strided_slice %123 {offsets = [0, 96], sizes = [8, 32], strides = [1, 1]} : vector<8x256xf32> to vector<8x32xf32>
    %132 = vector.extract_strided_slice %127 {offsets = [0, 128], sizes = [8, 32], strides = [1, 1]} : vector<8x256xf32> to vector<8x32xf32>
    %133 = vector.extract_strided_slice %127 {offsets = [0, 160], sizes = [8, 32], strides = [1, 1]} : vector<8x256xf32> to vector<8x32xf32>
    %134 = vector.extract_strided_slice %127 {offsets = [0, 192], sizes = [8, 32], strides = [1, 1]} : vector<8x256xf32> to vector<8x32xf32>
    %135 = vector.extract_strided_slice %123 {offsets = [0, 224], sizes = [8, 32], strides = [1, 1]} : vector<8x256xf32> to vector<8x32xf32>
    %136 = arith.mulf %129, %104 : vector<8x32xf32>
    %137 = arith.mulf %128, %131 : vector<8x32xf32>
    %138 = arith.addf %136, %137 : vector<8x32xf32>
    %139 = arith.mulf %133, %105 : vector<8x32xf32>
    %140 = arith.mulf %132, %135 : vector<8x32xf32>
    %141 = arith.addf %139, %140 : vector<8x32xf32>
    %142 = math.tanh %138 : vector<8x32xf32>
    %143 = arith.mulf %130, %142 : vector<8x32xf32>
    %144 = math.tanh %141 : vector<8x32xf32>
    %145 = arith.mulf %134, %144 : vector<8x32xf32>
    %146 = arith.index_cast %c1_i32 : i32 to index
    %c0_70 = arith.constant 0 : index
    %c0_71 = arith.constant 0 : index
    %147 = vector.load %arg2[%146, %c0_70, %c0_71] : memref<8x8x1xf32, #tpu.memory_space<vmem>>, vector<1x8x1xf32>
    %148 = vector.shape_cast %147 : vector<1x8x1xf32> to vector<8x1xf32>
    %149 = arith.index_cast %101 : i32 to index
    %c0_72 = arith.constant 0 : index
    %c0_73 = arith.constant 0 : index
    %150 = vector.load %arg2[%149, %c0_72, %c0_73] : memref<8x8x1xf32, #tpu.memory_space<vmem>>, vector<1x8x1xf32>
    %151 = vector.shape_cast %150 : vector<1x8x1xf32> to vector<8x1xf32>
    %152 = arith.subf %143, %102 : vector<8x32xf32>
    %153 = vector.broadcast %148 : vector<8x1xf32> to vector<8x32xf32>
    %154 = arith.mulf %153, %152 : vector<8x32xf32>
    %155 = arith.addf %102, %154 : vector<8x32xf32>
    %c0_74 = arith.constant 0 : index
    %c0_75 = arith.constant 0 : index
    %156 = vector.load %arg18[%c0_74, %c0_75] : memref<8x32xf32, #tpu.memory_space<vmem>>, vector<8x32xf32>
    tpu.vector_store %arg18[%c0_74, %c0_75], %155 {strides = array<i32>} : memref<8x32xf32, #tpu.memory_space<vmem>>, vector<8x32xf32>,
    %157 = arith.subf %145, %103 : vector<8x32xf32>
    %158 = vector.broadcast %151 : vector<8x1xf32> to vector<8x32xf32>
    %159 = arith.mulf %158, %157 : vector<8x32xf32>
    %160 = arith.addf %103, %159 : vector<8x32xf32>
    %c0_76 = arith.constant 0 : index
    %c0_77 = arith.constant 0 : index
    %161 = vector.load %arg19[%c0_76, %c0_77] : memref<8x32xf32, #tpu.memory_space<vmem>>, vector<8x32xf32>
    tpu.vector_store %arg19[%c0_76, %c0_77], %160 {strides = array<i32>} : memref<8x32xf32, #tpu.memory_space<vmem>>, vector<8x32xf32>,
    %162 = arith.subf %138, %104 : vector<8x32xf32>
    %163 = vector.broadcast %148 : vector<8x1xf32> to vector<8x32xf32>
    %164 = arith.mulf %163, %162 : vector<8x32xf32>
    %165 = arith.addf %104, %164 : vector<8x32xf32>
    %c0_78 = arith.constant 0 : index
    %c0_79 = arith.constant 0 : index
    %166 = vector.load %arg20[%c0_78, %c0_79] : memref<8x32xf32, #tpu.memory_space<vmem>>, vector<8x32xf32>
    tpu.vector_store %arg20[%c0_78, %c0_79], %165 {strides = array<i32>} : memref<8x32xf32, #tpu.memory_space<vmem>>, vector<8x32xf32>,
    %167 = arith.subf %141, %105 : vector<8x32xf32>
    %168 = vector.broadcast %151 : vector<8x1xf32> to vector<8x32xf32>
    %169 = arith.mulf %168, %167 : vector<8x32xf32>
    %170 = arith.addf %105, %169 : vector<8x32xf32>
    %c0_80 = arith.constant 0 : index
    %c0_81 = arith.constant 0 : index
    %171 = vector.load %arg21[%c0_80, %c0_81] : memref<8x32xf32, #tpu.memory_space<vmem>>, vector<8x32xf32>
    tpu.vector_store %arg21[%c0_80, %c0_81], %170 {strides = array<i32>} : memref<8x32xf32, #tpu.memory_space<vmem>>, vector<8x32xf32>,
    %172 = vector.broadcast %148 : vector<8x1xf32> to vector<8x32xf32>
    %173 = arith.mulf %172, %143 : vector<8x32xf32>
    %174 = arith.index_cast %111 : i32 to index
    %c0_82 = arith.constant 0 : index
    %175 = vector.load %arg16[%174, %c0_82] : memref<64x32xf32, #tpu.memory_space<vmem>>, vector<8x32xf32>
    tpu.vector_store %arg16[%174, %c0_82], %173 {strides = array<i32>} : memref<64x32xf32, #tpu.memory_space<vmem>>, vector<8x32xf32>,
    %176 = vector.broadcast %151 : vector<8x1xf32> to vector<8x32xf32>
    %177 = arith.mulf %176, %145 : vector<8x32xf32>
    %178 = arith.index_cast %113 : i32 to index
    %c0_83 = arith.constant 0 : index
    %179 = vector.load %arg17[%178, %c0_83] : memref<64x32xf32, #tpu.memory_space<vmem>>, vector<8x32xf32>
    tpu.vector_store %arg17[%178, %c0_83], %177 {strides = array<i32>} : memref<64x32xf32, #tpu.memory_space<vmem>>, vector<8x32xf32>,
    %c2_i32 = arith.constant 2 : i32
    %c7_i32_84 = arith.constant 7 : i32
    %180 = arith.subi %c7_i32_84, %c2_i32 : i32
    %c0_85 = arith.constant 0 : index
    %c0_86 = arith.constant 0 : index
    %181 = vector.load %arg18[%c0_85, %c0_86] : memref<8x32xf32, #tpu.memory_space<vmem>>, vector<8x32xf32>
    %c0_87 = arith.constant 0 : index
    %c0_88 = arith.constant 0 : index
    %182 = vector.load %arg19[%c0_87, %c0_88] : memref<8x32xf32, #tpu.memory_space<vmem>>, vector<8x32xf32>
    %c0_89 = arith.constant 0 : index
    %c0_90 = arith.constant 0 : index
    %183 = vector.load %arg20[%c0_89, %c0_90] : memref<8x32xf32, #tpu.memory_space<vmem>>, vector<8x32xf32>
    %c0_91 = arith.constant 0 : index
    %c0_92 = arith.constant 0 : index
    %184 = vector.load %arg21[%c0_91, %c0_92] : memref<8x32xf32, #tpu.memory_space<vmem>>, vector<8x32xf32>
    %185 = arith.truncf %181 : vector<8x32xf32> to vector<8x32xbf16>
    %cst_93 = arith.constant dense<0.000000e+00> : vector<8x128xf32>
    %186 = tpu.matmul %185, %11, %cst_93 {dimension_numbers = #tpu.dot_dimension_numbers<[1], [0], [0], [1], [0, 0, 1, 1], [], []>} : vector<8x32xbf16>, vector<32x128xbf16>, vector<8x128xf32> -> vector<8x128xf32>
    %187 = arith.truncf %182 : vector<8x32xf32> to vector<8x32xbf16>
    %cst_94 = arith.constant dense<0.000000e+00> : vector<8x128xf32>
    %188 = tpu.matmul %187, %13, %cst_94 {dimension_numbers = #tpu.dot_dimension_numbers<[1], [0], [0], [1], [0, 0, 1, 1], [], []>} : vector<8x32xbf16>, vector<32x128xbf16>, vector<8x128xf32> -> vector<8x128xf32>
    %c8_i32_95 = arith.constant 8 : i32
    %189 = arith.muli %c2_i32, %c8_i32_95 : i32
    %190 = tpu.assume_multiple %189, 8 : i32
    %c8_i32_96 = arith.constant 8 : i32
    %191 = arith.muli %180, %c8_i32_96 : i32
    %192 = tpu.assume_multiple %191, 8 : i32
    %193 = arith.index_cast %190 : i32 to index
    %c0_97 = arith.constant 0 : index
    %194 = vector.load %arg15[%193, %c0_97] : memref<64x256xf32, #tpu.memory_space<vmem>>, vector<8x256xf32>
    %195 = arith.index_cast %192 : i32 to index
    %c0_98 = arith.constant 0 : index
    %196 = vector.load %arg15[%195, %c0_98] : memref<64x256xf32, #tpu.memory_space<vmem>>, vector<8x256xf32>
    %197 = vector.extract_strided_slice %194 {offsets = [0, 0], sizes = [8, 128], strides = [1, 1]} : vector<8x256xf32> to vector<8x128xf32>
    %198 = arith.addf %186, %197 : vector<8x128xf32>
    %199 = vector.extract_strided_slice %196 {offsets = [0, 128], sizes = [8, 128], strides = [1, 1]} : vector<8x256xf32> to vector<8x128xf32>
    %200 = arith.addf %188, %199 : vector<8x128xf32>
    %201 = tpu.concatenate %198, %200 in 1 : vector<8x128xf32>, vector<8x128xf32> -> vector<8x256xf32>
    %202 = math.tanh %201 : vector<8x256xf32>
    %cst_99 = arith.constant 5.000000e-01 : f32
    %203 = vector.broadcast %cst_99 : f32 to vector<8x256xf32>
    %204 = arith.mulf %202, %203 : vector<8x256xf32>
    %cst_100 = arith.constant 5.000000e-01 : f32
    %205 = vector.broadcast %cst_100 : f32 to vector<8x256xf32>
    %206 = arith.addf %204, %205 : vector<8x256xf32>
    %207 = vector.extract_strided_slice %206 {offsets = [0, 0], sizes = [8, 32], strides = [1, 1]} : vector<8x256xf32> to vector<8x32xf32>
    %208 = vector.extract_strided_slice %206 {offsets = [0, 32], sizes = [8, 32], strides = [1, 1]} : vector<8x256xf32> to vector<8x32xf32>
    %209 = vector.extract_strided_slice %206 {offsets = [0, 64], sizes = [8, 32], strides = [1, 1]} : vector<8x256xf32> to vector<8x32xf32>
    %210 = vector.extract_strided_slice %202 {offsets = [0, 96], sizes = [8, 32], strides = [1, 1]} : vector<8x256xf32> to vector<8x32xf32>
    %211 = vector.extract_strided_slice %206 {offsets = [0, 128], sizes = [8, 32], strides = [1, 1]} : vector<8x256xf32> to vector<8x32xf32>
    %212 = vector.extract_strided_slice %206 {offsets = [0, 160], sizes = [8, 32], strides = [1, 1]} : vector<8x256xf32> to vector<8x32xf32>
    %213 = vector.extract_strided_slice %206 {offsets = [0, 192], sizes = [8, 32], strides = [1, 1]} : vector<8x256xf32> to vector<8x32xf32>
    %214 = vector.extract_strided_slice %202 {offsets = [0, 224], sizes = [8, 32], strides = [1, 1]} : vector<8x256xf32> to vector<8x32xf32>
    %215 = arith.mulf %208, %183 : vector<8x32xf32>
    %216 = arith.mulf %207, %210 : vector<8x32xf32>
    %217 = arith.addf %215, %216 : vector<8x32xf32>
    %218 = arith.mulf %212, %184 : vector<8x32xf32>
    %219 = arith.mulf %211, %214 : vector<8x32xf32>
    %220 = arith.addf %218, %219 : vector<8x32xf32>
    %221 = math.tanh %217 : vector<8x32xf32>
    %222 = arith.mulf %209, %221 : vector<8x32xf32>
    %223 = math.tanh %220 : vector<8x32xf32>
    %224 = arith.mulf %213, %223 : vector<8x32xf32>
    %225 = arith.index_cast %c2_i32 : i32 to index
    %c0_101 = arith.constant 0 : index
    %c0_102 = arith.constant 0 : index
    %226 = vector.load %arg2[%225, %c0_101, %c0_102] : memref<8x8x1xf32, #tpu.memory_space<vmem>>, vector<1x8x1xf32>
    %227 = vector.shape_cast %226 : vector<1x8x1xf32> to vector<8x1xf32>
    %228 = arith.index_cast %180 : i32 to index
    %c0_103 = arith.constant 0 : index
    %c0_104 = arith.constant 0 : index
    %229 = vector.load %arg2[%228, %c0_103, %c0_104] : memref<8x8x1xf32, #tpu.memory_space<vmem>>, vector<1x8x1xf32>
    %230 = vector.shape_cast %229 : vector<1x8x1xf32> to vector<8x1xf32>
    %231 = arith.subf %222, %181 : vector<8x32xf32>
    %232 = vector.broadcast %227 : vector<8x1xf32> to vector<8x32xf32>
    %233 = arith.mulf %232, %231 : vector<8x32xf32>
    %234 = arith.addf %181, %233 : vector<8x32xf32>
    %c0_105 = arith.constant 0 : index
    %c0_106 = arith.constant 0 : index
    %235 = vector.load %arg18[%c0_105, %c0_106] : memref<8x32xf32, #tpu.memory_space<vmem>>, vector<8x32xf32>
    tpu.vector_store %arg18[%c0_105, %c0_106], %234 {strides = array<i32>} : memref<8x32xf32, #tpu.memory_space<vmem>>, vector<8x32xf32>,
    %236 = arith.subf %224, %182 : vector<8x32xf32>
    %237 = vector.broadcast %230 : vector<8x1xf32> to vector<8x32xf32>
    %238 = arith.mulf %237, %236 : vector<8x32xf32>
    %239 = arith.addf %182, %238 : vector<8x32xf32>
    %c0_107 = arith.constant 0 : index
    %c0_108 = arith.constant 0 : index
    %240 = vector.load %arg19[%c0_107, %c0_108] : memref<8x32xf32, #tpu.memory_space<vmem>>, vector<8x32xf32>
    tpu.vector_store %arg19[%c0_107, %c0_108], %239 {strides = array<i32>} : memref<8x32xf32, #tpu.memory_space<vmem>>, vector<8x32xf32>,
    %241 = arith.subf %217, %183 : vector<8x32xf32>
    %242 = vector.broadcast %227 : vector<8x1xf32> to vector<8x32xf32>
    %243 = arith.mulf %242, %241 : vector<8x32xf32>
    %244 = arith.addf %183, %243 : vector<8x32xf32>
    %c0_109 = arith.constant 0 : index
    %c0_110 = arith.constant 0 : index
    %245 = vector.load %arg20[%c0_109, %c0_110] : memref<8x32xf32, #tpu.memory_space<vmem>>, vector<8x32xf32>
    tpu.vector_store %arg20[%c0_109, %c0_110], %244 {strides = array<i32>} : memref<8x32xf32, #tpu.memory_space<vmem>>, vector<8x32xf32>,
    %246 = arith.subf %220, %184 : vector<8x32xf32>
    %247 = vector.broadcast %230 : vector<8x1xf32> to vector<8x32xf32>
    %248 = arith.mulf %247, %246 : vector<8x32xf32>
    %249 = arith.addf %184, %248 : vector<8x32xf32>
    %c0_111 = arith.constant 0 : index
    %c0_112 = arith.constant 0 : index
    %250 = vector.load %arg21[%c0_111, %c0_112] : memref<8x32xf32, #tpu.memory_space<vmem>>, vector<8x32xf32>
    tpu.vector_store %arg21[%c0_111, %c0_112], %249 {strides = array<i32>} : memref<8x32xf32, #tpu.memory_space<vmem>>, vector<8x32xf32>,
    %251 = vector.broadcast %227 : vector<8x1xf32> to vector<8x32xf32>
    %252 = arith.mulf %251, %222 : vector<8x32xf32>
    %253 = arith.index_cast %190 : i32 to index
    %c0_113 = arith.constant 0 : index
    %254 = vector.load %arg16[%253, %c0_113] : memref<64x32xf32, #tpu.memory_space<vmem>>, vector<8x32xf32>
    tpu.vector_store %arg16[%253, %c0_113], %252 {strides = array<i32>} : memref<64x32xf32, #tpu.memory_space<vmem>>, vector<8x32xf32>,
    %255 = vector.broadcast %230 : vector<8x1xf32> to vector<8x32xf32>
    %256 = arith.mulf %255, %224 : vector<8x32xf32>
    %257 = arith.index_cast %192 : i32 to index
    %c0_114 = arith.constant 0 : index
    %258 = vector.load %arg17[%257, %c0_114] : memref<64x32xf32, #tpu.memory_space<vmem>>, vector<8x32xf32>
    tpu.vector_store %arg17[%257, %c0_114], %256 {strides = array<i32>} : memref<64x32xf32, #tpu.memory_space<vmem>>, vector<8x32xf32>,
    %c3_i32 = arith.constant 3 : i32
    %c7_i32_115 = arith.constant 7 : i32
    %259 = arith.subi %c7_i32_115, %c3_i32 : i32
    %c0_116 = arith.constant 0 : index
    %c0_117 = arith.constant 0 : index
    %260 = vector.load %arg18[%c0_116, %c0_117] : memref<8x32xf32, #tpu.memory_space<vmem>>, vector<8x32xf32>
    %c0_118 = arith.constant 0 : index
    %c0_119 = arith.constant 0 : index
    %261 = vector.load %arg19[%c0_118, %c0_119] : memref<8x32xf32, #tpu.memory_space<vmem>>, vector<8x32xf32>
    %c0_120 = arith.constant 0 : index
    %c0_121 = arith.constant 0 : index
    %262 = vector.load %arg20[%c0_120, %c0_121] : memref<8x32xf32, #tpu.memory_space<vmem>>, vector<8x32xf32>
    %c0_122 = arith.constant 0 : index
    %c0_123 = arith.constant 0 : index
    %263 = vector.load %arg21[%c0_122, %c0_123] : memref<8x32xf32, #tpu.memory_space<vmem>>, vector<8x32xf32>
    %264 = arith.truncf %260 : vector<8x32xf32> to vector<8x32xbf16>
    %cst_124 = arith.constant dense<0.000000e+00> : vector<8x128xf32>
    %265 = tpu.matmul %264, %11, %cst_124 {dimension_numbers = #tpu.dot_dimension_numbers<[1], [0], [0], [1], [0, 0, 1, 1], [], []>} : vector<8x32xbf16>, vector<32x128xbf16>, vector<8x128xf32> -> vector<8x128xf32>
    %266 = arith.truncf %261 : vector<8x32xf32> to vector<8x32xbf16>
    %cst_125 = arith.constant dense<0.000000e+00> : vector<8x128xf32>
    %267 = tpu.matmul %266, %13, %cst_125 {dimension_numbers = #tpu.dot_dimension_numbers<[1], [0], [0], [1], [0, 0, 1, 1], [], []>} : vector<8x32xbf16>, vector<32x128xbf16>, vector<8x128xf32> -> vector<8x128xf32>
    %c8_i32_126 = arith.constant 8 : i32
    %268 = arith.muli %c3_i32, %c8_i32_126 : i32
    %269 = tpu.assume_multiple %268, 8 : i32
    %c8_i32_127 = arith.constant 8 : i32
    %270 = arith.muli %259, %c8_i32_127 : i32
    %271 = tpu.assume_multiple %270, 8 : i32
    %272 = arith.index_cast %269 : i32 to index
    %c0_128 = arith.constant 0 : index
    %273 = vector.load %arg15[%272, %c0_128] : memref<64x256xf32, #tpu.memory_space<vmem>>, vector<8x256xf32>
    %274 = arith.index_cast %271 : i32 to index
    %c0_129 = arith.constant 0 : index
    %275 = vector.load %arg15[%274, %c0_129] : memref<64x256xf32, #tpu.memory_space<vmem>>, vector<8x256xf32>
    %276 = vector.extract_strided_slice %273 {offsets = [0, 0], sizes = [8, 128], strides = [1, 1]} : vector<8x256xf32> to vector<8x128xf32>
    %277 = arith.addf %265, %276 : vector<8x128xf32>
    %278 = vector.extract_strided_slice %275 {offsets = [0, 128], sizes = [8, 128], strides = [1, 1]} : vector<8x256xf32> to vector<8x128xf32>
    %279 = arith.addf %267, %278 : vector<8x128xf32>
    %280 = tpu.concatenate %277, %279 in 1 : vector<8x128xf32>, vector<8x128xf32> -> vector<8x256xf32>
    %281 = math.tanh %280 : vector<8x256xf32>
    %cst_130 = arith.constant 5.000000e-01 : f32
    %282 = vector.broadcast %cst_130 : f32 to vector<8x256xf32>
    %283 = arith.mulf %281, %282 : vector<8x256xf32>
    %cst_131 = arith.constant 5.000000e-01 : f32
    %284 = vector.broadcast %cst_131 : f32 to vector<8x256xf32>
    %285 = arith.addf %283, %284 : vector<8x256xf32>
    %286 = vector.extract_strided_slice %285 {offsets = [0, 0], sizes = [8, 32], strides = [1, 1]} : vector<8x256xf32> to vector<8x32xf32>
    %287 = vector.extract_strided_slice %285 {offsets = [0, 32], sizes = [8, 32], strides = [1, 1]} : vector<8x256xf32> to vector<8x32xf32>
    %288 = vector.extract_strided_slice %285 {offsets = [0, 64], sizes = [8, 32], strides = [1, 1]} : vector<8x256xf32> to vector<8x32xf32>
    %289 = vector.extract_strided_slice %281 {offsets = [0, 96], sizes = [8, 32], strides = [1, 1]} : vector<8x256xf32> to vector<8x32xf32>
    %290 = vector.extract_strided_slice %285 {offsets = [0, 128], sizes = [8, 32], strides = [1, 1]} : vector<8x256xf32> to vector<8x32xf32>
    %291 = vector.extract_strided_slice %285 {offsets = [0, 160], sizes = [8, 32], strides = [1, 1]} : vector<8x256xf32> to vector<8x32xf32>
    %292 = vector.extract_strided_slice %285 {offsets = [0, 192], sizes = [8, 32], strides = [1, 1]} : vector<8x256xf32> to vector<8x32xf32>
    %293 = vector.extract_strided_slice %281 {offsets = [0, 224], sizes = [8, 32], strides = [1, 1]} : vector<8x256xf32> to vector<8x32xf32>
    %294 = arith.mulf %287, %262 : vector<8x32xf32>
    %295 = arith.mulf %286, %289 : vector<8x32xf32>
    %296 = arith.addf %294, %295 : vector<8x32xf32>
    %297 = arith.mulf %291, %263 : vector<8x32xf32>
    %298 = arith.mulf %290, %293 : vector<8x32xf32>
    %299 = arith.addf %297, %298 : vector<8x32xf32>
    %300 = math.tanh %296 : vector<8x32xf32>
    %301 = arith.mulf %288, %300 : vector<8x32xf32>
    %302 = math.tanh %299 : vector<8x32xf32>
    %303 = arith.mulf %292, %302 : vector<8x32xf32>
    %304 = arith.index_cast %c3_i32 : i32 to index
    %c0_132 = arith.constant 0 : index
    %c0_133 = arith.constant 0 : index
    %305 = vector.load %arg2[%304, %c0_132, %c0_133] : memref<8x8x1xf32, #tpu.memory_space<vmem>>, vector<1x8x1xf32>
    %306 = vector.shape_cast %305 : vector<1x8x1xf32> to vector<8x1xf32>
    %307 = arith.index_cast %259 : i32 to index
    %c0_134 = arith.constant 0 : index
    %c0_135 = arith.constant 0 : index
    %308 = vector.load %arg2[%307, %c0_134, %c0_135] : memref<8x8x1xf32, #tpu.memory_space<vmem>>, vector<1x8x1xf32>
    %309 = vector.shape_cast %308 : vector<1x8x1xf32> to vector<8x1xf32>
    %310 = arith.subf %301, %260 : vector<8x32xf32>
    %311 = vector.broadcast %306 : vector<8x1xf32> to vector<8x32xf32>
    %312 = arith.mulf %311, %310 : vector<8x32xf32>
    %313 = arith.addf %260, %312 : vector<8x32xf32>
    %c0_136 = arith.constant 0 : index
    %c0_137 = arith.constant 0 : index
    %314 = vector.load %arg18[%c0_136, %c0_137] : memref<8x32xf32, #tpu.memory_space<vmem>>, vector<8x32xf32>
    tpu.vector_store %arg18[%c0_136, %c0_137], %313 {strides = array<i32>} : memref<8x32xf32, #tpu.memory_space<vmem>>, vector<8x32xf32>,
    %315 = arith.subf %303, %261 : vector<8x32xf32>
    %316 = vector.broadcast %309 : vector<8x1xf32> to vector<8x32xf32>
    %317 = arith.mulf %316, %315 : vector<8x32xf32>
    %318 = arith.addf %261, %317 : vector<8x32xf32>
    %c0_138 = arith.constant 0 : index
    %c0_139 = arith.constant 0 : index
    %319 = vector.load %arg19[%c0_138, %c0_139] : memref<8x32xf32, #tpu.memory_space<vmem>>, vector<8x32xf32>
    tpu.vector_store %arg19[%c0_138, %c0_139], %318 {strides = array<i32>} : memref<8x32xf32, #tpu.memory_space<vmem>>, vector<8x32xf32>,
    %320 = arith.subf %296, %262 : vector<8x32xf32>
    %321 = vector.broadcast %306 : vector<8x1xf32> to vector<8x32xf32>
    %322 = arith.mulf %321, %320 : vector<8x32xf32>
    %323 = arith.addf %262, %322 : vector<8x32xf32>
    %c0_140 = arith.constant 0 : index
    %c0_141 = arith.constant 0 : index
    %324 = vector.load %arg20[%c0_140, %c0_141] : memref<8x32xf32, #tpu.memory_space<vmem>>, vector<8x32xf32>
    tpu.vector_store %arg20[%c0_140, %c0_141], %323 {strides = array<i32>} : memref<8x32xf32, #tpu.memory_space<vmem>>, vector<8x32xf32>,
    %325 = arith.subf %299, %263 : vector<8x32xf32>
    %326 = vector.broadcast %309 : vector<8x1xf32> to vector<8x32xf32>
    %327 = arith.mulf %326, %325 : vector<8x32xf32>
    %328 = arith.addf %263, %327 : vector<8x32xf32>
    %c0_142 = arith.constant 0 : index
    %c0_143 = arith.constant 0 : index
    %329 = vector.load %arg21[%c0_142, %c0_143] : memref<8x32xf32, #tpu.memory_space<vmem>>, vector<8x32xf32>
    tpu.vector_store %arg21[%c0_142, %c0_143], %328 {strides = array<i32>} : memref<8x32xf32, #tpu.memory_space<vmem>>, vector<8x32xf32>,
    %330 = vector.broadcast %306 : vector<8x1xf32> to vector<8x32xf32>
    %331 = arith.mulf %330, %301 : vector<8x32xf32>
    %332 = arith.index_cast %269 : i32 to index
    %c0_144 = arith.constant 0 : index
    %333 = vector.load %arg16[%332, %c0_144] : memref<64x32xf32, #tpu.memory_space<vmem>>, vector<8x32xf32>
    tpu.vector_store %arg16[%332, %c0_144], %331 {strides = array<i32>} : memref<64x32xf32, #tpu.memory_space<vmem>>, vector<8x32xf32>,
    %334 = vector.broadcast %309 : vector<8x1xf32> to vector<8x32xf32>
    %335 = arith.mulf %334, %303 : vector<8x32xf32>
    %336 = arith.index_cast %271 : i32 to index
    %c0_145 = arith.constant 0 : index
    %337 = vector.load %arg17[%336, %c0_145] : memref<64x32xf32, #tpu.memory_space<vmem>>, vector<8x32xf32>
    tpu.vector_store %arg17[%336, %c0_145], %335 {strides = array<i32>} : memref<64x32xf32, #tpu.memory_space<vmem>>, vector<8x32xf32>,
    %c4_i32 = arith.constant 4 : i32
    %c7_i32_146 = arith.constant 7 : i32
    %338 = arith.subi %c7_i32_146, %c4_i32 : i32
    %c0_147 = arith.constant 0 : index
    %c0_148 = arith.constant 0 : index
    %339 = vector.load %arg18[%c0_147, %c0_148] : memref<8x32xf32, #tpu.memory_space<vmem>>, vector<8x32xf32>
    %c0_149 = arith.constant 0 : index
    %c0_150 = arith.constant 0 : index
    %340 = vector.load %arg19[%c0_149, %c0_150] : memref<8x32xf32, #tpu.memory_space<vmem>>, vector<8x32xf32>
    %c0_151 = arith.constant 0 : index
    %c0_152 = arith.constant 0 : index
    %341 = vector.load %arg20[%c0_151, %c0_152] : memref<8x32xf32, #tpu.memory_space<vmem>>, vector<8x32xf32>
    %c0_153 = arith.constant 0 : index
    %c0_154 = arith.constant 0 : index
    %342 = vector.load %arg21[%c0_153, %c0_154] : memref<8x32xf32, #tpu.memory_space<vmem>>, vector<8x32xf32>
    %343 = arith.truncf %339 : vector<8x32xf32> to vector<8x32xbf16>
    %cst_155 = arith.constant dense<0.000000e+00> : vector<8x128xf32>
    %344 = tpu.matmul %343, %11, %cst_155 {dimension_numbers = #tpu.dot_dimension_numbers<[1], [0], [0], [1], [0, 0, 1, 1], [], []>} : vector<8x32xbf16>, vector<32x128xbf16>, vector<8x128xf32> -> vector<8x128xf32>
    %345 = arith.truncf %340 : vector<8x32xf32> to vector<8x32xbf16>
    %cst_156 = arith.constant dense<0.000000e+00> : vector<8x128xf32>
    %346 = tpu.matmul %345, %13, %cst_156 {dimension_numbers = #tpu.dot_dimension_numbers<[1], [0], [0], [1], [0, 0, 1, 1], [], []>} : vector<8x32xbf16>, vector<32x128xbf16>, vector<8x128xf32> -> vector<8x128xf32>
    %c8_i32_157 = arith.constant 8 : i32
    %347 = arith.muli %c4_i32, %c8_i32_157 : i32
    %348 = tpu.assume_multiple %347, 8 : i32
    %c8_i32_158 = arith.constant 8 : i32
    %349 = arith.muli %338, %c8_i32_158 : i32
    %350 = tpu.assume_multiple %349, 8 : i32
    %351 = arith.index_cast %348 : i32 to index
    %c0_159 = arith.constant 0 : index
    %352 = vector.load %arg15[%351, %c0_159] : memref<64x256xf32, #tpu.memory_space<vmem>>, vector<8x256xf32>
    %353 = arith.index_cast %350 : i32 to index
    %c0_160 = arith.constant 0 : index
    %354 = vector.load %arg15[%353, %c0_160] : memref<64x256xf32, #tpu.memory_space<vmem>>, vector<8x256xf32>
    %355 = vector.extract_strided_slice %352 {offsets = [0, 0], sizes = [8, 128], strides = [1, 1]} : vector<8x256xf32> to vector<8x128xf32>
    %356 = arith.addf %344, %355 : vector<8x128xf32>
    %357 = vector.extract_strided_slice %354 {offsets = [0, 128], sizes = [8, 128], strides = [1, 1]} : vector<8x256xf32> to vector<8x128xf32>
    %358 = arith.addf %346, %357 : vector<8x128xf32>
    %359 = tpu.concatenate %356, %358 in 1 : vector<8x128xf32>, vector<8x128xf32> -> vector<8x256xf32>
    %360 = math.tanh %359 : vector<8x256xf32>
    %cst_161 = arith.constant 5.000000e-01 : f32
    %361 = vector.broadcast %cst_161 : f32 to vector<8x256xf32>
    %362 = arith.mulf %360, %361 : vector<8x256xf32>
    %cst_162 = arith.constant 5.000000e-01 : f32
    %363 = vector.broadcast %cst_162 : f32 to vector<8x256xf32>
    %364 = arith.addf %362, %363 : vector<8x256xf32>
    %365 = vector.extract_strided_slice %364 {offsets = [0, 0], sizes = [8, 32], strides = [1, 1]} : vector<8x256xf32> to vector<8x32xf32>
    %366 = vector.extract_strided_slice %364 {offsets = [0, 32], sizes = [8, 32], strides = [1, 1]} : vector<8x256xf32> to vector<8x32xf32>
    %367 = vector.extract_strided_slice %364 {offsets = [0, 64], sizes = [8, 32], strides = [1, 1]} : vector<8x256xf32> to vector<8x32xf32>
    %368 = vector.extract_strided_slice %360 {offsets = [0, 96], sizes = [8, 32], strides = [1, 1]} : vector<8x256xf32> to vector<8x32xf32>
    %369 = vector.extract_strided_slice %364 {offsets = [0, 128], sizes = [8, 32], strides = [1, 1]} : vector<8x256xf32> to vector<8x32xf32>
    %370 = vector.extract_strided_slice %364 {offsets = [0, 160], sizes = [8, 32], strides = [1, 1]} : vector<8x256xf32> to vector<8x32xf32>
    %371 = vector.extract_strided_slice %364 {offsets = [0, 192], sizes = [8, 32], strides = [1, 1]} : vector<8x256xf32> to vector<8x32xf32>
    %372 = vector.extract_strided_slice %360 {offsets = [0, 224], sizes = [8, 32], strides = [1, 1]} : vector<8x256xf32> to vector<8x32xf32>
    %373 = arith.mulf %366, %341 : vector<8x32xf32>
    %374 = arith.mulf %365, %368 : vector<8x32xf32>
    %375 = arith.addf %373, %374 : vector<8x32xf32>
    %376 = arith.mulf %370, %342 : vector<8x32xf32>
    %377 = arith.mulf %369, %372 : vector<8x32xf32>
    %378 = arith.addf %376, %377 : vector<8x32xf32>
    %379 = math.tanh %375 : vector<8x32xf32>
    %380 = arith.mulf %367, %379 : vector<8x32xf32>
    %381 = math.tanh %378 : vector<8x32xf32>
    %382 = arith.mulf %371, %381 : vector<8x32xf32>
    %383 = arith.index_cast %c4_i32 : i32 to index
    %c0_163 = arith.constant 0 : index
    %c0_164 = arith.constant 0 : index
    %384 = vector.load %arg2[%383, %c0_163, %c0_164] : memref<8x8x1xf32, #tpu.memory_space<vmem>>, vector<1x8x1xf32>
    %385 = vector.shape_cast %384 : vector<1x8x1xf32> to vector<8x1xf32>
    %386 = arith.index_cast %338 : i32 to index
    %c0_165 = arith.constant 0 : index
    %c0_166 = arith.constant 0 : index
    %387 = vector.load %arg2[%386, %c0_165, %c0_166] : memref<8x8x1xf32, #tpu.memory_space<vmem>>, vector<1x8x1xf32>
    %388 = vector.shape_cast %387 : vector<1x8x1xf32> to vector<8x1xf32>
    %389 = arith.subf %380, %339 : vector<8x32xf32>
    %390 = vector.broadcast %385 : vector<8x1xf32> to vector<8x32xf32>
    %391 = arith.mulf %390, %389 : vector<8x32xf32>
    %392 = arith.addf %339, %391 : vector<8x32xf32>
    %c0_167 = arith.constant 0 : index
    %c0_168 = arith.constant 0 : index
    %393 = vector.load %arg18[%c0_167, %c0_168] : memref<8x32xf32, #tpu.memory_space<vmem>>, vector<8x32xf32>
    tpu.vector_store %arg18[%c0_167, %c0_168], %392 {strides = array<i32>} : memref<8x32xf32, #tpu.memory_space<vmem>>, vector<8x32xf32>,
    %394 = arith.subf %382, %340 : vector<8x32xf32>
    %395 = vector.broadcast %388 : vector<8x1xf32> to vector<8x32xf32>
    %396 = arith.mulf %395, %394 : vector<8x32xf32>
    %397 = arith.addf %340, %396 : vector<8x32xf32>
    %c0_169 = arith.constant 0 : index
    %c0_170 = arith.constant 0 : index
    %398 = vector.load %arg19[%c0_169, %c0_170] : memref<8x32xf32, #tpu.memory_space<vmem>>, vector<8x32xf32>
    tpu.vector_store %arg19[%c0_169, %c0_170], %397 {strides = array<i32>} : memref<8x32xf32, #tpu.memory_space<vmem>>, vector<8x32xf32>,
    %399 = arith.subf %375, %341 : vector<8x32xf32>
    %400 = vector.broadcast %385 : vector<8x1xf32> to vector<8x32xf32>
    %401 = arith.mulf %400, %399 : vector<8x32xf32>
    %402 = arith.addf %341, %401 : vector<8x32xf32>
    %c0_171 = arith.constant 0 : index
    %c0_172 = arith.constant 0 : index
    %403 = vector.load %arg20[%c0_171, %c0_172] : memref<8x32xf32, #tpu.memory_space<vmem>>, vector<8x32xf32>
    tpu.vector_store %arg20[%c0_171, %c0_172], %402 {strides = array<i32>} : memref<8x32xf32, #tpu.memory_space<vmem>>, vector<8x32xf32>,
    %404 = arith.subf %378, %342 : vector<8x32xf32>
    %405 = vector.broadcast %388 : vector<8x1xf32> to vector<8x32xf32>
    %406 = arith.mulf %405, %404 : vector<8x32xf32>
    %407 = arith.addf %342, %406 : vector<8x32xf32>
    %c0_173 = arith.constant 0 : index
    %c0_174 = arith.constant 0 : index
    %408 = vector.load %arg21[%c0_173, %c0_174] : memref<8x32xf32, #tpu.memory_space<vmem>>, vector<8x32xf32>
    tpu.vector_store %arg21[%c0_173, %c0_174], %407 {strides = array<i32>} : memref<8x32xf32, #tpu.memory_space<vmem>>, vector<8x32xf32>,
    %409 = vector.broadcast %385 : vector<8x1xf32> to vector<8x32xf32>
    %410 = arith.mulf %409, %380 : vector<8x32xf32>
    %411 = arith.index_cast %348 : i32 to index
    %c0_175 = arith.constant 0 : index
    %412 = vector.load %arg16[%411, %c0_175] : memref<64x32xf32, #tpu.memory_space<vmem>>, vector<8x32xf32>
    tpu.vector_store %arg16[%411, %c0_175], %410 {strides = array<i32>} : memref<64x32xf32, #tpu.memory_space<vmem>>, vector<8x32xf32>,
    %413 = vector.broadcast %388 : vector<8x1xf32> to vector<8x32xf32>
    %414 = arith.mulf %413, %382 : vector<8x32xf32>
    %415 = arith.index_cast %350 : i32 to index
    %c0_176 = arith.constant 0 : index
    %416 = vector.load %arg17[%415, %c0_176] : memref<64x32xf32, #tpu.memory_space<vmem>>, vector<8x32xf32>
    tpu.vector_store %arg17[%415, %c0_176], %414 {strides = array<i32>} : memref<64x32xf32, #tpu.memory_space<vmem>>, vector<8x32xf32>,
    %c5_i32 = arith.constant 5 : i32
    %c7_i32_177 = arith.constant 7 : i32
    %417 = arith.subi %c7_i32_177, %c5_i32 : i32
    %c0_178 = arith.constant 0 : index
    %c0_179 = arith.constant 0 : index
    %418 = vector.load %arg18[%c0_178, %c0_179] : memref<8x32xf32, #tpu.memory_space<vmem>>, vector<8x32xf32>
    %c0_180 = arith.constant 0 : index
    %c0_181 = arith.constant 0 : index
    %419 = vector.load %arg19[%c0_180, %c0_181] : memref<8x32xf32, #tpu.memory_space<vmem>>, vector<8x32xf32>
    %c0_182 = arith.constant 0 : index
    %c0_183 = arith.constant 0 : index
    %420 = vector.load %arg20[%c0_182, %c0_183] : memref<8x32xf32, #tpu.memory_space<vmem>>, vector<8x32xf32>
    %c0_184 = arith.constant 0 : index
    %c0_185 = arith.constant 0 : index
    %421 = vector.load %arg21[%c0_184, %c0_185] : memref<8x32xf32, #tpu.memory_space<vmem>>, vector<8x32xf32>
    %422 = arith.truncf %418 : vector<8x32xf32> to vector<8x32xbf16>
    %cst_186 = arith.constant dense<0.000000e+00> : vector<8x128xf32>
    %423 = tpu.matmul %422, %11, %cst_186 {dimension_numbers = #tpu.dot_dimension_numbers<[1], [0], [0], [1], [0, 0, 1, 1], [], []>} : vector<8x32xbf16>, vector<32x128xbf16>, vector<8x128xf32> -> vector<8x128xf32>
    %424 = arith.truncf %419 : vector<8x32xf32> to vector<8x32xbf16>
    %cst_187 = arith.constant dense<0.000000e+00> : vector<8x128xf32>
    %425 = tpu.matmul %424, %13, %cst_187 {dimension_numbers = #tpu.dot_dimension_numbers<[1], [0], [0], [1], [0, 0, 1, 1], [], []>} : vector<8x32xbf16>, vector<32x128xbf16>, vector<8x128xf32> -> vector<8x128xf32>
    %c8_i32_188 = arith.constant 8 : i32
    %426 = arith.muli %c5_i32, %c8_i32_188 : i32
    %427 = tpu.assume_multiple %426, 8 : i32
    %c8_i32_189 = arith.constant 8 : i32
    %428 = arith.muli %417, %c8_i32_189 : i32
    %429 = tpu.assume_multiple %428, 8 : i32
    %430 = arith.index_cast %427 : i32 to index
    %c0_190 = arith.constant 0 : index
    %431 = vector.load %arg15[%430, %c0_190] : memref<64x256xf32, #tpu.memory_space<vmem>>, vector<8x256xf32>
    %432 = arith.index_cast %429 : i32 to index
    %c0_191 = arith.constant 0 : index
    %433 = vector.load %arg15[%432, %c0_191] : memref<64x256xf32, #tpu.memory_space<vmem>>, vector<8x256xf32>
    %434 = vector.extract_strided_slice %431 {offsets = [0, 0], sizes = [8, 128], strides = [1, 1]} : vector<8x256xf32> to vector<8x128xf32>
    %435 = arith.addf %423, %434 : vector<8x128xf32>
    %436 = vector.extract_strided_slice %433 {offsets = [0, 128], sizes = [8, 128], strides = [1, 1]} : vector<8x256xf32> to vector<8x128xf32>
    %437 = arith.addf %425, %436 : vector<8x128xf32>
    %438 = tpu.concatenate %435, %437 in 1 : vector<8x128xf32>, vector<8x128xf32> -> vector<8x256xf32>
    %439 = math.tanh %438 : vector<8x256xf32>
    %cst_192 = arith.constant 5.000000e-01 : f32
    %440 = vector.broadcast %cst_192 : f32 to vector<8x256xf32>
    %441 = arith.mulf %439, %440 : vector<8x256xf32>
    %cst_193 = arith.constant 5.000000e-01 : f32
    %442 = vector.broadcast %cst_193 : f32 to vector<8x256xf32>
    %443 = arith.addf %441, %442 : vector<8x256xf32>
    %444 = vector.extract_strided_slice %443 {offsets = [0, 0], sizes = [8, 32], strides = [1, 1]} : vector<8x256xf32> to vector<8x32xf32>
    %445 = vector.extract_strided_slice %443 {offsets = [0, 32], sizes = [8, 32], strides = [1, 1]} : vector<8x256xf32> to vector<8x32xf32>
    %446 = vector.extract_strided_slice %443 {offsets = [0, 64], sizes = [8, 32], strides = [1, 1]} : vector<8x256xf32> to vector<8x32xf32>
    %447 = vector.extract_strided_slice %439 {offsets = [0, 96], sizes = [8, 32], strides = [1, 1]} : vector<8x256xf32> to vector<8x32xf32>
    %448 = vector.extract_strided_slice %443 {offsets = [0, 128], sizes = [8, 32], strides = [1, 1]} : vector<8x256xf32> to vector<8x32xf32>
    %449 = vector.extract_strided_slice %443 {offsets = [0, 160], sizes = [8, 32], strides = [1, 1]} : vector<8x256xf32> to vector<8x32xf32>
    %450 = vector.extract_strided_slice %443 {offsets = [0, 192], sizes = [8, 32], strides = [1, 1]} : vector<8x256xf32> to vector<8x32xf32>
    %451 = vector.extract_strided_slice %439 {offsets = [0, 224], sizes = [8, 32], strides = [1, 1]} : vector<8x256xf32> to vector<8x32xf32>
    %452 = arith.mulf %445, %420 : vector<8x32xf32>
    %453 = arith.mulf %444, %447 : vector<8x32xf32>
    %454 = arith.addf %452, %453 : vector<8x32xf32>
    %455 = arith.mulf %449, %421 : vector<8x32xf32>
    %456 = arith.mulf %448, %451 : vector<8x32xf32>
    %457 = arith.addf %455, %456 : vector<8x32xf32>
    %458 = math.tanh %454 : vector<8x32xf32>
    %459 = arith.mulf %446, %458 : vector<8x32xf32>
    %460 = math.tanh %457 : vector<8x32xf32>
    %461 = arith.mulf %450, %460 : vector<8x32xf32>
    %462 = arith.index_cast %c5_i32 : i32 to index
    %c0_194 = arith.constant 0 : index
    %c0_195 = arith.constant 0 : index
    %463 = vector.load %arg2[%462, %c0_194, %c0_195] : memref<8x8x1xf32, #tpu.memory_space<vmem>>, vector<1x8x1xf32>
    %464 = vector.shape_cast %463 : vector<1x8x1xf32> to vector<8x1xf32>
    %465 = arith.index_cast %417 : i32 to index
    %c0_196 = arith.constant 0 : index
    %c0_197 = arith.constant 0 : index
    %466 = vector.load %arg2[%465, %c0_196, %c0_197] : memref<8x8x1xf32, #tpu.memory_space<vmem>>, vector<1x8x1xf32>
    %467 = vector.shape_cast %466 : vector<1x8x1xf32> to vector<8x1xf32>
    %468 = arith.subf %459, %418 : vector<8x32xf32>
    %469 = vector.broadcast %464 : vector<8x1xf32> to vector<8x32xf32>
    %470 = arith.mulf %469, %468 : vector<8x32xf32>
    %471 = arith.addf %418, %470 : vector<8x32xf32>
    %c0_198 = arith.constant 0 : index
    %c0_199 = arith.constant 0 : index
    %472 = vector.load %arg18[%c0_198, %c0_199] : memref<8x32xf32, #tpu.memory_space<vmem>>, vector<8x32xf32>
    tpu.vector_store %arg18[%c0_198, %c0_199], %471 {strides = array<i32>} : memref<8x32xf32, #tpu.memory_space<vmem>>, vector<8x32xf32>,
    %473 = arith.subf %461, %419 : vector<8x32xf32>
    %474 = vector.broadcast %467 : vector<8x1xf32> to vector<8x32xf32>
    %475 = arith.mulf %474, %473 : vector<8x32xf32>
    %476 = arith.addf %419, %475 : vector<8x32xf32>
    %c0_200 = arith.constant 0 : index
    %c0_201 = arith.constant 0 : index
    %477 = vector.load %arg19[%c0_200, %c0_201] : memref<8x32xf32, #tpu.memory_space<vmem>>, vector<8x32xf32>
    tpu.vector_store %arg19[%c0_200, %c0_201], %476 {strides = array<i32>} : memref<8x32xf32, #tpu.memory_space<vmem>>, vector<8x32xf32>,
    %478 = arith.subf %454, %420 : vector<8x32xf32>
    %479 = vector.broadcast %464 : vector<8x1xf32> to vector<8x32xf32>
    %480 = arith.mulf %479, %478 : vector<8x32xf32>
    %481 = arith.addf %420, %480 : vector<8x32xf32>
    %c0_202 = arith.constant 0 : index
    %c0_203 = arith.constant 0 : index
    %482 = vector.load %arg20[%c0_202, %c0_203] : memref<8x32xf32, #tpu.memory_space<vmem>>, vector<8x32xf32>
    tpu.vector_store %arg20[%c0_202, %c0_203], %481 {strides = array<i32>} : memref<8x32xf32, #tpu.memory_space<vmem>>, vector<8x32xf32>,
    %483 = arith.subf %457, %421 : vector<8x32xf32>
    %484 = vector.broadcast %467 : vector<8x1xf32> to vector<8x32xf32>
    %485 = arith.mulf %484, %483 : vector<8x32xf32>
    %486 = arith.addf %421, %485 : vector<8x32xf32>
    %c0_204 = arith.constant 0 : index
    %c0_205 = arith.constant 0 : index
    %487 = vector.load %arg21[%c0_204, %c0_205] : memref<8x32xf32, #tpu.memory_space<vmem>>, vector<8x32xf32>
    tpu.vector_store %arg21[%c0_204, %c0_205], %486 {strides = array<i32>} : memref<8x32xf32, #tpu.memory_space<vmem>>, vector<8x32xf32>,
    %488 = vector.broadcast %464 : vector<8x1xf32> to vector<8x32xf32>
    %489 = arith.mulf %488, %459 : vector<8x32xf32>
    %490 = arith.index_cast %427 : i32 to index
    %c0_206 = arith.constant 0 : index
    %491 = vector.load %arg16[%490, %c0_206] : memref<64x32xf32, #tpu.memory_space<vmem>>, vector<8x32xf32>
    tpu.vector_store %arg16[%490, %c0_206], %489 {strides = array<i32>} : memref<64x32xf32, #tpu.memory_space<vmem>>, vector<8x32xf32>,
    %492 = vector.broadcast %467 : vector<8x1xf32> to vector<8x32xf32>
    %493 = arith.mulf %492, %461 : vector<8x32xf32>
    %494 = arith.index_cast %429 : i32 to index
    %c0_207 = arith.constant 0 : index
    %495 = vector.load %arg17[%494, %c0_207] : memref<64x32xf32, #tpu.memory_space<vmem>>, vector<8x32xf32>
    tpu.vector_store %arg17[%494, %c0_207], %493 {strides = array<i32>} : memref<64x32xf32, #tpu.memory_space<vmem>>, vector<8x32xf32>,
    %c6_i32 = arith.constant 6 : i32
    %c7_i32_208 = arith.constant 7 : i32
    %496 = arith.subi %c7_i32_208, %c6_i32 : i32
    %c0_209 = arith.constant 0 : index
    %c0_210 = arith.constant 0 : index
    %497 = vector.load %arg18[%c0_209, %c0_210] : memref<8x32xf32, #tpu.memory_space<vmem>>, vector<8x32xf32>
    %c0_211 = arith.constant 0 : index
    %c0_212 = arith.constant 0 : index
    %498 = vector.load %arg19[%c0_211, %c0_212] : memref<8x32xf32, #tpu.memory_space<vmem>>, vector<8x32xf32>
    %c0_213 = arith.constant 0 : index
    %c0_214 = arith.constant 0 : index
    %499 = vector.load %arg20[%c0_213, %c0_214] : memref<8x32xf32, #tpu.memory_space<vmem>>, vector<8x32xf32>
    %c0_215 = arith.constant 0 : index
    %c0_216 = arith.constant 0 : index
    %500 = vector.load %arg21[%c0_215, %c0_216] : memref<8x32xf32, #tpu.memory_space<vmem>>, vector<8x32xf32>
    %501 = arith.truncf %497 : vector<8x32xf32> to vector<8x32xbf16>
    %cst_217 = arith.constant dense<0.000000e+00> : vector<8x128xf32>
    %502 = tpu.matmul %501, %11, %cst_217 {dimension_numbers = #tpu.dot_dimension_numbers<[1], [0], [0], [1], [0, 0, 1, 1], [], []>} : vector<8x32xbf16>, vector<32x128xbf16>, vector<8x128xf32> -> vector<8x128xf32>
    %503 = arith.truncf %498 : vector<8x32xf32> to vector<8x32xbf16>
    %cst_218 = arith.constant dense<0.000000e+00> : vector<8x128xf32>
    %504 = tpu.matmul %503, %13, %cst_218 {dimension_numbers = #tpu.dot_dimension_numbers<[1], [0], [0], [1], [0, 0, 1, 1], [], []>} : vector<8x32xbf16>, vector<32x128xbf16>, vector<8x128xf32> -> vector<8x128xf32>
    %c8_i32_219 = arith.constant 8 : i32
    %505 = arith.muli %c6_i32, %c8_i32_219 : i32
    %506 = tpu.assume_multiple %505, 8 : i32
    %c8_i32_220 = arith.constant 8 : i32
    %507 = arith.muli %496, %c8_i32_220 : i32
    %508 = tpu.assume_multiple %507, 8 : i32
    %509 = arith.index_cast %506 : i32 to index
    %c0_221 = arith.constant 0 : index
    %510 = vector.load %arg15[%509, %c0_221] : memref<64x256xf32, #tpu.memory_space<vmem>>, vector<8x256xf32>
    %511 = arith.index_cast %508 : i32 to index
    %c0_222 = arith.constant 0 : index
    %512 = vector.load %arg15[%511, %c0_222] : memref<64x256xf32, #tpu.memory_space<vmem>>, vector<8x256xf32>
    %513 = vector.extract_strided_slice %510 {offsets = [0, 0], sizes = [8, 128], strides = [1, 1]} : vector<8x256xf32> to vector<8x128xf32>
    %514 = arith.addf %502, %513 : vector<8x128xf32>
    %515 = vector.extract_strided_slice %512 {offsets = [0, 128], sizes = [8, 128], strides = [1, 1]} : vector<8x256xf32> to vector<8x128xf32>
    %516 = arith.addf %504, %515 : vector<8x128xf32>
    %517 = tpu.concatenate %514, %516 in 1 : vector<8x128xf32>, vector<8x128xf32> -> vector<8x256xf32>
    %518 = math.tanh %517 : vector<8x256xf32>
    %cst_223 = arith.constant 5.000000e-01 : f32
    %519 = vector.broadcast %cst_223 : f32 to vector<8x256xf32>
    %520 = arith.mulf %518, %519 : vector<8x256xf32>
    %cst_224 = arith.constant 5.000000e-01 : f32
    %521 = vector.broadcast %cst_224 : f32 to vector<8x256xf32>
    %522 = arith.addf %520, %521 : vector<8x256xf32>
    %523 = vector.extract_strided_slice %522 {offsets = [0, 0], sizes = [8, 32], strides = [1, 1]} : vector<8x256xf32> to vector<8x32xf32>
    %524 = vector.extract_strided_slice %522 {offsets = [0, 32], sizes = [8, 32], strides = [1, 1]} : vector<8x256xf32> to vector<8x32xf32>
    %525 = vector.extract_strided_slice %522 {offsets = [0, 64], sizes = [8, 32], strides = [1, 1]} : vector<8x256xf32> to vector<8x32xf32>
    %526 = vector.extract_strided_slice %518 {offsets = [0, 96], sizes = [8, 32], strides = [1, 1]} : vector<8x256xf32> to vector<8x32xf32>
    %527 = vector.extract_strided_slice %522 {offsets = [0, 128], sizes = [8, 32], strides = [1, 1]} : vector<8x256xf32> to vector<8x32xf32>
    %528 = vector.extract_strided_slice %522 {offsets = [0, 160], sizes = [8, 32], strides = [1, 1]} : vector<8x256xf32> to vector<8x32xf32>
    %529 = vector.extract_strided_slice %522 {offsets = [0, 192], sizes = [8, 32], strides = [1, 1]} : vector<8x256xf32> to vector<8x32xf32>
    %530 = vector.extract_strided_slice %518 {offsets = [0, 224], sizes = [8, 32], strides = [1, 1]} : vector<8x256xf32> to vector<8x32xf32>
    %531 = arith.mulf %524, %499 : vector<8x32xf32>
    %532 = arith.mulf %523, %526 : vector<8x32xf32>
    %533 = arith.addf %531, %532 : vector<8x32xf32>
    %534 = arith.mulf %528, %500 : vector<8x32xf32>
    %535 = arith.mulf %527, %530 : vector<8x32xf32>
    %536 = arith.addf %534, %535 : vector<8x32xf32>
    %537 = math.tanh %533 : vector<8x32xf32>
    %538 = arith.mulf %525, %537 : vector<8x32xf32>
    %539 = math.tanh %536 : vector<8x32xf32>
    %540 = arith.mulf %529, %539 : vector<8x32xf32>
    %541 = arith.index_cast %c6_i32 : i32 to index
    %c0_225 = arith.constant 0 : index
    %c0_226 = arith.constant 0 : index
    %542 = vector.load %arg2[%541, %c0_225, %c0_226] : memref<8x8x1xf32, #tpu.memory_space<vmem>>, vector<1x8x1xf32>
    %543 = vector.shape_cast %542 : vector<1x8x1xf32> to vector<8x1xf32>
    %544 = arith.index_cast %496 : i32 to index
    %c0_227 = arith.constant 0 : index
    %c0_228 = arith.constant 0 : index
    %545 = vector.load %arg2[%544, %c0_227, %c0_228] : memref<8x8x1xf32, #tpu.memory_space<vmem>>, vector<1x8x1xf32>
    %546 = vector.shape_cast %545 : vector<1x8x1xf32> to vector<8x1xf32>
    %547 = arith.subf %538, %497 : vector<8x32xf32>
    %548 = vector.broadcast %543 : vector<8x1xf32> to vector<8x32xf32>
    %549 = arith.mulf %548, %547 : vector<8x32xf32>
    %550 = arith.addf %497, %549 : vector<8x32xf32>
    %c0_229 = arith.constant 0 : index
    %c0_230 = arith.constant 0 : index
    %551 = vector.load %arg18[%c0_229, %c0_230] : memref<8x32xf32, #tpu.memory_space<vmem>>, vector<8x32xf32>
    tpu.vector_store %arg18[%c0_229, %c0_230], %550 {strides = array<i32>} : memref<8x32xf32, #tpu.memory_space<vmem>>, vector<8x32xf32>,
    %552 = arith.subf %540, %498 : vector<8x32xf32>
    %553 = vector.broadcast %546 : vector<8x1xf32> to vector<8x32xf32>
    %554 = arith.mulf %553, %552 : vector<8x32xf32>
    %555 = arith.addf %498, %554 : vector<8x32xf32>
    %c0_231 = arith.constant 0 : index
    %c0_232 = arith.constant 0 : index
    %556 = vector.load %arg19[%c0_231, %c0_232] : memref<8x32xf32, #tpu.memory_space<vmem>>, vector<8x32xf32>
    tpu.vector_store %arg19[%c0_231, %c0_232], %555 {strides = array<i32>} : memref<8x32xf32, #tpu.memory_space<vmem>>, vector<8x32xf32>,
    %557 = arith.subf %533, %499 : vector<8x32xf32>
    %558 = vector.broadcast %543 : vector<8x1xf32> to vector<8x32xf32>
    %559 = arith.mulf %558, %557 : vector<8x32xf32>
    %560 = arith.addf %499, %559 : vector<8x32xf32>
    %c0_233 = arith.constant 0 : index
    %c0_234 = arith.constant 0 : index
    %561 = vector.load %arg20[%c0_233, %c0_234] : memref<8x32xf32, #tpu.memory_space<vmem>>, vector<8x32xf32>
    tpu.vector_store %arg20[%c0_233, %c0_234], %560 {strides = array<i32>} : memref<8x32xf32, #tpu.memory_space<vmem>>, vector<8x32xf32>,
    %562 = arith.subf %536, %500 : vector<8x32xf32>
    %563 = vector.broadcast %546 : vector<8x1xf32> to vector<8x32xf32>
    %564 = arith.mulf %563, %562 : vector<8x32xf32>
    %565 = arith.addf %500, %564 : vector<8x32xf32>
    %c0_235 = arith.constant 0 : index
    %c0_236 = arith.constant 0 : index
    %566 = vector.load %arg21[%c0_235, %c0_236] : memref<8x32xf32, #tpu.memory_space<vmem>>, vector<8x32xf32>
    tpu.vector_store %arg21[%c0_235, %c0_236], %565 {strides = array<i32>} : memref<8x32xf32, #tpu.memory_space<vmem>>, vector<8x32xf32>,
    %567 = vector.broadcast %543 : vector<8x1xf32> to vector<8x32xf32>
    %568 = arith.mulf %567, %538 : vector<8x32xf32>
    %569 = arith.index_cast %506 : i32 to index
    %c0_237 = arith.constant 0 : index
    %570 = vector.load %arg16[%569, %c0_237] : memref<64x32xf32, #tpu.memory_space<vmem>>, vector<8x32xf32>
    tpu.vector_store %arg16[%569, %c0_237], %568 {strides = array<i32>} : memref<64x32xf32, #tpu.memory_space<vmem>>, vector<8x32xf32>,
    %571 = vector.broadcast %546 : vector<8x1xf32> to vector<8x32xf32>
    %572 = arith.mulf %571, %540 : vector<8x32xf32>
    %573 = arith.index_cast %508 : i32 to index
    %c0_238 = arith.constant 0 : index
    %574 = vector.load %arg17[%573, %c0_238] : memref<64x32xf32, #tpu.memory_space<vmem>>, vector<8x32xf32>
    tpu.vector_store %arg17[%573, %c0_238], %572 {strides = array<i32>} : memref<64x32xf32, #tpu.memory_space<vmem>>, vector<8x32xf32>,
    %c7_i32_239 = arith.constant 7 : i32
    %c7_i32_240 = arith.constant 7 : i32
    %575 = arith.subi %c7_i32_240, %c7_i32_239 : i32
    %c0_241 = arith.constant 0 : index
    %c0_242 = arith.constant 0 : index
    %576 = vector.load %arg18[%c0_241, %c0_242] : memref<8x32xf32, #tpu.memory_space<vmem>>, vector<8x32xf32>
    %c0_243 = arith.constant 0 : index
    %c0_244 = arith.constant 0 : index
    %577 = vector.load %arg19[%c0_243, %c0_244] : memref<8x32xf32, #tpu.memory_space<vmem>>, vector<8x32xf32>
    %c0_245 = arith.constant 0 : index
    %c0_246 = arith.constant 0 : index
    %578 = vector.load %arg20[%c0_245, %c0_246] : memref<8x32xf32, #tpu.memory_space<vmem>>, vector<8x32xf32>
    %c0_247 = arith.constant 0 : index
    %c0_248 = arith.constant 0 : index
    %579 = vector.load %arg21[%c0_247, %c0_248] : memref<8x32xf32, #tpu.memory_space<vmem>>, vector<8x32xf32>
    %580 = arith.truncf %576 : vector<8x32xf32> to vector<8x32xbf16>
    %cst_249 = arith.constant dense<0.000000e+00> : vector<8x128xf32>
    %581 = tpu.matmul %580, %11, %cst_249 {dimension_numbers = #tpu.dot_dimension_numbers<[1], [0], [0], [1], [0, 0, 1, 1], [], []>} : vector<8x32xbf16>, vector<32x128xbf16>, vector<8x128xf32> -> vector<8x128xf32>
    %582 = arith.truncf %577 : vector<8x32xf32> to vector<8x32xbf16>
    %cst_250 = arith.constant dense<0.000000e+00> : vector<8x128xf32>
    %583 = tpu.matmul %582, %13, %cst_250 {dimension_numbers = #tpu.dot_dimension_numbers<[1], [0], [0], [1], [0, 0, 1, 1], [], []>} : vector<8x32xbf16>, vector<32x128xbf16>, vector<8x128xf32> -> vector<8x128xf32>
    %c8_i32_251 = arith.constant 8 : i32
    %584 = arith.muli %c7_i32_239, %c8_i32_251 : i32
    %585 = tpu.assume_multiple %584, 8 : i32
    %c8_i32_252 = arith.constant 8 : i32
    %586 = arith.muli %575, %c8_i32_252 : i32
    %587 = tpu.assume_multiple %586, 8 : i32
    %588 = arith.index_cast %585 : i32 to index
    %c0_253 = arith.constant 0 : index
    %589 = vector.load %arg15[%588, %c0_253] : memref<64x256xf32, #tpu.memory_space<vmem>>, vector<8x256xf32>
    %590 = arith.index_cast %587 : i32 to index
    %c0_254 = arith.constant 0 : index
    %591 = vector.load %arg15[%590, %c0_254] : memref<64x256xf32, #tpu.memory_space<vmem>>, vector<8x256xf32>
    %592 = vector.extract_strided_slice %589 {offsets = [0, 0], sizes = [8, 128], strides = [1, 1]} : vector<8x256xf32> to vector<8x128xf32>
    %593 = arith.addf %581, %592 : vector<8x128xf32>
    %594 = vector.extract_strided_slice %591 {offsets = [0, 128], sizes = [8, 128], strides = [1, 1]} : vector<8x256xf32> to vector<8x128xf32>
    %595 = arith.addf %583, %594 : vector<8x128xf32>
    %596 = tpu.concatenate %593, %595 in 1 : vector<8x128xf32>, vector<8x128xf32> -> vector<8x256xf32>
    %597 = math.tanh %596 : vector<8x256xf32>
    %cst_255 = arith.constant 5.000000e-01 : f32
    %598 = vector.broadcast %cst_255 : f32 to vector<8x256xf32>
    %599 = arith.mulf %597, %598 : vector<8x256xf32>
    %cst_256 = arith.constant 5.000000e-01 : f32
    %600 = vector.broadcast %cst_256 : f32 to vector<8x256xf32>
    %601 = arith.addf %599, %600 : vector<8x256xf32>
    %602 = vector.extract_strided_slice %601 {offsets = [0, 0], sizes = [8, 32], strides = [1, 1]} : vector<8x256xf32> to vector<8x32xf32>
    %603 = vector.extract_strided_slice %601 {offsets = [0, 32], sizes = [8, 32], strides = [1, 1]} : vector<8x256xf32> to vector<8x32xf32>
    %604 = vector.extract_strided_slice %601 {offsets = [0, 64], sizes = [8, 32], strides = [1, 1]} : vector<8x256xf32> to vector<8x32xf32>
    %605 = vector.extract_strided_slice %597 {offsets = [0, 96], sizes = [8, 32], strides = [1, 1]} : vector<8x256xf32> to vector<8x32xf32>
    %606 = vector.extract_strided_slice %601 {offsets = [0, 128], sizes = [8, 32], strides = [1, 1]} : vector<8x256xf32> to vector<8x32xf32>
    %607 = vector.extract_strided_slice %601 {offsets = [0, 160], sizes = [8, 32], strides = [1, 1]} : vector<8x256xf32> to vector<8x32xf32>
    %608 = vector.extract_strided_slice %601 {offsets = [0, 192], sizes = [8, 32], strides = [1, 1]} : vector<8x256xf32> to vector<8x32xf32>
    %609 = vector.extract_strided_slice %597 {offsets = [0, 224], sizes = [8, 32], strides = [1, 1]} : vector<8x256xf32> to vector<8x32xf32>
    %610 = arith.mulf %603, %578 : vector<8x32xf32>
    %611 = arith.mulf %602, %605 : vector<8x32xf32>
    %612 = arith.addf %610, %611 : vector<8x32xf32>
    %613 = arith.mulf %607, %579 : vector<8x32xf32>
    %614 = arith.mulf %606, %609 : vector<8x32xf32>
    %615 = arith.addf %613, %614 : vector<8x32xf32>
    %616 = math.tanh %612 : vector<8x32xf32>
    %617 = arith.mulf %604, %616 : vector<8x32xf32>
    %618 = math.tanh %615 : vector<8x32xf32>
    %619 = arith.mulf %608, %618 : vector<8x32xf32>
    %620 = arith.index_cast %c7_i32_239 : i32 to index
    %c0_257 = arith.constant 0 : index
    %c0_258 = arith.constant 0 : index
    %621 = vector.load %arg2[%620, %c0_257, %c0_258] : memref<8x8x1xf32, #tpu.memory_space<vmem>>, vector<1x8x1xf32>
    %622 = vector.shape_cast %621 : vector<1x8x1xf32> to vector<8x1xf32>
    %623 = arith.index_cast %575 : i32 to index
    %c0_259 = arith.constant 0 : index
    %c0_260 = arith.constant 0 : index
    %624 = vector.load %arg2[%623, %c0_259, %c0_260] : memref<8x8x1xf32, #tpu.memory_space<vmem>>, vector<1x8x1xf32>
    %625 = vector.shape_cast %624 : vector<1x8x1xf32> to vector<8x1xf32>
    %626 = arith.subf %617, %576 : vector<8x32xf32>
    %627 = vector.broadcast %622 : vector<8x1xf32> to vector<8x32xf32>
    %628 = arith.mulf %627, %626 : vector<8x32xf32>
    %629 = arith.addf %576, %628 : vector<8x32xf32>
    %c0_261 = arith.constant 0 : index
    %c0_262 = arith.constant 0 : index
    %630 = vector.load %arg18[%c0_261, %c0_262] : memref<8x32xf32, #tpu.memory_space<vmem>>, vector<8x32xf32>
    tpu.vector_store %arg18[%c0_261, %c0_262], %629 {strides = array<i32>} : memref<8x32xf32, #tpu.memory_space<vmem>>, vector<8x32xf32>,
    %631 = arith.subf %619, %577 : vector<8x32xf32>
    %632 = vector.broadcast %625 : vector<8x1xf32> to vector<8x32xf32>
    %633 = arith.mulf %632, %631 : vector<8x32xf32>
    %634 = arith.addf %577, %633 : vector<8x32xf32>
    %c0_263 = arith.constant 0 : index
    %c0_264 = arith.constant 0 : index
    %635 = vector.load %arg19[%c0_263, %c0_264] : memref<8x32xf32, #tpu.memory_space<vmem>>, vector<8x32xf32>
    tpu.vector_store %arg19[%c0_263, %c0_264], %634 {strides = array<i32>} : memref<8x32xf32, #tpu.memory_space<vmem>>, vector<8x32xf32>,
    %636 = arith.subf %612, %578 : vector<8x32xf32>
    %637 = vector.broadcast %622 : vector<8x1xf32> to vector<8x32xf32>
    %638 = arith.mulf %637, %636 : vector<8x32xf32>
    %639 = arith.addf %578, %638 : vector<8x32xf32>
    %c0_265 = arith.constant 0 : index
    %c0_266 = arith.constant 0 : index
    %640 = vector.load %arg20[%c0_265, %c0_266] : memref<8x32xf32, #tpu.memory_space<vmem>>, vector<8x32xf32>
    tpu.vector_store %arg20[%c0_265, %c0_266], %639 {strides = array<i32>} : memref<8x32xf32, #tpu.memory_space<vmem>>, vector<8x32xf32>,
    %641 = arith.subf %615, %579 : vector<8x32xf32>
    %642 = vector.broadcast %625 : vector<8x1xf32> to vector<8x32xf32>
    %643 = arith.mulf %642, %641 : vector<8x32xf32>
    %644 = arith.addf %579, %643 : vector<8x32xf32>
    %c0_267 = arith.constant 0 : index
    %c0_268 = arith.constant 0 : index
    %645 = vector.load %arg21[%c0_267, %c0_268] : memref<8x32xf32, #tpu.memory_space<vmem>>, vector<8x32xf32>
    tpu.vector_store %arg21[%c0_267, %c0_268], %644 {strides = array<i32>} : memref<8x32xf32, #tpu.memory_space<vmem>>, vector<8x32xf32>,
    %646 = vector.broadcast %622 : vector<8x1xf32> to vector<8x32xf32>
    %647 = arith.mulf %646, %617 : vector<8x32xf32>
    %648 = arith.index_cast %585 : i32 to index
    %c0_269 = arith.constant 0 : index
    %649 = vector.load %arg16[%648, %c0_269] : memref<64x32xf32, #tpu.memory_space<vmem>>, vector<8x32xf32>
    tpu.vector_store %arg16[%648, %c0_269], %647 {strides = array<i32>} : memref<64x32xf32, #tpu.memory_space<vmem>>, vector<8x32xf32>,
    %650 = vector.broadcast %625 : vector<8x1xf32> to vector<8x32xf32>
    %651 = arith.mulf %650, %619 : vector<8x32xf32>
    %652 = arith.index_cast %587 : i32 to index
    %c0_270 = arith.constant 0 : index
    %653 = vector.load %arg17[%652, %c0_270] : memref<64x32xf32, #tpu.memory_space<vmem>>, vector<8x32xf32>
    tpu.vector_store %arg17[%652, %c0_270], %651 {strides = array<i32>} : memref<64x32xf32, #tpu.memory_space<vmem>>, vector<8x32xf32>,
    %c8_i32_271 = arith.constant 8 : i32
    %c0_272 = arith.constant 0 : index
    %c0_273 = arith.constant 0 : index
    %654 = vector.load %arg16[%c0_272, %c0_273] : memref<64x32xf32, #tpu.memory_space<vmem>>, vector<64x32xf32>
    %655 = arith.truncf %654 : vector<64x32xf32> to vector<64x32xbf16>
    %c0_274 = arith.constant 0 : index
    %c0_275 = arith.constant 0 : index
    %656 = vector.load %arg7[%c0_274, %c0_275] : memref<64x8xf32, #tpu.memory_space<vmem>>, vector<32x8xf32>
    %657 = arith.truncf %656 : vector<32x8xf32> to vector<32x8xbf16>
    %cst_276 = arith.constant dense<0.000000e+00> : vector<64x8xf32>
    %658 = tpu.matmul %655, %657, %cst_276 {dimension_numbers = #tpu.dot_dimension_numbers<[1], [0], [0], [1], [0, 0, 1, 1], [], []>} : vector<64x32xbf16>, vector<32x8xbf16>, vector<64x8xf32> -> vector<64x8xf32>
    %c0_277 = arith.constant 0 : index
    %c0_278 = arith.constant 0 : index
    %659 = vector.load %arg17[%c0_277, %c0_278] : memref<64x32xf32, #tpu.memory_space<vmem>>, vector<64x32xf32>
    %660 = arith.truncf %659 : vector<64x32xf32> to vector<64x32xbf16>
    %c32 = arith.constant 32 : index
    %c0_279 = arith.constant 0 : index
    %661 = vector.load %arg7[%c32, %c0_279] : memref<64x8xf32, #tpu.memory_space<vmem>>, vector<32x8xf32>
    %662 = arith.truncf %661 : vector<32x8xf32> to vector<32x8xbf16>
    %cst_280 = arith.constant dense<0.000000e+00> : vector<64x8xf32>
    %663 = tpu.matmul %660, %662, %cst_280 {dimension_numbers = #tpu.dot_dimension_numbers<[1], [0], [0], [1], [0, 0, 1, 1], [], []>} : vector<64x32xbf16>, vector<32x8xbf16>, vector<64x8xf32> -> vector<64x8xf32>
    %664 = arith.addf %658, %663 : vector<64x8xf32>
    %c0_281 = arith.constant 0 : index
    %c0_282 = arith.constant 0 : index
    %665 = vector.load %arg8[%c0_281, %c0_282] : memref<1x8xf32, #tpu.memory_space<vmem>>, vector<1x8xf32>
    %666 = vector.broadcast %665 : vector<1x8xf32> to vector<64x8xf32>
    %667 = arith.addf %664, %666 : vector<64x8xf32>
    %c0_283 = arith.constant 0 : index
    %c0_284 = arith.constant 0 : index
    %668 = vector.load %arg22[%c0_283, %c0_284] : memref<64x8xf32, #tpu.memory_space<vmem>>, vector<64x8xf32>
    tpu.vector_store %arg22[%c0_283, %c0_284], %667 {strides = array<i32>} : memref<64x8xf32, #tpu.memory_space<vmem>>, vector<64x8xf32>,
    %c0_285 = arith.constant 0 : index
    %c0_286 = arith.constant 0 : index
    %669 = vector.load %arg9[%c0_285, %c0_286] : memref<8x8xf32, #tpu.memory_space<vmem>>, vector<8x8xf32>
    %670 = vector.extract_strided_slice %669 {offsets = [0, 0], sizes = [1, 8], strides = [1, 1]} : vector<8x8xf32> to vector<1x8xf32>
    %671 = vector.extract_strided_slice %669 {offsets = [1, 0], sizes = [1, 8], strides = [1, 1]} : vector<8x8xf32> to vector<1x8xf32>
    %672 = vector.extract_strided_slice %669 {offsets = [2, 0], sizes = [1, 8], strides = [1, 1]} : vector<8x8xf32> to vector<1x8xf32>
    %673 = vector.extract_strided_slice %669 {offsets = [3, 0], sizes = [1, 8], strides = [1, 1]} : vector<8x8xf32> to vector<1x8xf32>
    %674 = vector.extract_strided_slice %669 {offsets = [4, 0], sizes = [1, 8], strides = [1, 1]} : vector<8x8xf32> to vector<1x8xf32>
    %675 = vector.extract_strided_slice %669 {offsets = [5, 0], sizes = [1, 8], strides = [1, 1]} : vector<8x8xf32> to vector<1x8xf32>
    %676 = vector.extract_strided_slice %669 {offsets = [6, 0], sizes = [1, 8], strides = [1, 1]} : vector<8x8xf32> to vector<1x8xf32>
    %677 = vector.extract_strided_slice %669 {offsets = [7, 0], sizes = [1, 8], strides = [1, 1]} : vector<8x8xf32> to vector<1x8xf32>
    %c0_287 = arith.constant 0 : index
    %c0_288 = arith.constant 0 : index
    %678 = vector.load %arg10[%c0_287, %c0_288] : memref<1x8xf32, #tpu.memory_space<vmem>>, vector<1x8xf32>
    %c0_289 = arith.constant 0 : index
    %c0_290 = arith.constant 0 : index
    %679 = vector.load %arg22[%c0_289, %c0_290] : memref<64x8xf32, #tpu.memory_space<vmem>>, vector<8x8xf32>
    %680 = vector.broadcast %678 : vector<1x8xf32> to vector<8x8xf32>
    %681 = arith.addf %680, %679 : vector<8x8xf32>
    %c0_291 = arith.constant 0 : index
    %c0_292 = arith.constant 0 : index
    %682 = vector.load %arg23[%c0_291, %c0_292] : memref<8x8xf32, #tpu.memory_space<vmem>>, vector<8x8xf32>
    tpu.vector_store %arg23[%c0_291, %c0_292], %681 {strides = array<i32>} : memref<8x8xf32, #tpu.memory_space<vmem>>, vector<8x8xf32>,
    %c0_i32_293 = arith.constant 0 : i32
    %683 = vector.broadcast %c0_i32_293 : i32 to vector<8x8xi32>
    %c0_294 = arith.constant 0 : index
    %c0_295 = arith.constant 0 : index
    %c0_296 = arith.constant 0 : index
    %684 = vector.load %arg14[%c0_294, %c0_295, %c0_296] : memref<8x8x8xi32, #tpu.memory_space<vmem>>, vector<1x8x8xi32>
    %685 = vector.shape_cast %684 : vector<1x8x8xi32> to vector<8x8xi32>
    %686 = vector.shape_cast %683 : vector<8x8xi32> to vector<1x8x8xi32>
    tpu.vector_store %arg14[%c0_294, %c0_295, %c0_296], %686 {strides = array<i32>} : memref<8x8x8xi32, #tpu.memory_space<vmem>>, vector<1x8x8xi32>,
    %c1_i32_297 = arith.constant 1 : i32
    %c8_i32_298 = arith.constant 8 : i32
    %687 = arith.muli %c1_i32_297, %c8_i32_298 : i32
    %688 = tpu.assume_multiple %687, 8 : i32
    %689 = arith.index_cast %688 : i32 to index
    %c0_299 = arith.constant 0 : index
    %690 = vector.load %arg22[%689, %c0_299] : memref<64x8xf32, #tpu.memory_space<vmem>>, vector<8x8xf32>
    %c0_300 = arith.constant 0 : index
    %c0_301 = arith.constant 0 : index
    %691 = vector.load %arg23[%c0_300, %c0_301] : memref<8x8xf32, #tpu.memory_space<vmem>>, vector<8x8xf32>
    %692 = vector.extract_strided_slice %691 {offsets = [0, 0], sizes = [8, 1], strides = [1, 1]} : vector<8x8xf32> to vector<8x1xf32>
    %693 = vector.broadcast %692 : vector<8x1xf32> to vector<8x8xf32>
    %694 = vector.broadcast %670 : vector<1x8xf32> to vector<8x8xf32>
    %695 = arith.addf %693, %694 : vector<8x8xf32>
    %c0_i32_302 = arith.constant 0 : i32
    %696 = vector.broadcast %c0_i32_302 : i32 to vector<8x8xi32>
    %697 = vector.extract_strided_slice %691 {offsets = [0, 1], sizes = [8, 1], strides = [1, 1]} : vector<8x8xf32> to vector<8x1xf32>
    %698 = vector.broadcast %697 : vector<8x1xf32> to vector<8x8xf32>
    %699 = vector.broadcast %671 : vector<1x8xf32> to vector<8x8xf32>
    %700 = arith.addf %698, %699 : vector<8x8xf32>
    %701 = arith.cmpf ogt, %700, %695 : vector<8x8xf32>
    %c1_i32_303 = arith.constant 1 : i32
    %702 = vector.broadcast %c1_i32_303 : i32 to vector<8x8xi32>
    %703 = arith.select %701, %702, %696 : vector<8x8xi1>, vector<8x8xi32>
    %704 = arith.maximumf %695, %700 : vector<8x8xf32>
    %705 = vector.extract_strided_slice %691 {offsets = [0, 2], sizes = [8, 1], strides = [1, 1]} : vector<8x8xf32> to vector<8x1xf32>
    %706 = vector.broadcast %705 : vector<8x1xf32> to vector<8x8xf32>
    %707 = vector.broadcast %672 : vector<1x8xf32> to vector<8x8xf32>
    %708 = arith.addf %706, %707 : vector<8x8xf32>
    %709 = arith.cmpf ogt, %708, %704 : vector<8x8xf32>
    %c2_i32_304 = arith.constant 2 : i32
    %710 = vector.broadcast %c2_i32_304 : i32 to vector<8x8xi32>
    %711 = arith.select %709, %710, %703 : vector<8x8xi1>, vector<8x8xi32>
    %712 = arith.maximumf %704, %708 : vector<8x8xf32>
    %713 = vector.extract_strided_slice %691 {offsets = [0, 3], sizes = [8, 1], strides = [1, 1]} : vector<8x8xf32> to vector<8x1xf32>
    %714 = vector.broadcast %713 : vector<8x1xf32> to vector<8x8xf32>
    %715 = vector.broadcast %673 : vector<1x8xf32> to vector<8x8xf32>
    %716 = arith.addf %714, %715 : vector<8x8xf32>
    %717 = arith.cmpf ogt, %716, %712 : vector<8x8xf32>
    %c3_i32_305 = arith.constant 3 : i32
    %718 = vector.broadcast %c3_i32_305 : i32 to vector<8x8xi32>
    %719 = arith.select %717, %718, %711 : vector<8x8xi1>, vector<8x8xi32>
    %720 = arith.maximumf %712, %716 : vector<8x8xf32>
    %721 = vector.extract_strided_slice %691 {offsets = [0, 4], sizes = [8, 1], strides = [1, 1]} : vector<8x8xf32> to vector<8x1xf32>
    %722 = vector.broadcast %721 : vector<8x1xf32> to vector<8x8xf32>
    %723 = vector.broadcast %674 : vector<1x8xf32> to vector<8x8xf32>
    %724 = arith.addf %722, %723 : vector<8x8xf32>
    %725 = arith.cmpf ogt, %724, %720 : vector<8x8xf32>
    %c4_i32_306 = arith.constant 4 : i32
    %726 = vector.broadcast %c4_i32_306 : i32 to vector<8x8xi32>
    %727 = arith.select %725, %726, %719 : vector<8x8xi1>, vector<8x8xi32>
    %728 = arith.maximumf %720, %724 : vector<8x8xf32>
    %729 = vector.extract_strided_slice %691 {offsets = [0, 5], sizes = [8, 1], strides = [1, 1]} : vector<8x8xf32> to vector<8x1xf32>
    %730 = vector.broadcast %729 : vector<8x1xf32> to vector<8x8xf32>
    %731 = vector.broadcast %675 : vector<1x8xf32> to vector<8x8xf32>
    %732 = arith.addf %730, %731 : vector<8x8xf32>
    %733 = arith.cmpf ogt, %732, %728 : vector<8x8xf32>
    %c5_i32_307 = arith.constant 5 : i32
    %734 = vector.broadcast %c5_i32_307 : i32 to vector<8x8xi32>
    %735 = arith.select %733, %734, %727 : vector<8x8xi1>, vector<8x8xi32>
    %736 = arith.maximumf %728, %732 : vector<8x8xf32>
    %737 = vector.extract_strided_slice %691 {offsets = [0, 6], sizes = [8, 1], strides = [1, 1]} : vector<8x8xf32> to vector<8x1xf32>
    %738 = vector.broadcast %737 : vector<8x1xf32> to vector<8x8xf32>
    %739 = vector.broadcast %676 : vector<1x8xf32> to vector<8x8xf32>
    %740 = arith.addf %738, %739 : vector<8x8xf32>
    %741 = arith.cmpf ogt, %740, %736 : vector<8x8xf32>
    %c6_i32_308 = arith.constant 6 : i32
    %742 = vector.broadcast %c6_i32_308 : i32 to vector<8x8xi32>
    %743 = arith.select %741, %742, %735 : vector<8x8xi1>, vector<8x8xi32>
    %744 = arith.maximumf %736, %740 : vector<8x8xf32>
    %745 = vector.extract_strided_slice %691 {offsets = [0, 7], sizes = [8, 1], strides = [1, 1]} : vector<8x8xf32> to vector<8x1xf32>
    %746 = vector.broadcast %745 : vector<8x1xf32> to vector<8x8xf32>
    %747 = vector.broadcast %677 : vector<1x8xf32> to vector<8x8xf32>
    %748 = arith.addf %746, %747 : vector<8x8xf32>
    %749 = arith.cmpf ogt, %748, %744 : vector<8x8xf32>
    %c7_i32_309 = arith.constant 7 : i32
    %750 = vector.broadcast %c7_i32_309 : i32 to vector<8x8xi32>
    %751 = arith.select %749, %750, %743 : vector<8x8xi1>, vector<8x8xi32>
    %752 = arith.maximumf %744, %748 : vector<8x8xf32>
    %753 = arith.index_cast %c1_i32_297 : i32 to index
    %c0_310 = arith.constant 0 : index
    %c0_311 = arith.constant 0 : index
    %754 = vector.load %arg2[%753, %c0_310, %c0_311] : memref<8x8x1xf32, #tpu.memory_space<vmem>>, vector<1x8x1xf32>
    %755 = vector.shape_cast %754 : vector<1x8x1xf32> to vector<8x1xf32>
    %756 = arith.addf %752, %690 : vector<8x8xf32>
    %757 = arith.subf %756, %691 : vector<8x8xf32>
    %758 = vector.broadcast %755 : vector<8x1xf32> to vector<8x8xf32>
    %759 = arith.mulf %758, %757 : vector<8x8xf32>
    %760 = arith.addf %691, %759 : vector<8x8xf32>
    %c0_312 = arith.constant 0 : index
    %c0_313 = arith.constant 0 : index
    %761 = vector.load %arg23[%c0_312, %c0_313] : memref<8x8xf32, #tpu.memory_space<vmem>>, vector<8x8xf32>
    tpu.vector_store %arg23[%c0_312, %c0_313], %760 {strides = array<i32>} : memref<8x8xf32, #tpu.memory_space<vmem>>, vector<8x8xf32>,
    %762 = arith.index_cast %c1_i32_297 : i32 to index
    %c0_314 = arith.constant 0 : index
    %c0_315 = arith.constant 0 : index
    %763 = vector.load %arg14[%762, %c0_314, %c0_315] : memref<8x8x8xi32, #tpu.memory_space<vmem>>, vector<1x8x8xi32>
    %764 = vector.shape_cast %763 : vector<1x8x8xi32> to vector<8x8xi32>
    %765 = vector.shape_cast %751 : vector<8x8xi32> to vector<1x8x8xi32>
    tpu.vector_store %arg14[%762, %c0_314, %c0_315], %765 {strides = array<i32>} : memref<8x8x8xi32, #tpu.memory_space<vmem>>, vector<1x8x8xi32>,
    %c2_i32_316 = arith.constant 2 : i32
    %c8_i32_317 = arith.constant 8 : i32
    %766 = arith.muli %c2_i32_316, %c8_i32_317 : i32
    %767 = tpu.assume_multiple %766, 8 : i32
    %768 = arith.index_cast %767 : i32 to index
    %c0_318 = arith.constant 0 : index
    %769 = vector.load %arg22[%768, %c0_318] : memref<64x8xf32, #tpu.memory_space<vmem>>, vector<8x8xf32>
    %c0_319 = arith.constant 0 : index
    %c0_320 = arith.constant 0 : index
    %770 = vector.load %arg23[%c0_319, %c0_320] : memref<8x8xf32, #tpu.memory_space<vmem>>, vector<8x8xf32>
    %771 = vector.extract_strided_slice %770 {offsets = [0, 0], sizes = [8, 1], strides = [1, 1]} : vector<8x8xf32> to vector<8x1xf32>
    %772 = vector.broadcast %771 : vector<8x1xf32> to vector<8x8xf32>
    %773 = vector.broadcast %670 : vector<1x8xf32> to vector<8x8xf32>
    %774 = arith.addf %772, %773 : vector<8x8xf32>
    %c0_i32_321 = arith.constant 0 : i32
    %775 = vector.broadcast %c0_i32_321 : i32 to vector<8x8xi32>
    %776 = vector.extract_strided_slice %770 {offsets = [0, 1], sizes = [8, 1], strides = [1, 1]} : vector<8x8xf32> to vector<8x1xf32>
    %777 = vector.broadcast %776 : vector<8x1xf32> to vector<8x8xf32>
    %778 = vector.broadcast %671 : vector<1x8xf32> to vector<8x8xf32>
    %779 = arith.addf %777, %778 : vector<8x8xf32>
    %780 = arith.cmpf ogt, %779, %774 : vector<8x8xf32>
    %c1_i32_322 = arith.constant 1 : i32
    %781 = vector.broadcast %c1_i32_322 : i32 to vector<8x8xi32>
    %782 = arith.select %780, %781, %775 : vector<8x8xi1>, vector<8x8xi32>
    %783 = arith.maximumf %774, %779 : vector<8x8xf32>
    %784 = vector.extract_strided_slice %770 {offsets = [0, 2], sizes = [8, 1], strides = [1, 1]} : vector<8x8xf32> to vector<8x1xf32>
    %785 = vector.broadcast %784 : vector<8x1xf32> to vector<8x8xf32>
    %786 = vector.broadcast %672 : vector<1x8xf32> to vector<8x8xf32>
    %787 = arith.addf %785, %786 : vector<8x8xf32>
    %788 = arith.cmpf ogt, %787, %783 : vector<8x8xf32>
    %c2_i32_323 = arith.constant 2 : i32
    %789 = vector.broadcast %c2_i32_323 : i32 to vector<8x8xi32>
    %790 = arith.select %788, %789, %782 : vector<8x8xi1>, vector<8x8xi32>
    %791 = arith.maximumf %783, %787 : vector<8x8xf32>
    %792 = vector.extract_strided_slice %770 {offsets = [0, 3], sizes = [8, 1], strides = [1, 1]} : vector<8x8xf32> to vector<8x1xf32>
    %793 = vector.broadcast %792 : vector<8x1xf32> to vector<8x8xf32>
    %794 = vector.broadcast %673 : vector<1x8xf32> to vector<8x8xf32>
    %795 = arith.addf %793, %794 : vector<8x8xf32>
    %796 = arith.cmpf ogt, %795, %791 : vector<8x8xf32>
    %c3_i32_324 = arith.constant 3 : i32
    %797 = vector.broadcast %c3_i32_324 : i32 to vector<8x8xi32>
    %798 = arith.select %796, %797, %790 : vector<8x8xi1>, vector<8x8xi32>
    %799 = arith.maximumf %791, %795 : vector<8x8xf32>
    %800 = vector.extract_strided_slice %770 {offsets = [0, 4], sizes = [8, 1], strides = [1, 1]} : vector<8x8xf32> to vector<8x1xf32>
    %801 = vector.broadcast %800 : vector<8x1xf32> to vector<8x8xf32>
    %802 = vector.broadcast %674 : vector<1x8xf32> to vector<8x8xf32>
    %803 = arith.addf %801, %802 : vector<8x8xf32>
    %804 = arith.cmpf ogt, %803, %799 : vector<8x8xf32>
    %c4_i32_325 = arith.constant 4 : i32
    %805 = vector.broadcast %c4_i32_325 : i32 to vector<8x8xi32>
    %806 = arith.select %804, %805, %798 : vector<8x8xi1>, vector<8x8xi32>
    %807 = arith.maximumf %799, %803 : vector<8x8xf32>
    %808 = vector.extract_strided_slice %770 {offsets = [0, 5], sizes = [8, 1], strides = [1, 1]} : vector<8x8xf32> to vector<8x1xf32>
    %809 = vector.broadcast %808 : vector<8x1xf32> to vector<8x8xf32>
    %810 = vector.broadcast %675 : vector<1x8xf32> to vector<8x8xf32>
    %811 = arith.addf %809, %810 : vector<8x8xf32>
    %812 = arith.cmpf ogt, %811, %807 : vector<8x8xf32>
    %c5_i32_326 = arith.constant 5 : i32
    %813 = vector.broadcast %c5_i32_326 : i32 to vector<8x8xi32>
    %814 = arith.select %812, %813, %806 : vector<8x8xi1>, vector<8x8xi32>
    %815 = arith.maximumf %807, %811 : vector<8x8xf32>
    %816 = vector.extract_strided_slice %770 {offsets = [0, 6], sizes = [8, 1], strides = [1, 1]} : vector<8x8xf32> to vector<8x1xf32>
    %817 = vector.broadcast %816 : vector<8x1xf32> to vector<8x8xf32>
    %818 = vector.broadcast %676 : vector<1x8xf32> to vector<8x8xf32>
    %819 = arith.addf %817, %818 : vector<8x8xf32>
    %820 = arith.cmpf ogt, %819, %815 : vector<8x8xf32>
    %c6_i32_327 = arith.constant 6 : i32
    %821 = vector.broadcast %c6_i32_327 : i32 to vector<8x8xi32>
    %822 = arith.select %820, %821, %814 : vector<8x8xi1>, vector<8x8xi32>
    %823 = arith.maximumf %815, %819 : vector<8x8xf32>
    %824 = vector.extract_strided_slice %770 {offsets = [0, 7], sizes = [8, 1], strides = [1, 1]} : vector<8x8xf32> to vector<8x1xf32>
    %825 = vector.broadcast %824 : vector<8x1xf32> to vector<8x8xf32>
    %826 = vector.broadcast %677 : vector<1x8xf32> to vector<8x8xf32>
    %827 = arith.addf %825, %826 : vector<8x8xf32>
    %828 = arith.cmpf ogt, %827, %823 : vector<8x8xf32>
    %c7_i32_328 = arith.constant 7 : i32
    %829 = vector.broadcast %c7_i32_328 : i32 to vector<8x8xi32>
    %830 = arith.select %828, %829, %822 : vector<8x8xi1>, vector<8x8xi32>
    %831 = arith.maximumf %823, %827 : vector<8x8xf32>
    %832 = arith.index_cast %c2_i32_316 : i32 to index
    %c0_329 = arith.constant 0 : index
    %c0_330 = arith.constant 0 : index
    %833 = vector.load %arg2[%832, %c0_329, %c0_330] : memref<8x8x1xf32, #tpu.memory_space<vmem>>, vector<1x8x1xf32>
    %834 = vector.shape_cast %833 : vector<1x8x1xf32> to vector<8x1xf32>
    %835 = arith.addf %831, %769 : vector<8x8xf32>
    %836 = arith.subf %835, %770 : vector<8x8xf32>
    %837 = vector.broadcast %834 : vector<8x1xf32> to vector<8x8xf32>
    %838 = arith.mulf %837, %836 : vector<8x8xf32>
    %839 = arith.addf %770, %838 : vector<8x8xf32>
    %c0_331 = arith.constant 0 : index
    %c0_332 = arith.constant 0 : index
    %840 = vector.load %arg23[%c0_331, %c0_332] : memref<8x8xf32, #tpu.memory_space<vmem>>, vector<8x8xf32>
    tpu.vector_store %arg23[%c0_331, %c0_332], %839 {strides = array<i32>} : memref<8x8xf32, #tpu.memory_space<vmem>>, vector<8x8xf32>,
    %841 = arith.index_cast %c2_i32_316 : i32 to index
    %c0_333 = arith.constant 0 : index
    %c0_334 = arith.constant 0 : index
    %842 = vector.load %arg14[%841, %c0_333, %c0_334] : memref<8x8x8xi32, #tpu.memory_space<vmem>>, vector<1x8x8xi32>
    %843 = vector.shape_cast %842 : vector<1x8x8xi32> to vector<8x8xi32>
    %844 = vector.shape_cast %830 : vector<8x8xi32> to vector<1x8x8xi32>
    tpu.vector_store %arg14[%841, %c0_333, %c0_334], %844 {strides = array<i32>} : memref<8x8x8xi32, #tpu.memory_space<vmem>>, vector<1x8x8xi32>,
    %c3_i32_335 = arith.constant 3 : i32
    %c8_i32_336 = arith.constant 8 : i32
    %845 = arith.muli %c3_i32_335, %c8_i32_336 : i32
    %846 = tpu.assume_multiple %845, 8 : i32
    %847 = arith.index_cast %846 : i32 to index
    %c0_337 = arith.constant 0 : index
    %848 = vector.load %arg22[%847, %c0_337] : memref<64x8xf32, #tpu.memory_space<vmem>>, vector<8x8xf32>
    %c0_338 = arith.constant 0 : index
    %c0_339 = arith.constant 0 : index
    %849 = vector.load %arg23[%c0_338, %c0_339] : memref<8x8xf32, #tpu.memory_space<vmem>>, vector<8x8xf32>
    %850 = vector.extract_strided_slice %849 {offsets = [0, 0], sizes = [8, 1], strides = [1, 1]} : vector<8x8xf32> to vector<8x1xf32>
    %851 = vector.broadcast %850 : vector<8x1xf32> to vector<8x8xf32>
    %852 = vector.broadcast %670 : vector<1x8xf32> to vector<8x8xf32>
    %853 = arith.addf %851, %852 : vector<8x8xf32>
    %c0_i32_340 = arith.constant 0 : i32
    %854 = vector.broadcast %c0_i32_340 : i32 to vector<8x8xi32>
    %855 = vector.extract_strided_slice %849 {offsets = [0, 1], sizes = [8, 1], strides = [1, 1]} : vector<8x8xf32> to vector<8x1xf32>
    %856 = vector.broadcast %855 : vector<8x1xf32> to vector<8x8xf32>
    %857 = vector.broadcast %671 : vector<1x8xf32> to vector<8x8xf32>
    %858 = arith.addf %856, %857 : vector<8x8xf32>
    %859 = arith.cmpf ogt, %858, %853 : vector<8x8xf32>
    %c1_i32_341 = arith.constant 1 : i32
    %860 = vector.broadcast %c1_i32_341 : i32 to vector<8x8xi32>
    %861 = arith.select %859, %860, %854 : vector<8x8xi1>, vector<8x8xi32>
    %862 = arith.maximumf %853, %858 : vector<8x8xf32>
    %863 = vector.extract_strided_slice %849 {offsets = [0, 2], sizes = [8, 1], strides = [1, 1]} : vector<8x8xf32> to vector<8x1xf32>
    %864 = vector.broadcast %863 : vector<8x1xf32> to vector<8x8xf32>
    %865 = vector.broadcast %672 : vector<1x8xf32> to vector<8x8xf32>
    %866 = arith.addf %864, %865 : vector<8x8xf32>
    %867 = arith.cmpf ogt, %866, %862 : vector<8x8xf32>
    %c2_i32_342 = arith.constant 2 : i32
    %868 = vector.broadcast %c2_i32_342 : i32 to vector<8x8xi32>
    %869 = arith.select %867, %868, %861 : vector<8x8xi1>, vector<8x8xi32>
    %870 = arith.maximumf %862, %866 : vector<8x8xf32>
    %871 = vector.extract_strided_slice %849 {offsets = [0, 3], sizes = [8, 1], strides = [1, 1]} : vector<8x8xf32> to vector<8x1xf32>
    %872 = vector.broadcast %871 : vector<8x1xf32> to vector<8x8xf32>
    %873 = vector.broadcast %673 : vector<1x8xf32> to vector<8x8xf32>
    %874 = arith.addf %872, %873 : vector<8x8xf32>
    %875 = arith.cmpf ogt, %874, %870 : vector<8x8xf32>
    %c3_i32_343 = arith.constant 3 : i32
    %876 = vector.broadcast %c3_i32_343 : i32 to vector<8x8xi32>
    %877 = arith.select %875, %876, %869 : vector<8x8xi1>, vector<8x8xi32>
    %878 = arith.maximumf %870, %874 : vector<8x8xf32>
    %879 = vector.extract_strided_slice %849 {offsets = [0, 4], sizes = [8, 1], strides = [1, 1]} : vector<8x8xf32> to vector<8x1xf32>
    %880 = vector.broadcast %879 : vector<8x1xf32> to vector<8x8xf32>
    %881 = vector.broadcast %674 : vector<1x8xf32> to vector<8x8xf32>
    %882 = arith.addf %880, %881 : vector<8x8xf32>
    %883 = arith.cmpf ogt, %882, %878 : vector<8x8xf32>
    %c4_i32_344 = arith.constant 4 : i32
    %884 = vector.broadcast %c4_i32_344 : i32 to vector<8x8xi32>
    %885 = arith.select %883, %884, %877 : vector<8x8xi1>, vector<8x8xi32>
    %886 = arith.maximumf %878, %882 : vector<8x8xf32>
    %887 = vector.extract_strided_slice %849 {offsets = [0, 5], sizes = [8, 1], strides = [1, 1]} : vector<8x8xf32> to vector<8x1xf32>
    %888 = vector.broadcast %887 : vector<8x1xf32> to vector<8x8xf32>
    %889 = vector.broadcast %675 : vector<1x8xf32> to vector<8x8xf32>
    %890 = arith.addf %888, %889 : vector<8x8xf32>
    %891 = arith.cmpf ogt, %890, %886 : vector<8x8xf32>
    %c5_i32_345 = arith.constant 5 : i32
    %892 = vector.broadcast %c5_i32_345 : i32 to vector<8x8xi32>
    %893 = arith.select %891, %892, %885 : vector<8x8xi1>, vector<8x8xi32>
    %894 = arith.maximumf %886, %890 : vector<8x8xf32>
    %895 = vector.extract_strided_slice %849 {offsets = [0, 6], sizes = [8, 1], strides = [1, 1]} : vector<8x8xf32> to vector<8x1xf32>
    %896 = vector.broadcast %895 : vector<8x1xf32> to vector<8x8xf32>
    %897 = vector.broadcast %676 : vector<1x8xf32> to vector<8x8xf32>
    %898 = arith.addf %896, %897 : vector<8x8xf32>
    %899 = arith.cmpf ogt, %898, %894 : vector<8x8xf32>
    %c6_i32_346 = arith.constant 6 : i32
    %900 = vector.broadcast %c6_i32_346 : i32 to vector<8x8xi32>
    %901 = arith.select %899, %900, %893 : vector<8x8xi1>, vector<8x8xi32>
    %902 = arith.maximumf %894, %898 : vector<8x8xf32>
    %903 = vector.extract_strided_slice %849 {offsets = [0, 7], sizes = [8, 1], strides = [1, 1]} : vector<8x8xf32> to vector<8x1xf32>
    %904 = vector.broadcast %903 : vector<8x1xf32> to vector<8x8xf32>
    %905 = vector.broadcast %677 : vector<1x8xf32> to vector<8x8xf32>
    %906 = arith.addf %904, %905 : vector<8x8xf32>
    %907 = arith.cmpf ogt, %906, %902 : vector<8x8xf32>
    %c7_i32_347 = arith.constant 7 : i32
    %908 = vector.broadcast %c7_i32_347 : i32 to vector<8x8xi32>
    %909 = arith.select %907, %908, %901 : vector<8x8xi1>, vector<8x8xi32>
    %910 = arith.maximumf %902, %906 : vector<8x8xf32>
    %911 = arith.index_cast %c3_i32_335 : i32 to index
    %c0_348 = arith.constant 0 : index
    %c0_349 = arith.constant 0 : index
    %912 = vector.load %arg2[%911, %c0_348, %c0_349] : memref<8x8x1xf32, #tpu.memory_space<vmem>>, vector<1x8x1xf32>
    %913 = vector.shape_cast %912 : vector<1x8x1xf32> to vector<8x1xf32>
    %914 = arith.addf %910, %848 : vector<8x8xf32>
    %915 = arith.subf %914, %849 : vector<8x8xf32>
    %916 = vector.broadcast %913 : vector<8x1xf32> to vector<8x8xf32>
    %917 = arith.mulf %916, %915 : vector<8x8xf32>
    %918 = arith.addf %849, %917 : vector<8x8xf32>
    %c0_350 = arith.constant 0 : index
    %c0_351 = arith.constant 0 : index
    %919 = vector.load %arg23[%c0_350, %c0_351] : memref<8x8xf32, #tpu.memory_space<vmem>>, vector<8x8xf32>
    tpu.vector_store %arg23[%c0_350, %c0_351], %918 {strides = array<i32>} : memref<8x8xf32, #tpu.memory_space<vmem>>, vector<8x8xf32>,
    %920 = arith.index_cast %c3_i32_335 : i32 to index
    %c0_352 = arith.constant 0 : index
    %c0_353 = arith.constant 0 : index
    %921 = vector.load %arg14[%920, %c0_352, %c0_353] : memref<8x8x8xi32, #tpu.memory_space<vmem>>, vector<1x8x8xi32>
    %922 = vector.shape_cast %921 : vector<1x8x8xi32> to vector<8x8xi32>
    %923 = vector.shape_cast %909 : vector<8x8xi32> to vector<1x8x8xi32>
    tpu.vector_store %arg14[%920, %c0_352, %c0_353], %923 {strides = array<i32>} : memref<8x8x8xi32, #tpu.memory_space<vmem>>, vector<1x8x8xi32>,
    %c4_i32_354 = arith.constant 4 : i32
    %c8_i32_355 = arith.constant 8 : i32
    %924 = arith.muli %c4_i32_354, %c8_i32_355 : i32
    %925 = tpu.assume_multiple %924, 8 : i32
    %926 = arith.index_cast %925 : i32 to index
    %c0_356 = arith.constant 0 : index
    %927 = vector.load %arg22[%926, %c0_356] : memref<64x8xf32, #tpu.memory_space<vmem>>, vector<8x8xf32>
    %c0_357 = arith.constant 0 : index
    %c0_358 = arith.constant 0 : index
    %928 = vector.load %arg23[%c0_357, %c0_358] : memref<8x8xf32, #tpu.memory_space<vmem>>, vector<8x8xf32>
    %929 = vector.extract_strided_slice %928 {offsets = [0, 0], sizes = [8, 1], strides = [1, 1]} : vector<8x8xf32> to vector<8x1xf32>
    %930 = vector.broadcast %929 : vector<8x1xf32> to vector<8x8xf32>
    %931 = vector.broadcast %670 : vector<1x8xf32> to vector<8x8xf32>
    %932 = arith.addf %930, %931 : vector<8x8xf32>
    %c0_i32_359 = arith.constant 0 : i32
    %933 = vector.broadcast %c0_i32_359 : i32 to vector<8x8xi32>
    %934 = vector.extract_strided_slice %928 {offsets = [0, 1], sizes = [8, 1], strides = [1, 1]} : vector<8x8xf32> to vector<8x1xf32>
    %935 = vector.broadcast %934 : vector<8x1xf32> to vector<8x8xf32>
    %936 = vector.broadcast %671 : vector<1x8xf32> to vector<8x8xf32>
    %937 = arith.addf %935, %936 : vector<8x8xf32>
    %938 = arith.cmpf ogt, %937, %932 : vector<8x8xf32>
    %c1_i32_360 = arith.constant 1 : i32
    %939 = vector.broadcast %c1_i32_360 : i32 to vector<8x8xi32>
    %940 = arith.select %938, %939, %933 : vector<8x8xi1>, vector<8x8xi32>
    %941 = arith.maximumf %932, %937 : vector<8x8xf32>
    %942 = vector.extract_strided_slice %928 {offsets = [0, 2], sizes = [8, 1], strides = [1, 1]} : vector<8x8xf32> to vector<8x1xf32>
    %943 = vector.broadcast %942 : vector<8x1xf32> to vector<8x8xf32>
    %944 = vector.broadcast %672 : vector<1x8xf32> to vector<8x8xf32>
    %945 = arith.addf %943, %944 : vector<8x8xf32>
    %946 = arith.cmpf ogt, %945, %941 : vector<8x8xf32>
    %c2_i32_361 = arith.constant 2 : i32
    %947 = vector.broadcast %c2_i32_361 : i32 to vector<8x8xi32>
    %948 = arith.select %946, %947, %940 : vector<8x8xi1>, vector<8x8xi32>
    %949 = arith.maximumf %941, %945 : vector<8x8xf32>
    %950 = vector.extract_strided_slice %928 {offsets = [0, 3], sizes = [8, 1], strides = [1, 1]} : vector<8x8xf32> to vector<8x1xf32>
    %951 = vector.broadcast %950 : vector<8x1xf32> to vector<8x8xf32>
    %952 = vector.broadcast %673 : vector<1x8xf32> to vector<8x8xf32>
    %953 = arith.addf %951, %952 : vector<8x8xf32>
    %954 = arith.cmpf ogt, %953, %949 : vector<8x8xf32>
    %c3_i32_362 = arith.constant 3 : i32
    %955 = vector.broadcast %c3_i32_362 : i32 to vector<8x8xi32>
    %956 = arith.select %954, %955, %948 : vector<8x8xi1>, vector<8x8xi32>
    %957 = arith.maximumf %949, %953 : vector<8x8xf32>
    %958 = vector.extract_strided_slice %928 {offsets = [0, 4], sizes = [8, 1], strides = [1, 1]} : vector<8x8xf32> to vector<8x1xf32>
    %959 = vector.broadcast %958 : vector<8x1xf32> to vector<8x8xf32>
    %960 = vector.broadcast %674 : vector<1x8xf32> to vector<8x8xf32>
    %961 = arith.addf %959, %960 : vector<8x8xf32>
    %962 = arith.cmpf ogt, %961, %957 : vector<8x8xf32>
    %c4_i32_363 = arith.constant 4 : i32
    %963 = vector.broadcast %c4_i32_363 : i32 to vector<8x8xi32>
    %964 = arith.select %962, %963, %956 : vector<8x8xi1>, vector<8x8xi32>
    %965 = arith.maximumf %957, %961 : vector<8x8xf32>
    %966 = vector.extract_strided_slice %928 {offsets = [0, 5], sizes = [8, 1], strides = [1, 1]} : vector<8x8xf32> to vector<8x1xf32>
    %967 = vector.broadcast %966 : vector<8x1xf32> to vector<8x8xf32>
    %968 = vector.broadcast %675 : vector<1x8xf32> to vector<8x8xf32>
    %969 = arith.addf %967, %968 : vector<8x8xf32>
    %970 = arith.cmpf ogt, %969, %965 : vector<8x8xf32>
    %c5_i32_364 = arith.constant 5 : i32
    %971 = vector.broadcast %c5_i32_364 : i32 to vector<8x8xi32>
    %972 = arith.select %970, %971, %964 : vector<8x8xi1>, vector<8x8xi32>
    %973 = arith.maximumf %965, %969 : vector<8x8xf32>
    %974 = vector.extract_strided_slice %928 {offsets = [0, 6], sizes = [8, 1], strides = [1, 1]} : vector<8x8xf32> to vector<8x1xf32>
    %975 = vector.broadcast %974 : vector<8x1xf32> to vector<8x8xf32>
    %976 = vector.broadcast %676 : vector<1x8xf32> to vector<8x8xf32>
    %977 = arith.addf %975, %976 : vector<8x8xf32>
    %978 = arith.cmpf ogt, %977, %973 : vector<8x8xf32>
    %c6_i32_365 = arith.constant 6 : i32
    %979 = vector.broadcast %c6_i32_365 : i32 to vector<8x8xi32>
    %980 = arith.select %978, %979, %972 : vector<8x8xi1>, vector<8x8xi32>
    %981 = arith.maximumf %973, %977 : vector<8x8xf32>
    %982 = vector.extract_strided_slice %928 {offsets = [0, 7], sizes = [8, 1], strides = [1, 1]} : vector<8x8xf32> to vector<8x1xf32>
    %983 = vector.broadcast %982 : vector<8x1xf32> to vector<8x8xf32>
    %984 = vector.broadcast %677 : vector<1x8xf32> to vector<8x8xf32>
    %985 = arith.addf %983, %984 : vector<8x8xf32>
    %986 = arith.cmpf ogt, %985, %981 : vector<8x8xf32>
    %c7_i32_366 = arith.constant 7 : i32
    %987 = vector.broadcast %c7_i32_366 : i32 to vector<8x8xi32>
    %988 = arith.select %986, %987, %980 : vector<8x8xi1>, vector<8x8xi32>
    %989 = arith.maximumf %981, %985 : vector<8x8xf32>
    %990 = arith.index_cast %c4_i32_354 : i32 to index
    %c0_367 = arith.constant 0 : index
    %c0_368 = arith.constant 0 : index
    %991 = vector.load %arg2[%990, %c0_367, %c0_368] : memref<8x8x1xf32, #tpu.memory_space<vmem>>, vector<1x8x1xf32>
    %992 = vector.shape_cast %991 : vector<1x8x1xf32> to vector<8x1xf32>
    %993 = arith.addf %989, %927 : vector<8x8xf32>
    %994 = arith.subf %993, %928 : vector<8x8xf32>
    %995 = vector.broadcast %992 : vector<8x1xf32> to vector<8x8xf32>
    %996 = arith.mulf %995, %994 : vector<8x8xf32>
    %997 = arith.addf %928, %996 : vector<8x8xf32>
    %c0_369 = arith.constant 0 : index
    %c0_370 = arith.constant 0 : index
    %998 = vector.load %arg23[%c0_369, %c0_370] : memref<8x8xf32, #tpu.memory_space<vmem>>, vector<8x8xf32>
    tpu.vector_store %arg23[%c0_369, %c0_370], %997 {strides = array<i32>} : memref<8x8xf32, #tpu.memory_space<vmem>>, vector<8x8xf32>,
    %999 = arith.index_cast %c4_i32_354 : i32 to index
    %c0_371 = arith.constant 0 : index
    %c0_372 = arith.constant 0 : index
    %1000 = vector.load %arg14[%999, %c0_371, %c0_372] : memref<8x8x8xi32, #tpu.memory_space<vmem>>, vector<1x8x8xi32>
    %1001 = vector.shape_cast %1000 : vector<1x8x8xi32> to vector<8x8xi32>
    %1002 = vector.shape_cast %988 : vector<8x8xi32> to vector<1x8x8xi32>
    tpu.vector_store %arg14[%999, %c0_371, %c0_372], %1002 {strides = array<i32>} : memref<8x8x8xi32, #tpu.memory_space<vmem>>, vector<1x8x8xi32>,
    %c5_i32_373 = arith.constant 5 : i32
    %c8_i32_374 = arith.constant 8 : i32
    %1003 = arith.muli %c5_i32_373, %c8_i32_374 : i32
    %1004 = tpu.assume_multiple %1003, 8 : i32
    %1005 = arith.index_cast %1004 : i32 to index
    %c0_375 = arith.constant 0 : index
    %1006 = vector.load %arg22[%1005, %c0_375] : memref<64x8xf32, #tpu.memory_space<vmem>>, vector<8x8xf32>
    %c0_376 = arith.constant 0 : index
    %c0_377 = arith.constant 0 : index
    %1007 = vector.load %arg23[%c0_376, %c0_377] : memref<8x8xf32, #tpu.memory_space<vmem>>, vector<8x8xf32>
    %1008 = vector.extract_strided_slice %1007 {offsets = [0, 0], sizes = [8, 1], strides = [1, 1]} : vector<8x8xf32> to vector<8x1xf32>
    %1009 = vector.broadcast %1008 : vector<8x1xf32> to vector<8x8xf32>
    %1010 = vector.broadcast %670 : vector<1x8xf32> to vector<8x8xf32>
    %1011 = arith.addf %1009, %1010 : vector<8x8xf32>
    %c0_i32_378 = arith.constant 0 : i32
    %1012 = vector.broadcast %c0_i32_378 : i32 to vector<8x8xi32>
    %1013 = vector.extract_strided_slice %1007 {offsets = [0, 1], sizes = [8, 1], strides = [1, 1]} : vector<8x8xf32> to vector<8x1xf32>
    %1014 = vector.broadcast %1013 : vector<8x1xf32> to vector<8x8xf32>
    %1015 = vector.broadcast %671 : vector<1x8xf32> to vector<8x8xf32>
    %1016 = arith.addf %1014, %1015 : vector<8x8xf32>
    %1017 = arith.cmpf ogt, %1016, %1011 : vector<8x8xf32>
    %c1_i32_379 = arith.constant 1 : i32
    %1018 = vector.broadcast %c1_i32_379 : i32 to vector<8x8xi32>
    %1019 = arith.select %1017, %1018, %1012 : vector<8x8xi1>, vector<8x8xi32>
    %1020 = arith.maximumf %1011, %1016 : vector<8x8xf32>
    %1021 = vector.extract_strided_slice %1007 {offsets = [0, 2], sizes = [8, 1], strides = [1, 1]} : vector<8x8xf32> to vector<8x1xf32>
    %1022 = vector.broadcast %1021 : vector<8x1xf32> to vector<8x8xf32>
    %1023 = vector.broadcast %672 : vector<1x8xf32> to vector<8x8xf32>
    %1024 = arith.addf %1022, %1023 : vector<8x8xf32>
    %1025 = arith.cmpf ogt, %1024, %1020 : vector<8x8xf32>
    %c2_i32_380 = arith.constant 2 : i32
    %1026 = vector.broadcast %c2_i32_380 : i32 to vector<8x8xi32>
    %1027 = arith.select %1025, %1026, %1019 : vector<8x8xi1>, vector<8x8xi32>
    %1028 = arith.maximumf %1020, %1024 : vector<8x8xf32>
    %1029 = vector.extract_strided_slice %1007 {offsets = [0, 3], sizes = [8, 1], strides = [1, 1]} : vector<8x8xf32> to vector<8x1xf32>
    %1030 = vector.broadcast %1029 : vector<8x1xf32> to vector<8x8xf32>
    %1031 = vector.broadcast %673 : vector<1x8xf32> to vector<8x8xf32>
    %1032 = arith.addf %1030, %1031 : vector<8x8xf32>
    %1033 = arith.cmpf ogt, %1032, %1028 : vector<8x8xf32>
    %c3_i32_381 = arith.constant 3 : i32
    %1034 = vector.broadcast %c3_i32_381 : i32 to vector<8x8xi32>
    %1035 = arith.select %1033, %1034, %1027 : vector<8x8xi1>, vector<8x8xi32>
    %1036 = arith.maximumf %1028, %1032 : vector<8x8xf32>
    %1037 = vector.extract_strided_slice %1007 {offsets = [0, 4], sizes = [8, 1], strides = [1, 1]} : vector<8x8xf32> to vector<8x1xf32>
    %1038 = vector.broadcast %1037 : vector<8x1xf32> to vector<8x8xf32>
    %1039 = vector.broadcast %674 : vector<1x8xf32> to vector<8x8xf32>
    %1040 = arith.addf %1038, %1039 : vector<8x8xf32>
    %1041 = arith.cmpf ogt, %1040, %1036 : vector<8x8xf32>
    %c4_i32_382 = arith.constant 4 : i32
    %1042 = vector.broadcast %c4_i32_382 : i32 to vector<8x8xi32>
    %1043 = arith.select %1041, %1042, %1035 : vector<8x8xi1>, vector<8x8xi32>
    %1044 = arith.maximumf %1036, %1040 : vector<8x8xf32>
    %1045 = vector.extract_strided_slice %1007 {offsets = [0, 5], sizes = [8, 1], strides = [1, 1]} : vector<8x8xf32> to vector<8x1xf32>
    %1046 = vector.broadcast %1045 : vector<8x1xf32> to vector<8x8xf32>
    %1047 = vector.broadcast %675 : vector<1x8xf32> to vector<8x8xf32>
    %1048 = arith.addf %1046, %1047 : vector<8x8xf32>
    %1049 = arith.cmpf ogt, %1048, %1044 : vector<8x8xf32>
    %c5_i32_383 = arith.constant 5 : i32
    %1050 = vector.broadcast %c5_i32_383 : i32 to vector<8x8xi32>
    %1051 = arith.select %1049, %1050, %1043 : vector<8x8xi1>, vector<8x8xi32>
    %1052 = arith.maximumf %1044, %1048 : vector<8x8xf32>
    %1053 = vector.extract_strided_slice %1007 {offsets = [0, 6], sizes = [8, 1], strides = [1, 1]} : vector<8x8xf32> to vector<8x1xf32>
    %1054 = vector.broadcast %1053 : vector<8x1xf32> to vector<8x8xf32>
    %1055 = vector.broadcast %676 : vector<1x8xf32> to vector<8x8xf32>
    %1056 = arith.addf %1054, %1055 : vector<8x8xf32>
    %1057 = arith.cmpf ogt, %1056, %1052 : vector<8x8xf32>
    %c6_i32_384 = arith.constant 6 : i32
    %1058 = vector.broadcast %c6_i32_384 : i32 to vector<8x8xi32>
    %1059 = arith.select %1057, %1058, %1051 : vector<8x8xi1>, vector<8x8xi32>
    %1060 = arith.maximumf %1052, %1056 : vector<8x8xf32>
    %1061 = vector.extract_strided_slice %1007 {offsets = [0, 7], sizes = [8, 1], strides = [1, 1]} : vector<8x8xf32> to vector<8x1xf32>
    %1062 = vector.broadcast %1061 : vector<8x1xf32> to vector<8x8xf32>
    %1063 = vector.broadcast %677 : vector<1x8xf32> to vector<8x8xf32>
    %1064 = arith.addf %1062, %1063 : vector<8x8xf32>
    %1065 = arith.cmpf ogt, %1064, %1060 : vector<8x8xf32>
    %c7_i32_385 = arith.constant 7 : i32
    %1066 = vector.broadcast %c7_i32_385 : i32 to vector<8x8xi32>
    %1067 = arith.select %1065, %1066, %1059 : vector<8x8xi1>, vector<8x8xi32>
    %1068 = arith.maximumf %1060, %1064 : vector<8x8xf32>
    %1069 = arith.index_cast %c5_i32_373 : i32 to index
    %c0_386 = arith.constant 0 : index
    %c0_387 = arith.constant 0 : index
    %1070 = vector.load %arg2[%1069, %c0_386, %c0_387] : memref<8x8x1xf32, #tpu.memory_space<vmem>>, vector<1x8x1xf32>
    %1071 = vector.shape_cast %1070 : vector<1x8x1xf32> to vector<8x1xf32>
    %1072 = arith.addf %1068, %1006 : vector<8x8xf32>
    %1073 = arith.subf %1072, %1007 : vector<8x8xf32>
    %1074 = vector.broadcast %1071 : vector<8x1xf32> to vector<8x8xf32>
    %1075 = arith.mulf %1074, %1073 : vector<8x8xf32>
    %1076 = arith.addf %1007, %1075 : vector<8x8xf32>
    %c0_388 = arith.constant 0 : index
    %c0_389 = arith.constant 0 : index
    %1077 = vector.load %arg23[%c0_388, %c0_389] : memref<8x8xf32, #tpu.memory_space<vmem>>, vector<8x8xf32>
    tpu.vector_store %arg23[%c0_388, %c0_389], %1076 {strides = array<i32>} : memref<8x8xf32, #tpu.memory_space<vmem>>, vector<8x8xf32>,
    %1078 = arith.index_cast %c5_i32_373 : i32 to index
    %c0_390 = arith.constant 0 : index
    %c0_391 = arith.constant 0 : index
    %1079 = vector.load %arg14[%1078, %c0_390, %c0_391] : memref<8x8x8xi32, #tpu.memory_space<vmem>>, vector<1x8x8xi32>
    %1080 = vector.shape_cast %1079 : vector<1x8x8xi32> to vector<8x8xi32>
    %1081 = vector.shape_cast %1067 : vector<8x8xi32> to vector<1x8x8xi32>
    tpu.vector_store %arg14[%1078, %c0_390, %c0_391], %1081 {strides = array<i32>} : memref<8x8x8xi32, #tpu.memory_space<vmem>>, vector<1x8x8xi32>,
    %c6_i32_392 = arith.constant 6 : i32
    %c8_i32_393 = arith.constant 8 : i32
    %1082 = arith.muli %c6_i32_392, %c8_i32_393 : i32
    %1083 = tpu.assume_multiple %1082, 8 : i32
    %1084 = arith.index_cast %1083 : i32 to index
    %c0_394 = arith.constant 0 : index
    %1085 = vector.load %arg22[%1084, %c0_394] : memref<64x8xf32, #tpu.memory_space<vmem>>, vector<8x8xf32>
    %c0_395 = arith.constant 0 : index
    %c0_396 = arith.constant 0 : index
    %1086 = vector.load %arg23[%c0_395, %c0_396] : memref<8x8xf32, #tpu.memory_space<vmem>>, vector<8x8xf32>
    %1087 = vector.extract_strided_slice %1086 {offsets = [0, 0], sizes = [8, 1], strides = [1, 1]} : vector<8x8xf32> to vector<8x1xf32>
    %1088 = vector.broadcast %1087 : vector<8x1xf32> to vector<8x8xf32>
    %1089 = vector.broadcast %670 : vector<1x8xf32> to vector<8x8xf32>
    %1090 = arith.addf %1088, %1089 : vector<8x8xf32>
    %c0_i32_397 = arith.constant 0 : i32
    %1091 = vector.broadcast %c0_i32_397 : i32 to vector<8x8xi32>
    %1092 = vector.extract_strided_slice %1086 {offsets = [0, 1], sizes = [8, 1], strides = [1, 1]} : vector<8x8xf32> to vector<8x1xf32>
    %1093 = vector.broadcast %1092 : vector<8x1xf32> to vector<8x8xf32>
    %1094 = vector.broadcast %671 : vector<1x8xf32> to vector<8x8xf32>
    %1095 = arith.addf %1093, %1094 : vector<8x8xf32>
    %1096 = arith.cmpf ogt, %1095, %1090 : vector<8x8xf32>
    %c1_i32_398 = arith.constant 1 : i32
    %1097 = vector.broadcast %c1_i32_398 : i32 to vector<8x8xi32>
    %1098 = arith.select %1096, %1097, %1091 : vector<8x8xi1>, vector<8x8xi32>
    %1099 = arith.maximumf %1090, %1095 : vector<8x8xf32>
    %1100 = vector.extract_strided_slice %1086 {offsets = [0, 2], sizes = [8, 1], strides = [1, 1]} : vector<8x8xf32> to vector<8x1xf32>
    %1101 = vector.broadcast %1100 : vector<8x1xf32> to vector<8x8xf32>
    %1102 = vector.broadcast %672 : vector<1x8xf32> to vector<8x8xf32>
    %1103 = arith.addf %1101, %1102 : vector<8x8xf32>
    %1104 = arith.cmpf ogt, %1103, %1099 : vector<8x8xf32>
    %c2_i32_399 = arith.constant 2 : i32
    %1105 = vector.broadcast %c2_i32_399 : i32 to vector<8x8xi32>
    %1106 = arith.select %1104, %1105, %1098 : vector<8x8xi1>, vector<8x8xi32>
    %1107 = arith.maximumf %1099, %1103 : vector<8x8xf32>
    %1108 = vector.extract_strided_slice %1086 {offsets = [0, 3], sizes = [8, 1], strides = [1, 1]} : vector<8x8xf32> to vector<8x1xf32>
    %1109 = vector.broadcast %1108 : vector<8x1xf32> to vector<8x8xf32>
    %1110 = vector.broadcast %673 : vector<1x8xf32> to vector<8x8xf32>
    %1111 = arith.addf %1109, %1110 : vector<8x8xf32>
    %1112 = arith.cmpf ogt, %1111, %1107 : vector<8x8xf32>
    %c3_i32_400 = arith.constant 3 : i32
    %1113 = vector.broadcast %c3_i32_400 : i32 to vector<8x8xi32>
    %1114 = arith.select %1112, %1113, %1106 : vector<8x8xi1>, vector<8x8xi32>
    %1115 = arith.maximumf %1107, %1111 : vector<8x8xf32>
    %1116 = vector.extract_strided_slice %1086 {offsets = [0, 4], sizes = [8, 1], strides = [1, 1]} : vector<8x8xf32> to vector<8x1xf32>
    %1117 = vector.broadcast %1116 : vector<8x1xf32> to vector<8x8xf32>
    %1118 = vector.broadcast %674 : vector<1x8xf32> to vector<8x8xf32>
    %1119 = arith.addf %1117, %1118 : vector<8x8xf32>
    %1120 = arith.cmpf ogt, %1119, %1115 : vector<8x8xf32>
    %c4_i32_401 = arith.constant 4 : i32
    %1121 = vector.broadcast %c4_i32_401 : i32 to vector<8x8xi32>
    %1122 = arith.select %1120, %1121, %1114 : vector<8x8xi1>, vector<8x8xi32>
    %1123 = arith.maximumf %1115, %1119 : vector<8x8xf32>
    %1124 = vector.extract_strided_slice %1086 {offsets = [0, 5], sizes = [8, 1], strides = [1, 1]} : vector<8x8xf32> to vector<8x1xf32>
    %1125 = vector.broadcast %1124 : vector<8x1xf32> to vector<8x8xf32>
    %1126 = vector.broadcast %675 : vector<1x8xf32> to vector<8x8xf32>
    %1127 = arith.addf %1125, %1126 : vector<8x8xf32>
    %1128 = arith.cmpf ogt, %1127, %1123 : vector<8x8xf32>
    %c5_i32_402 = arith.constant 5 : i32
    %1129 = vector.broadcast %c5_i32_402 : i32 to vector<8x8xi32>
    %1130 = arith.select %1128, %1129, %1122 : vector<8x8xi1>, vector<8x8xi32>
    %1131 = arith.maximumf %1123, %1127 : vector<8x8xf32>
    %1132 = vector.extract_strided_slice %1086 {offsets = [0, 6], sizes = [8, 1], strides = [1, 1]} : vector<8x8xf32> to vector<8x1xf32>
    %1133 = vector.broadcast %1132 : vector<8x1xf32> to vector<8x8xf32>
    %1134 = vector.broadcast %676 : vector<1x8xf32> to vector<8x8xf32>
    %1135 = arith.addf %1133, %1134 : vector<8x8xf32>
    %1136 = arith.cmpf ogt, %1135, %1131 : vector<8x8xf32>
    %c6_i32_403 = arith.constant 6 : i32
    %1137 = vector.broadcast %c6_i32_403 : i32 to vector<8x8xi32>
    %1138 = arith.select %1136, %1137, %1130 : vector<8x8xi1>, vector<8x8xi32>
    %1139 = arith.maximumf %1131, %1135 : vector<8x8xf32>
    %1140 = vector.extract_strided_slice %1086 {offsets = [0, 7], sizes = [8, 1], strides = [1, 1]} : vector<8x8xf32> to vector<8x1xf32>
    %1141 = vector.broadcast %1140 : vector<8x1xf32> to vector<8x8xf32>
    %1142 = vector.broadcast %677 : vector<1x8xf32> to vector<8x8xf32>
    %1143 = arith.addf %1141, %1142 : vector<8x8xf32>
    %1144 = arith.cmpf ogt, %1143, %1139 : vector<8x8xf32>
    %c7_i32_404 = arith.constant 7 : i32
    %1145 = vector.broadcast %c7_i32_404 : i32 to vector<8x8xi32>
    %1146 = arith.select %1144, %1145, %1138 : vector<8x8xi1>, vector<8x8xi32>
    %1147 = arith.maximumf %1139, %1143 : vector<8x8xf32>
    %1148 = arith.index_cast %c6_i32_392 : i32 to index
    %c0_405 = arith.constant 0 : index
    %c0_406 = arith.constant 0 : index
    %1149 = vector.load %arg2[%1148, %c0_405, %c0_406] : memref<8x8x1xf32, #tpu.memory_space<vmem>>, vector<1x8x1xf32>
    %1150 = vector.shape_cast %1149 : vector<1x8x1xf32> to vector<8x1xf32>
    %1151 = arith.addf %1147, %1085 : vector<8x8xf32>
    %1152 = arith.subf %1151, %1086 : vector<8x8xf32>
    %1153 = vector.broadcast %1150 : vector<8x1xf32> to vector<8x8xf32>
    %1154 = arith.mulf %1153, %1152 : vector<8x8xf32>
    %1155 = arith.addf %1086, %1154 : vector<8x8xf32>
    %c0_407 = arith.constant 0 : index
    %c0_408 = arith.constant 0 : index
    %1156 = vector.load %arg23[%c0_407, %c0_408] : memref<8x8xf32, #tpu.memory_space<vmem>>, vector<8x8xf32>
    tpu.vector_store %arg23[%c0_407, %c0_408], %1155 {strides = array<i32>} : memref<8x8xf32, #tpu.memory_space<vmem>>, vector<8x8xf32>,
    %1157 = arith.index_cast %c6_i32_392 : i32 to index
    %c0_409 = arith.constant 0 : index
    %c0_410 = arith.constant 0 : index
    %1158 = vector.load %arg14[%1157, %c0_409, %c0_410] : memref<8x8x8xi32, #tpu.memory_space<vmem>>, vector<1x8x8xi32>
    %1159 = vector.shape_cast %1158 : vector<1x8x8xi32> to vector<8x8xi32>
    %1160 = vector.shape_cast %1146 : vector<8x8xi32> to vector<1x8x8xi32>
    tpu.vector_store %arg14[%1157, %c0_409, %c0_410], %1160 {strides = array<i32>} : memref<8x8x8xi32, #tpu.memory_space<vmem>>, vector<1x8x8xi32>,
    %c7_i32_411 = arith.constant 7 : i32
    %c8_i32_412 = arith.constant 8 : i32
    %1161 = arith.muli %c7_i32_411, %c8_i32_412 : i32
    %1162 = tpu.assume_multiple %1161, 8 : i32
    %1163 = arith.index_cast %1162 : i32 to index
    %c0_413 = arith.constant 0 : index
    %1164 = vector.load %arg22[%1163, %c0_413] : memref<64x8xf32, #tpu.memory_space<vmem>>, vector<8x8xf32>
    %c0_414 = arith.constant 0 : index
    %c0_415 = arith.constant 0 : index
    %1165 = vector.load %arg23[%c0_414, %c0_415] : memref<8x8xf32, #tpu.memory_space<vmem>>, vector<8x8xf32>
    %1166 = vector.extract_strided_slice %1165 {offsets = [0, 0], sizes = [8, 1], strides = [1, 1]} : vector<8x8xf32> to vector<8x1xf32>
    %1167 = vector.broadcast %1166 : vector<8x1xf32> to vector<8x8xf32>
    %1168 = vector.broadcast %670 : vector<1x8xf32> to vector<8x8xf32>
    %1169 = arith.addf %1167, %1168 : vector<8x8xf32>
    %c0_i32_416 = arith.constant 0 : i32
    %1170 = vector.broadcast %c0_i32_416 : i32 to vector<8x8xi32>
    %1171 = vector.extract_strided_slice %1165 {offsets = [0, 1], sizes = [8, 1], strides = [1, 1]} : vector<8x8xf32> to vector<8x1xf32>
    %1172 = vector.broadcast %1171 : vector<8x1xf32> to vector<8x8xf32>
    %1173 = vector.broadcast %671 : vector<1x8xf32> to vector<8x8xf32>
    %1174 = arith.addf %1172, %1173 : vector<8x8xf32>
    %1175 = arith.cmpf ogt, %1174, %1169 : vector<8x8xf32>
    %c1_i32_417 = arith.constant 1 : i32
    %1176 = vector.broadcast %c1_i32_417 : i32 to vector<8x8xi32>
    %1177 = arith.select %1175, %1176, %1170 : vector<8x8xi1>, vector<8x8xi32>
    %1178 = arith.maximumf %1169, %1174 : vector<8x8xf32>
    %1179 = vector.extract_strided_slice %1165 {offsets = [0, 2], sizes = [8, 1], strides = [1, 1]} : vector<8x8xf32> to vector<8x1xf32>
    %1180 = vector.broadcast %1179 : vector<8x1xf32> to vector<8x8xf32>
    %1181 = vector.broadcast %672 : vector<1x8xf32> to vector<8x8xf32>
    %1182 = arith.addf %1180, %1181 : vector<8x8xf32>
    %1183 = arith.cmpf ogt, %1182, %1178 : vector<8x8xf32>
    %c2_i32_418 = arith.constant 2 : i32
    %1184 = vector.broadcast %c2_i32_418 : i32 to vector<8x8xi32>
    %1185 = arith.select %1183, %1184, %1177 : vector<8x8xi1>, vector<8x8xi32>
    %1186 = arith.maximumf %1178, %1182 : vector<8x8xf32>
    %1187 = vector.extract_strided_slice %1165 {offsets = [0, 3], sizes = [8, 1], strides = [1, 1]} : vector<8x8xf32> to vector<8x1xf32>
    %1188 = vector.broadcast %1187 : vector<8x1xf32> to vector<8x8xf32>
    %1189 = vector.broadcast %673 : vector<1x8xf32> to vector<8x8xf32>
    %1190 = arith.addf %1188, %1189 : vector<8x8xf32>
    %1191 = arith.cmpf ogt, %1190, %1186 : vector<8x8xf32>
    %c3_i32_419 = arith.constant 3 : i32
    %1192 = vector.broadcast %c3_i32_419 : i32 to vector<8x8xi32>
    %1193 = arith.select %1191, %1192, %1185 : vector<8x8xi1>, vector<8x8xi32>
    %1194 = arith.maximumf %1186, %1190 : vector<8x8xf32>
    %1195 = vector.extract_strided_slice %1165 {offsets = [0, 4], sizes = [8, 1], strides = [1, 1]} : vector<8x8xf32> to vector<8x1xf32>
    %1196 = vector.broadcast %1195 : vector<8x1xf32> to vector<8x8xf32>
    %1197 = vector.broadcast %674 : vector<1x8xf32> to vector<8x8xf32>
    %1198 = arith.addf %1196, %1197 : vector<8x8xf32>
    %1199 = arith.cmpf ogt, %1198, %1194 : vector<8x8xf32>
    %c4_i32_420 = arith.constant 4 : i32
    %1200 = vector.broadcast %c4_i32_420 : i32 to vector<8x8xi32>
    %1201 = arith.select %1199, %1200, %1193 : vector<8x8xi1>, vector<8x8xi32>
    %1202 = arith.maximumf %1194, %1198 : vector<8x8xf32>
    %1203 = vector.extract_strided_slice %1165 {offsets = [0, 5], sizes = [8, 1], strides = [1, 1]} : vector<8x8xf32> to vector<8x1xf32>
    %1204 = vector.broadcast %1203 : vector<8x1xf32> to vector<8x8xf32>
    %1205 = vector.broadcast %675 : vector<1x8xf32> to vector<8x8xf32>
    %1206 = arith.addf %1204, %1205 : vector<8x8xf32>
    %1207 = arith.cmpf ogt, %1206, %1202 : vector<8x8xf32>
    %c5_i32_421 = arith.constant 5 : i32
    %1208 = vector.broadcast %c5_i32_421 : i32 to vector<8x8xi32>
    %1209 = arith.select %1207, %1208, %1201 : vector<8x8xi1>, vector<8x8xi32>
    %1210 = arith.maximumf %1202, %1206 : vector<8x8xf32>
    %1211 = vector.extract_strided_slice %1165 {offsets = [0, 6], sizes = [8, 1], strides = [1, 1]} : vector<8x8xf32> to vector<8x1xf32>
    %1212 = vector.broadcast %1211 : vector<8x1xf32> to vector<8x8xf32>
    %1213 = vector.broadcast %676 : vector<1x8xf32> to vector<8x8xf32>
    %1214 = arith.addf %1212, %1213 : vector<8x8xf32>
    %1215 = arith.cmpf ogt, %1214, %1210 : vector<8x8xf32>
    %c6_i32_422 = arith.constant 6 : i32
    %1216 = vector.broadcast %c6_i32_422 : i32 to vector<8x8xi32>
    %1217 = arith.select %1215, %1216, %1209 : vector<8x8xi1>, vector<8x8xi32>
    %1218 = arith.maximumf %1210, %1214 : vector<8x8xf32>
    %1219 = vector.extract_strided_slice %1165 {offsets = [0, 7], sizes = [8, 1], strides = [1, 1]} : vector<8x8xf32> to vector<8x1xf32>
    %1220 = vector.broadcast %1219 : vector<8x1xf32> to vector<8x8xf32>
    %1221 = vector.broadcast %677 : vector<1x8xf32> to vector<8x8xf32>
    %1222 = arith.addf %1220, %1221 : vector<8x8xf32>
    %1223 = arith.cmpf ogt, %1222, %1218 : vector<8x8xf32>
    %c7_i32_423 = arith.constant 7 : i32
    %1224 = vector.broadcast %c7_i32_423 : i32 to vector<8x8xi32>
    %1225 = arith.select %1223, %1224, %1217 : vector<8x8xi1>, vector<8x8xi32>
    %1226 = arith.maximumf %1218, %1222 : vector<8x8xf32>
    %1227 = arith.index_cast %c7_i32_411 : i32 to index
    %c0_424 = arith.constant 0 : index
    %c0_425 = arith.constant 0 : index
    %1228 = vector.load %arg2[%1227, %c0_424, %c0_425] : memref<8x8x1xf32, #tpu.memory_space<vmem>>, vector<1x8x1xf32>
    %1229 = vector.shape_cast %1228 : vector<1x8x1xf32> to vector<8x1xf32>
    %1230 = arith.addf %1226, %1164 : vector<8x8xf32>
    %1231 = arith.subf %1230, %1165 : vector<8x8xf32>
    %1232 = vector.broadcast %1229 : vector<8x1xf32> to vector<8x8xf32>
    %1233 = arith.mulf %1232, %1231 : vector<8x8xf32>
    %1234 = arith.addf %1165, %1233 : vector<8x8xf32>
    %c0_426 = arith.constant 0 : index
    %c0_427 = arith.constant 0 : index
    %1235 = vector.load %arg23[%c0_426, %c0_427] : memref<8x8xf32, #tpu.memory_space<vmem>>, vector<8x8xf32>
    tpu.vector_store %arg23[%c0_426, %c0_427], %1234 {strides = array<i32>} : memref<8x8xf32, #tpu.memory_space<vmem>>, vector<8x8xf32>,
    %1236 = arith.index_cast %c7_i32_411 : i32 to index
    %c0_428 = arith.constant 0 : index
    %c0_429 = arith.constant 0 : index
    %1237 = vector.load %arg14[%1236, %c0_428, %c0_429] : memref<8x8x8xi32, #tpu.memory_space<vmem>>, vector<1x8x8xi32>
    %1238 = vector.shape_cast %1237 : vector<1x8x8xi32> to vector<8x8xi32>
    %1239 = vector.shape_cast %1225 : vector<8x8xi32> to vector<1x8x8xi32>
    tpu.vector_store %arg14[%1236, %c0_428, %c0_429], %1239 {strides = array<i32>} : memref<8x8x8xi32, #tpu.memory_space<vmem>>, vector<1x8x8xi32>,
    %c7_i32_430 = arith.constant 7 : i32
    %c0_431 = arith.constant 0 : index
    %c0_432 = arith.constant 0 : index
    %1240 = vector.load %arg23[%c0_431, %c0_432] : memref<8x8xf32, #tpu.memory_space<vmem>>, vector<8x8xf32>
    %c0_433 = arith.constant 0 : index
    %c0_434 = arith.constant 0 : index
    %1241 = vector.load %arg11[%c0_433, %c0_434] : memref<1x8xf32, #tpu.memory_space<vmem>>, vector<1x8xf32>
    %1242 = vector.broadcast %1241 : vector<1x8xf32> to vector<8x8xf32>
    %1243 = arith.addf %1240, %1242 : vector<8x8xf32>
    %1244 = vector.extract_strided_slice %1243 {offsets = [0, 0], sizes = [8, 1], strides = [1, 1]} : vector<8x8xf32> to vector<8x1xf32>
    %c0_i32_435 = arith.constant 0 : i32
    %1245 = vector.broadcast %c0_i32_435 : i32 to vector<8x1xi32>
    %1246 = vector.extract_strided_slice %1243 {offsets = [0, 1], sizes = [8, 1], strides = [1, 1]} : vector<8x8xf32> to vector<8x1xf32>
    %1247 = arith.cmpf ogt, %1246, %1244 : vector<8x1xf32>
    %c1_i32_436 = arith.constant 1 : i32
    %1248 = vector.broadcast %c1_i32_436 : i32 to vector<8x1xi32>
    %1249 = arith.select %1247, %1248, %1245 : vector<8x1xi1>, vector<8x1xi32>
    %1250 = arith.maximumf %1244, %1246 : vector<8x1xf32>
    %1251 = vector.extract_strided_slice %1243 {offsets = [0, 2], sizes = [8, 1], strides = [1, 1]} : vector<8x8xf32> to vector<8x1xf32>
    %1252 = arith.cmpf ogt, %1251, %1250 : vector<8x1xf32>
    %c2_i32_437 = arith.constant 2 : i32
    %1253 = vector.broadcast %c2_i32_437 : i32 to vector<8x1xi32>
    %1254 = arith.select %1252, %1253, %1249 : vector<8x1xi1>, vector<8x1xi32>
    %1255 = arith.maximumf %1250, %1251 : vector<8x1xf32>
    %1256 = vector.extract_strided_slice %1243 {offsets = [0, 3], sizes = [8, 1], strides = [1, 1]} : vector<8x8xf32> to vector<8x1xf32>
    %1257 = arith.cmpf ogt, %1256, %1255 : vector<8x1xf32>
    %c3_i32_438 = arith.constant 3 : i32
    %1258 = vector.broadcast %c3_i32_438 : i32 to vector<8x1xi32>
    %1259 = arith.select %1257, %1258, %1254 : vector<8x1xi1>, vector<8x1xi32>
    %1260 = arith.maximumf %1255, %1256 : vector<8x1xf32>
    %1261 = vector.extract_strided_slice %1243 {offsets = [0, 4], sizes = [8, 1], strides = [1, 1]} : vector<8x8xf32> to vector<8x1xf32>
    %1262 = arith.cmpf ogt, %1261, %1260 : vector<8x1xf32>
    %c4_i32_439 = arith.constant 4 : i32
    %1263 = vector.broadcast %c4_i32_439 : i32 to vector<8x1xi32>
    %1264 = arith.select %1262, %1263, %1259 : vector<8x1xi1>, vector<8x1xi32>
    %1265 = arith.maximumf %1260, %1261 : vector<8x1xf32>
    %1266 = vector.extract_strided_slice %1243 {offsets = [0, 5], sizes = [8, 1], strides = [1, 1]} : vector<8x8xf32> to vector<8x1xf32>
    %1267 = arith.cmpf ogt, %1266, %1265 : vector<8x1xf32>
    %c5_i32_440 = arith.constant 5 : i32
    %1268 = vector.broadcast %c5_i32_440 : i32 to vector<8x1xi32>
    %1269 = arith.select %1267, %1268, %1264 : vector<8x1xi1>, vector<8x1xi32>
    %1270 = arith.maximumf %1265, %1266 : vector<8x1xf32>
    %1271 = vector.extract_strided_slice %1243 {offsets = [0, 6], sizes = [8, 1], strides = [1, 1]} : vector<8x8xf32> to vector<8x1xf32>
    %1272 = arith.cmpf ogt, %1271, %1270 : vector<8x1xf32>
    %c6_i32_441 = arith.constant 6 : i32
    %1273 = vector.broadcast %c6_i32_441 : i32 to vector<8x1xi32>
    %1274 = arith.select %1272, %1273, %1269 : vector<8x1xi1>, vector<8x1xi32>
    %1275 = arith.maximumf %1270, %1271 : vector<8x1xf32>
    %1276 = vector.extract_strided_slice %1243 {offsets = [0, 7], sizes = [8, 1], strides = [1, 1]} : vector<8x8xf32> to vector<8x1xf32>
    %1277 = arith.cmpf ogt, %1276, %1275 : vector<8x1xf32>
    %c7_i32_442 = arith.constant 7 : i32
    %1278 = vector.broadcast %c7_i32_442 : i32 to vector<8x1xi32>
    %1279 = arith.select %1277, %1278, %1274 : vector<8x1xi1>, vector<8x1xi32>
    %1280 = arith.maximumf %1275, %1276 : vector<8x1xf32>
    %c0_443 = arith.constant 0 : index
    %c0_444 = arith.constant 0 : index
    %1281 = vector.load %arg12[%c0_443, %c0_444] : memref<8x1xf32, #tpu.memory_space<vmem>>, vector<8x1xf32>
    tpu.vector_store %arg12[%c0_443, %c0_444], %1280 {strides = array<i32>} : memref<8x1xf32, #tpu.memory_space<vmem>>, vector<8x1xf32>,
    %c0_445 = arith.constant 0 : index
    %c0_446 = arith.constant 0 : index
    %1282 = vector.load %arg13[%c0_445, %c0_446] : memref<8x1xi32, #tpu.memory_space<vmem>>, vector<8x1xi32>
    tpu.vector_store %arg13[%c0_445, %c0_446], %1279 {strides = array<i32>} : memref<8x1xi32, #tpu.memory_space<vmem>>, vector<8x1xi32>,
    return
  }
  func.func @transform_0(%arg0: i32) -> (i32, i32, i32) {
    %c0_i32 = arith.constant 0 : i32
    %c0_i32_0 = arith.constant 0 : i32
    %c0_i32_1 = arith.constant 0 : i32
    return %c0_i32, %arg0, %c0_i32_0 : i32, i32, i32
  }
  func.func @transform_1(%arg0: i32) -> (i32, i32, i32) {
    %c0_i32 = arith.constant 0 : i32
    %c0_i32_0 = arith.constant 0 : i32
    %c0_i32_1 = arith.constant 0 : i32
    return %c0_i32, %arg0, %c0_i32_0 : i32, i32, i32
  }
  func.func @transform_2(%arg0: i32) -> (i32, i32) {
    %c0_i32 = arith.constant 0 : i32
    %c0_i32_0 = arith.constant 0 : i32
    %c0_i32_1 = arith.constant 0 : i32
    return %c0_i32, %c0_i32_0 : i32, i32
  }
  func.func @transform_3(%arg0: i32) -> (i32, i32) {
    %c0_i32 = arith.constant 0 : i32
    %c0_i32_0 = arith.constant 0 : i32
    %c0_i32_1 = arith.constant 0 : i32
    return %c0_i32, %c0_i32_0 : i32, i32
  }
  func.func @transform_4(%arg0: i32) -> (i32, i32) {
    %c0_i32 = arith.constant 0 : i32
    %c0_i32_0 = arith.constant 0 : i32
    %c0_i32_1 = arith.constant 0 : i32
    return %c0_i32, %c0_i32_0 : i32, i32
  }
  func.func @transform_5(%arg0: i32) -> (i32, i32) {
    %c0_i32 = arith.constant 0 : i32
    %c0_i32_0 = arith.constant 0 : i32
    %c0_i32_1 = arith.constant 0 : i32
    return %c0_i32, %c0_i32_0 : i32, i32
  }
  func.func @transform_6(%arg0: i32) -> (i32, i32) {
    %c0_i32 = arith.constant 0 : i32
    %c0_i32_0 = arith.constant 0 : i32
    %c0_i32_1 = arith.constant 0 : i32
    return %c0_i32, %c0_i32_0 : i32, i32
  }
  func.func @transform_7(%arg0: i32) -> (i32, i32) {
    %c0_i32 = arith.constant 0 : i32
    %c0_i32_0 = arith.constant 0 : i32
    %c0_i32_1 = arith.constant 0 : i32
    return %c0_i32, %c0_i32_0 : i32, i32
  }
  func.func @transform_8(%arg0: i32) -> (i32, i32) {
    %c0_i32 = arith.constant 0 : i32
    %c0_i32_0 = arith.constant 0 : i32
    %c0_i32_1 = arith.constant 0 : i32
    return %c0_i32, %c0_i32_0 : i32, i32
  }
  func.func @transform_9(%arg0: i32) -> (i32, i32) {
    %c0_i32 = arith.constant 0 : i32
    %c0_i32_0 = arith.constant 0 : i32
    %c0_i32_1 = arith.constant 0 : i32
    return %c0_i32, %c0_i32_0 : i32, i32
  }
  func.func @transform_10(%arg0: i32) -> (i32, i32) {
    %c0_i32 = arith.constant 0 : i32
    %c0_i32_0 = arith.constant 0 : i32
    %c0_i32_1 = arith.constant 0 : i32
    return %c0_i32, %c0_i32_0 : i32, i32
  }
  func.func @transform_11(%arg0: i32) -> (i32, i32) {
    %c0_i32 = arith.constant 0 : i32
    %c0_i32_0 = arith.constant 0 : i32
    return %arg0, %c0_i32 : i32, i32
  }
  func.func @transform_12(%arg0: i32) -> (i32, i32) {
    %c0_i32 = arith.constant 0 : i32
    %c0_i32_0 = arith.constant 0 : i32
    return %arg0, %c0_i32 : i32, i32
  }
  func.func @transform_13(%arg0: i32) -> (i32, i32, i32) {
    %c0_i32 = arith.constant 0 : i32
    %c0_i32_0 = arith.constant 0 : i32
    %c0_i32_1 = arith.constant 0 : i32
    return %c0_i32, %arg0, %c0_i32_0 : i32, i32, i32
  }
}

</mosaic_0001>

<llo_original>
// kernel: custom-call.4
$region0: #{custom-call.4}
  %s0 = inlined_call_operand.vmem [shape: s32[8,8], index: 0, kind: output, shape index: {}]

// kernel: bilstm_crf_forward.1
$region0: #{bilstm_crf_forward.1}
  #allocation0 [shape = 'u32[]', space=smem, size = 0x4, offset = 0x4, fixed_abs, tag = 'smem constant byte address 0x4 - core index']
  #allocation1 [shape = 'u32[144,128]{1,0:T(1,128)}', space=vmem, size = 0x12000, scoped, tag = 'internal scratch']
  #allocation2 [shape = 'f32[64,256]{1,0:T(8,128)}', space=vmem, size = 0x10000, scoped, tag = 'scratch operand']
  #allocation3 [shape = 'f32[64,32]{1,0:T(8,128)}', space=vmem, size = 0x8000, scoped, tag = 'scratch operand']
  #allocation4 [shape = 'f32[64,32]{1,0:T(8,128)}', space=vmem, size = 0x8000, scoped, tag = 'scratch operand']
  #allocation5 [shape = 'f32[8,32]{1,0:T(8,128)}', space=vmem, size = 0x1000, scoped, tag = 'scratch operand']
  #allocation6 [shape = 'f32[8,32]{1,0:T(8,128)}', space=vmem, size = 0x1000, scoped, tag = 'scratch operand']
  #allocation7 [shape = 'f32[8,32]{1,0:T(8,128)}', space=vmem, size = 0x1000, scoped, tag = 'scratch operand']
  #allocation8 [shape = 'f32[8,32]{1,0:T(8,128)}', space=vmem, size = 0x1000, scoped, tag = 'scratch operand']
  #allocation9 [shape = 'f32[64,8]{1,0:T(8,128)}', space=vmem, size = 0x8000, scoped, tag = 'scratch operand']
  #allocation10 [shape = 'f32[8,8]{1,0:T(8,128)}', space=vmem, size = 0x1000, scoped, tag = 'scratch operand']
  %s0 = inlined_call_operand.vmem [shape: f32[8,8,32], index: 0, kind: input, shape index: {}]
  %s1 = inlined_call_operand.vmem [shape: f32[8,8,1], index: 1, kind: input, shape index: {}]
  %s2 = inlined_call_operand.vmem [shape: f32[32,256], index: 2, kind: input, shape index: {}]
  %s3 = inlined_call_operand.vmem [shape: f32[1,256], index: 3, kind: input, shape index: {}]
  %s4 = inlined_call_operand.vmem [shape: f32[32,128], index: 4, kind: input, shape index: {}]
  %s5 = inlined_call_operand.vmem [shape: f32[32,128], index: 5, kind: input, shape index: {}]
  %s6 = inlined_call_operand.vmem [shape: f32[64,8], index: 6, kind: input, shape index: {}]
  %s7 = inlined_call_operand.vmem [shape: f32[1,8], index: 7, kind: input, shape index: {}]
  %s8 = inlined_call_operand.vmem [shape: f32[8,8], index: 8, kind: input, shape index: {}]
  %s9 = inlined_call_operand.vmem [shape: f32[1,8], index: 9, kind: input, shape index: {}]
  %s10 = inlined_call_operand.vmem [shape: f32[1,8], index: 10, kind: input, shape index: {}]
  %s11 = inlined_call_operand.vmem [shape: f32[8,1], index: 11, kind: output, shape index: {0}]
  %s12 = inlined_call_operand.vmem [shape: s32[8,1], index: 12, kind: output, shape index: {1}]
  %s13 = inlined_call_operand.vmem [shape: s32[8,8,8], index: 13, kind: output, shape index: {2}]
  %14 = xla_tuple %s11, %s12, %s13
  %s15 = sld [smem:[#allocation0]]
  $region70: #{bilstm_crf_forward.1} parent=0
    _
  %s17 = ssub.s32 1, %s15
  %s18 = scalar_select 0, %s17, %s15
  // Predicated region
  $region2: #{bilstm_crf_forward.1} parent=0 // pred_check
    _
  $region3: #{bilstm_crf_forward.1} parent=0 // pred_check_branch
    %20 = sbr.rel (0) target = $region5
  $region4: #{bilstm_crf_forward.1} parent=0 // pred_region
    _
  $region5: #{bilstm_crf_forward.1} parent=0 // pred_fallthru
    _
  // Predicated region
  $region6: #{bilstm_crf_forward.1} parent=0 // pred_check
    _
  $region7: #{bilstm_crf_forward.1} parent=0 // pred_check_branch
    %22 = sbr.rel (0) target = $region9
  $region8: #{bilstm_crf_forward.1} parent=0 // pred_region
    _
  $region9: #{bilstm_crf_forward.1} parent=0 // pred_fallthru
    _
  // Predicated region
  $region10: #{bilstm_crf_forward.1} parent=0 // pred_check
    _
  $region11: #{bilstm_crf_forward.1} parent=0 // pred_check_branch
    %24 = sbr.rel (0) target = $region13
  $region12: #{bilstm_crf_forward.1} parent=0 // pred_region
    _
  $region13: #{bilstm_crf_forward.1} parent=0 // pred_fallthru
    _
  // Predicated region
  $region14: #{bilstm_crf_forward.1} parent=0 // pred_check
    _
  $region15: #{bilstm_crf_forward.1} parent=0 // pred_check_branch
    %26 = sbr.rel (0) target = $region17
  $region16: #{bilstm_crf_forward.1} parent=0 // pred_region
    _
  $region17: #{bilstm_crf_forward.1} parent=0 // pred_fallthru
    _
  // Predicated region
  $region18: #{bilstm_crf_forward.1} parent=0 // pred_check
    _
  $region19: #{bilstm_crf_forward.1} parent=0 // pred_check_branch
    %28 = sbr.rel (0) target = $region21
  $region20: #{bilstm_crf_forward.1} parent=0 // pred_region
    _
  $region21: #{bilstm_crf_forward.1} parent=0 // pred_fallthru
    _
  // Predicated region
  $region22: #{bilstm_crf_forward.1} parent=0 // pred_check
    _
  $region23: #{bilstm_crf_forward.1} parent=0 // pred_check_branch
    %30 = sbr.rel (0) target = $region25
  $region24: #{bilstm_crf_forward.1} parent=0 // pred_region
    _
  $region25: #{bilstm_crf_forward.1} parent=0 // pred_fallthru
    _
  // Predicated region
  $region26: #{bilstm_crf_forward.1} parent=0 // pred_check
    _
  $region27: #{bilstm_crf_forward.1} parent=0 // pred_check_branch
    %32 = sbr.rel (0) target = $region29
  $region28: #{bilstm_crf_forward.1} parent=0 // pred_region
    _
  $region29: #{bilstm_crf_forward.1} parent=0 // pred_fallthru
    _
  // Predicated region
  $region30: #{bilstm_crf_forward.1} parent=0 // pred_check
    _
  $region31: #{bilstm_crf_forward.1} parent=0 // pred_check_branch
    %34 = sbr.rel (0) target = $region33
  $region32: #{bilstm_crf_forward.1} parent=0 // pred_region
    _
  $region33: #{bilstm_crf_forward.1} parent=0 // pred_fallthru
    _
  // Predicated region
  $region34: #{bilstm_crf_forward.1} parent=0 // pred_check
    _
  $region35: #{bilstm_crf_forward.1} parent=0 // pred_check_branch
    %36 = sbr.rel (0) target = $region37
  $region36: #{bilstm_crf_forward.1} parent=0 // pred_region
    _
  $region37: #{bilstm_crf_forward.1} parent=0 // pred_fallthru
    _
  // Predicated region
  $region38: #{bilstm_crf_forward.1} parent=0 // pred_check
    _
  $region39: #{bilstm_crf_forward.1} parent=0 // pred_check_branch
    %38 = sbr.rel (0) target = $region41
  $region40: #{bilstm_crf_forward.1} parent=0 // pred_region
    _
  $region41: #{bilstm_crf_forward.1} parent=0 // pred_fallthru
    _
  // Predicated region
  $region42: #{bilstm_crf_forward.1} parent=0 // pred_check
    _
  $region43: #{bilstm_crf_forward.1} parent=0 // pred_check_branch
    %40 = sbr.rel (0) target = $region45
  $region44: #{bilstm_crf_forward.1} parent=0 // pred_region
    _
  $region45: #{bilstm_crf_forward.1} parent=0 // pred_fallthru
    _
  %v42 = vld [vmem:[%s0] sm:$0xff]
  %v43 = vld [vmem:[%s0 + $0x8] sm:$0xff]
  %v44 = vld [vmem:[%s0 + $0x10] sm:$0xff]
  %v45 = vld [vmem:[%s0 + $0x18] sm:$0xff]
  %v46 = vld [vmem:[%s0 + $0x20] sm:$0xff]
  %v47 = vld [vmem:[%s0 + $0x28] sm:$0xff]
  %v48 = vld [vmem:[%s0 + $0x30] sm:$0xff]
  %v49 = vld [vmem:[%s0 + $0x38] sm:$0xff]
  %v50 = vpack.c.bf16 %v43, %v42
  %v51 = vpack.c.bf16 %v45, %v44
  %v52 = vpack.c.bf16 %v47, %v46
  %v53 = vpack.c.bf16 %v49, %v48
  %v54 = vld [vmem:[%s2] sm:$0xff]
  %v55 = vld [vmem:[%s2 + $0x8] sm:$0xff]
  %v56 = vld [vmem:[%s2 + $0x10] sm:$0xff]
  %v57 = vld [vmem:[%s2 + $0x18] sm:$0xff]
  %v58 = vld [vmem:[%s2 + $0x20] sm:$0xff]
  %v59 = vld [vmem:[%s2 + $0x28] sm:$0xff]
  %v60 = vld [vmem:[%s2 + $0x30] sm:$0xff]
  %v61 = vld [vmem:[%s2 + $0x38] sm:$0xff]
  %v62 = vpack.c.bf16 %v56, %v54
  %v63 = vpack.c.bf16 %v57, %v55
  %v64 = vpack.c.bf16 %v60, %v58
  %v65 = vpack.c.bf16 %v61, %v59
  %v66 = vld [vmem:[%s3] sm:$0x3]
  %v68 = vlaneseq
  %v69 = vshrl.u32 %v68, 7
  %v70 = vsub.s32 0, %v69
  %v71 = vrot.slane %v66, %v70
  %v72 = vlaneseq
  %v73 = vshrl.u32 %v72, 7
  %v74 = vsub.s32 1, %v73
  %v75 = vrot.slane %v66, %v74
  %vm78 = vcmask 261120
  %v80 = vsel %vm78, %v50, 0
  %v83 = vsel %vm78, %v51, 0
  %v86 = vsel %vm78, %v52, 0
  %v89 = vsel %vm78, %v53, 0
  %91 = vmatprep.subr.bf16.mxu0 %v63
  %92 = vmatpush1.bf16.msra.mxu0 %v62
  %93 = vmatprep.subr.bf16.mxu0 %v65
  %94 = vmatpush1.bf16.msra.mxu0 %v64
  %95 = vmatprep.subr.bf16.mxu0 0
  %96 = vmatpush1.bf16.msra.mxu0 0
  %97 = vmatprep.subr.bf16.mxu0 0
  %98 = vmatpush1.bf16.msra.mxu0 0
  %99 = vmatprep.subr.bf16.mxu0 0
  %100 = vmatpush1.bf16.msra.mxu0 0
  %101 = vmatprep.subr.bf16.mxu0 0
  %102 = vmatpush1.bf16.msra.mxu0 0
  %103 = vmatprep.subr.bf16.mxu0 0
  %104 = vmatpush1.bf16.msra.mxu0 0
  %105 = vmatprep.subr.bf16.mxu0 0
  %106 = vmatpush1.bf16.msra.mxu0 0
  %107 = vmatprep.subr.bf16.mxu0 0
  %108 = vmatpush1.bf16.msra.mxu0 0
  %109 = vmatprep.subr.bf16.mxu0 0
  %110 = vmatpush1.bf16.msra.mxu0 0
  %111 = vmatprep.subr.bf16.mxu0 0
  %112 = vmatpush1.bf16.msra.mxu0 0
  %113 = vmatprep.subr.bf16.mxu0 0
  %114 = vmatpush1.bf16.msra.mxu0 0
  %115 = vmatprep.subr.bf16.mxu0 0
  %116 = vmatpush1.bf16.msra.mxu0 0
  %117 = vmatprep.subr.bf16.mxu0 0
  %118 = vmatpush1.bf16.msra.mxu0 0
  %119 = vmatprep.subr.bf16.mxu0 0
  %120 = vmatpush1.bf16.msra.mxu0 0
  %121 = vmatprep.subr.bf16.mxu0 0
  %122 = vmatpush1.bf16.msra.mxu0 0
  %123 = vmatprep.mubr.bf16.mxu0 0
  %124 = vmatmul.mubr.bf16.gmra.mrb[0].mxu0 %v80
  %v125 = vpop.f32.mrb[0].mxu0
  %v126 = vadd.f32 %v71, %v125
  %v127 = vpop.f32.mrb[0].mxu0
  %v128 = vadd.f32 %v75, %v127
  %v129 = vpop.f32.mrb[0].mxu0
  %v130 = vadd.f32 %v71, %v129
  %v131 = vpop.f32.mrb[0].mxu0
  %v132 = vadd.f32 %v75, %v131
  %133 = vmatprep.mubr.bf16.mxu0 0
  %134 = vmatmul.mubr.bf16.gmra.mrb[0].mxu0 %v83
  %v135 = vpop.f32.mrb[0].mxu0
  %v136 = vadd.f32 %v71, %v135
  %v137 = vpop.f32.mrb[0].mxu0
  %v138 = vadd.f32 %v75, %v137
  %v139 = vpop.f32.mrb[0].mxu0
  %v140 = vadd.f32 %v71, %v139
  %v141 = vpop.f32.mrb[0].mxu0
  %v142 = vadd.f32 %v75, %v141
  %143 = vmatprep.mubr.bf16.mxu0 0
  %144 = vmatmul.mubr.bf16.gmra.mrb[0].mxu0 %v86
  %v145 = vpop.f32.mrb[0].mxu0
  %v146 = vadd.f32 %v71, %v145
  %v147 = vpop.f32.mrb[0].mxu0
  %v148 = vadd.f32 %v75, %v147
  %v149 = vpop.f32.mrb[0].mxu0
  %v150 = vadd.f32 %v71, %v149
  %v151 = vpop.f32.mrb[0].mxu0
  %v152 = vadd.f32 %v75, %v151
  %153 = vmatprep.mubr.bf16.mxu0 0
  %154 = vmatmul.mubr.bf16.gmra.mrb[0].mxu0 %v89
  %v155 = vpop.f32.mrb[0].mxu0
  %v156 = vadd.f32 %v71, %v155
  %v157 = vpop.f32.mrb[0].mxu0
  %v158 = vadd.f32 %v75, %v157
  %v159 = vpop.f32.mrb[0].mxu0
  %v160 = vadd.f32 %v71, %v159
  %v161 = vpop.f32.mrb[0].mxu0
  %v162 = vadd.f32 %v75, %v161
  %163 = vdwg.mxu0
  %164 = vst [vmem:[#allocation2] sm:$0xff] %v126
  %165 = vst [vmem:[#allocation2 + $0x8] sm:$0xff] %v128
  %166 = vst [vmem:[#allocation2 + $0x10] sm:$0xff] %v130
  %167 = vst [vmem:[#allocation2 + $0x18] sm:$0xff] %v132
  %168 = vst [vmem:[#allocation2 + $0x20] sm:$0xff] %v136
  %169 = vst [vmem:[#allocation2 + $0x28] sm:$0xff] %v138
  %170 = vst [vmem:[#allocation2 + $0x30] sm:$0xff] %v140
  %171 = vst [vmem:[#allocation2 + $0x38] sm:$0xff] %v142
  %172 = vst [vmem:[#allocation2 + $0x40] sm:$0xff] %v146
  %173 = vst [vmem:[#allocation2 + $0x48] sm:$0xff] %v148
  %174 = vst [vmem:[#allocation2 + $0x50] sm:$0xff] %v150
  %175 = vst [vmem:[#allocation2 + $0x58] sm:$0xff] %v152
  %176 = vst [vmem:[#allocation2 + $0x60] sm:$0xff] %v156
  %177 = vst [vmem:[#allocation2 + $0x68] sm:$0xff] %v158
  %178 = vst [vmem:[#allocation2 + $0x70] sm:$0xff] %v160
  %179 = vst [vmem:[#allocation2 + $0x78] sm:$0xff] %v162
  %v180 = vld [vmem:[%s4] sm:$0xff]
  %v181 = vld [vmem:[%s4 + $0x8] sm:$0xff]
  %v182 = vld [vmem:[%s4 + $0x10] sm:$0xff]
  %v183 = vld [vmem:[%s4 + $0x18] sm:$0xff]
  %v184 = vpack.c.bf16 %v181, %v180
  %v185 = vpack.c.bf16 %v183, %v182
  %v186 = vld [vmem:[%s5] sm:$0xff]
  %v187 = vld [vmem:[%s5 + $0x8] sm:$0xff]
  %v188 = vld [vmem:[%s5 + $0x10] sm:$0xff]
  %v189 = vld [vmem:[%s5 + $0x18] sm:$0xff]
  %v190 = vpack.c.bf16 %v187, %v186
  %v191 = vpack.c.bf16 %v189, %v188
  %192 = vst.msk [vmem:[#allocation5] sm:$0xff] %vm78, 0.0
  %193 = vst.msk [vmem:[#allocation6] sm:$0xff] %vm78, 0.0
  %194 = vst.msk [vmem:[#allocation7] sm:$0xff] %vm78, 0.0
  %195 = vst.msk [vmem:[#allocation8] sm:$0xff] %vm78, 0.0
  %v196 = vld [vmem:[#allocation5] sm:$0xff]
  %v197 = vld [vmem:[#allocation6] sm:$0xff]
  %v198 = vld [vmem:[#allocation7] sm:$0xff]
  %v199 = vld [vmem:[#allocation8] sm:$0xff]
  %v200 = vpack.c.bf16 %v196, %v196
  %v201 = vpack.c.bf16 %v197, %v197
  %s202 = smul.u32 0, 2
  %s203 = smul.addr %s202, 8
  %s204 = scalar_lea.vmem [#allocation2], %s203
  %v205 = vld [vmem:[%s204] sm:$0xff]
  %s206 = smul.u32 7, 2
  %s207 = smul.addr %s206, 8
  %s208 = scalar_lea.vmem [#allocation2], %s207
  %v209 = vld [vmem:[%s208 + $0x8] sm:$0xff]
  %v211 = vsel %vm78, %v200, 0
  %213 = vmatprep.subr.bf16.mxu0 0
  %214 = vmatpush1.bf16.msra.mxu0 %v184
  %215 = vmatprep.subr.bf16.mxu0 0
  %216 = vmatpush1.bf16.msra.mxu0 %v185
  %217 = vmatprep.subr.bf16.mxu0 0
  %218 = vmatpush1.bf16.msra.mxu0 0
  %219 = vmatprep.subr.bf16.mxu0 0
  %220 = vmatpush1.bf16.msra.mxu0 0
  %221 = vmatprep.subr.bf16.mxu0 0
  %222 = vmatpush1.bf16.msra.mxu0 0
  %223 = vmatprep.subr.bf16.mxu0 0
  %224 = vmatpush1.bf16.msra.mxu0 0
  %225 = vmatprep.subr.bf16.mxu0 0
  %226 = vmatpush1.bf16.msra.mxu0 0
  %227 = vmatprep.subr.bf16.mxu0 0
  %228 = vmatpush1.bf16.msra.mxu0 0
  %229 = vmatprep.subr.bf16.mxu0 0
  %230 = vmatpush1.bf16.msra.mxu0 0
  %231 = vmatprep.subr.bf16.mxu0 0
  %232 = vmatpush1.bf16.msra.mxu0 0
  %233 = vmatprep.subr.bf16.mxu0 0
  %234 = vmatpush1.bf16.msra.mxu0 0
  %235 = vmatprep.subr.bf16.mxu0 0
  %236 = vmatpush1.bf16.msra.mxu0 0
  %237 = vmatprep.subr.bf16.mxu0 0
  %238 = vmatpush1.bf16.msra.mxu0 0
  %239 = vmatprep.subr.bf16.mxu0 0
  %240 = vmatpush1.bf16.msra.mxu0 0
  %241 = vmatprep.subr.bf16.mxu0 0
  %242 = vmatpush1.bf16.msra.mxu0 0
  %243 = vmatprep.subr.bf16.mxu0 0
  %244 = vmatpush1.bf16.msra.mxu0 0
  %245 = vmatprep.mubr.bf16.mxu0 0
  %246 = vmatmul.mubr.bf16.gmra.mrb[0].mxu0 %v211
  %v247 = vpop.f32.mrb[0].mxu0
  %v248 = vadd.f32 %v205, %v247
  %v249 = vpop.f32.mrb[0].mxu0
  %v250 = vpop.f32.mrb[0].mxu0
  %v251 = vpop.f32.mrb[0].mxu0
  %252 = vdwg.mxu0
  %v254 = vsel %vm78, %v201, 0
  %256 = vmatprep.subr.bf16.mxu0 0
  %257 = vmatpush1.bf16.msra.mxu0 %v190
  %258 = vmatprep.subr.bf16.mxu0 0
  %259 = vmatpush1.bf16.msra.mxu0 %v191
  %260 = vmatprep.subr.bf16.mxu0 0
  %261 = vmatpush1.bf16.msra.mxu0 0
  %262 = vmatprep.subr.bf16.mxu0 0
  %263 = vmatpush1.bf16.msra.mxu0 0
  %264 = vmatprep.subr.bf16.mxu0 0
  %265 = vmatpush1.bf16.msra.mxu0 0
  %266 = vmatprep.subr.bf16.mxu0 0
  %267 = vmatpush1.bf16.msra.mxu0 0
  %268 = vmatprep.subr.bf16.mxu0 0
  %269 = vmatpush1.bf16.msra.mxu0 0
  %270 = vmatprep.subr.bf16.mxu0 0
  %271 = vmatpush1.bf16.msra.mxu0 0
  %272 = vmatprep.subr.bf16.mxu0 0
  %273 = vmatpush1.bf16.msra.mxu0 0
  %274 = vmatprep.subr.bf16.mxu0 0
  %275 = vmatpush1.bf16.msra.mxu0 0
  %276 = vmatprep.subr.bf16.mxu0 0
  %277 = vmatpush1.bf16.msra.mxu0 0
  %278 = vmatprep.subr.bf16.mxu0 0
  %279 = vmatpush1.bf16.msra.mxu0 0
  %280 = vmatprep.subr.bf16.mxu0 0
  %281 = vmatpush1.bf16.msra.mxu0 0
  %282 = vmatprep.subr.bf16.mxu0 0
  %283 = vmatpush1.bf16.msra.mxu0 0
  %284 = vmatprep.subr.bf16.mxu0 0
  %285 = vmatpush1.bf16.msra.mxu0 0
  %286 = vmatprep.subr.bf16.mxu0 0
  %287 = vmatpush1.bf16.msra.mxu0 0
  %288 = vmatprep.mubr.bf16.mxu0 0
  %289 = vmatmul.mubr.bf16.gmra.mrb[0].mxu0 %v254
  %v290 = vpop.f32.mrb[0].mxu0
  %v291 = vadd.f32 %v209, %v290
  %v292 = vpop.f32.mrb[0].mxu0
  %v293 = vpop.f32.mrb[0].mxu0
  %v294 = vpop.f32.mrb[0].mxu0
  %295 = vdwg.mxu0
  %v296 = vtanh.pop %v248
  %v297 = vtanh.pop %v291
  %v298 = vmul.f32 %v296, 0.5
  %v299 = vmul.f32 %v297, 0.5
  %v300 = vadd.f32 %v298, 0.5
  %v301 = vadd.f32 %v299, 0.5
  %303 = vrot.lane.b32.xlu0 %v198, 32
  %v304 = vpop.permute.xlu0 %303
  %v306 = vmul.f32 %v300, %v304
  %308 = vrot.lane.b32.xlu0 %v296, 32
  %v309 = vpop.permute.xlu0 %308
  %v311 = vmul.f32 %v300, %v309
  %313 = vrot.lane.b32.xlu0 %v311, 32
  %v314 = vpop.permute.xlu0 %313
  %v316 = vadd.f32 %v306, %v314
  %318 = vrot.lane.b32.xlu0 %v199, 32
  %v319 = vpop.permute.xlu0 %318
  %v321 = vmul.f32 %v301, %v319
  %323 = vrot.lane.b32.xlu0 %v297, 32
  %v324 = vpop.permute.xlu0 %323
  %v326 = vmul.f32 %v301, %v324
  %328 = vrot.lane.b32.xlu0 %v326, 32
  %v329 = vpop.permute.xlu0 %328
  %v331 = vadd.f32 %v321, %v329
  %v332 = vtanh.pop %v316
  %334 = vrot.lane.b32.xlu0 %v332, 32
  %v335 = vpop.permute.xlu0 %334
  %v337 = vmul.f32 %v300, %v335
  %v338 = vtanh.pop %v331
  %340 = vrot.lane.b32.xlu0 %v338, 32
  %v341 = vpop.permute.xlu0 %340
  %v343 = vmul.f32 %v301, %v341
  %v344 = vld [vmem:[%s1] sm:$0xff]
  %s345 = scalar_lea.vmem %s1, 56
  %v346 = vld [vmem:[%s345] sm:$0xff]
  %348 = vrot.lane.b32.xlu0 %v196, 64
  %v349 = vpop.permute.xlu0 %348
  %v351 = vsub.f32 %v337, %v349
  %353 = vset.pattern.permute.xlu0 0
  %354 = vperm.xlu0 %353, %v344
  %v355 = vpop.permute.xlu0 %354
  %v357 = vmul.f32 %v355, %v351
  %359 = vrot.lane.b32.xlu0 %v357, 64
  %v360 = vpop.permute.xlu0 %359
  %v362 = vadd.f32 %v196, %v360
  %363 = vst.msk [vmem:[#allocation5] sm:$0xff] %vm78, %v362
  %365 = vrot.lane.b32.xlu0 %v197, 64
  %v366 = vpop.permute.xlu0 %365
  %v368 = vsub.f32 %v343, %v366
  %370 = vset.pattern.permute.xlu0 0
  %371 = vperm.xlu0 %370, %v346
  %v372 = vpop.permute.xlu0 %371
  %v374 = vmul.f32 %v372, %v368
  %376 = vrot.lane.b32.xlu0 %v374, 64
  %v377 = vpop.permute.xlu0 %376
  %v379 = vadd.f32 %v197, %v377
  %380 = vst.msk [vmem:[#allocation6] sm:$0xff] %vm78, %v379
  %v381 = vsub.f32 %v316, %v304
  %v382 = vmul.f32 %v355, %v381
  %384 = vrot.lane.b32.xlu0 %v382, 96
  %v385 = vpop.permute.xlu0 %384
  %v387 = vadd.f32 %v198, %v385
  %388 = vst.msk [vmem:[#allocation7] sm:$0xff] %vm78, %v387
  %v389 = vsub.f32 %v331, %v319
  %v390 = vmul.f32 %v372, %v389
  %392 = vrot.lane.b32.xlu0 %v390, 96
  %v393 = vpop.permute.xlu0 %392
  %v395 = vadd.f32 %v199, %v393
  %396 = vst.msk [vmem:[#allocation8] sm:$0xff] %vm78, %v395
  %v397 = vmul.f32 %v355, %v337
  %399 = vrot.lane.b32.xlu0 %v397, 64
  %v400 = vpop.permute.xlu0 %399
  %402 = vst.msk [vmem:[#allocation3] sm:$0xff] %vm78, %v400
  %v403 = vmul.f32 %v372, %v343
  %405 = vrot.lane.b32.xlu0 %v403, 64
  %v406 = vpop.permute.xlu0 %405
  %s408 = scalar_lea.vmem [#allocation4], 56
  %409 = vst.msk [vmem:[%s408] sm:$0xff] %vm78, %v406
  %v410 = vld [vmem:[#allocation5] sm:$0xff]
  %v411 = vld [vmem:[#allocation6] sm:$0xff]
  %v412 = vld [vmem:[#allocation7] sm:$0xff]
  %v413 = vld [vmem:[#allocation8] sm:$0xff]
  %v414 = vpack.c.bf16 %v410, %v410
  %v415 = vpack.c.bf16 %v411, %v411
  %s416 = smul.u32 1, 2
  %s417 = smul.addr %s416, 8
  %s418 = scalar_lea.vmem [#allocation2], %s417
  %v419 = vld [vmem:[%s418] sm:$0xff]
  %s420 = smul.u32 6, 2
  %s421 = smul.addr %s420, 8
  %s422 = scalar_lea.vmem [#allocation2], %s421
  %v423 = vld [vmem:[%s422 + $0x8] sm:$0xff]
  %v425 = vsel %vm78, %v414, 0
  %427 = vmatprep.subr.bf16.mxu0 0
  %428 = vmatpush1.bf16.msra.mxu0 %v184
  %429 = vmatprep.subr.bf16.mxu0 0
  %430 = vmatpush1.bf16.msra.mxu0 %v185
  %431 = vmatprep.subr.bf16.mxu0 0
  %432 = vmatpush1.bf16.msra.mxu0 0
  %433 = vmatprep.subr.bf16.mxu0 0
  %434 = vmatpush1.bf16.msra.mxu0 0
  %435 = vmatprep.subr.bf16.mxu0 0
  %436 = vmatpush1.bf16.msra.mxu0 0
  %437 = vmatprep.subr.bf16.mxu0 0
  %438 = vmatpush1.bf16.msra.mxu0 0
  %439 = vmatprep.subr.bf16.mxu0 0
  %440 = vmatpush1.bf16.msra.mxu0 0
  %441 = vmatprep.subr.bf16.mxu0 0
  %442 = vmatpush1.bf16.msra.mxu0 0
  %443 = vmatprep.subr.bf16.mxu0 0
  %444 = vmatpush1.bf16.msra.mxu0 0
  %445 = vmatprep.subr.bf16.mxu0 0
  %446 = vmatpush1.bf16.msra.mxu0 0
  %447 = vmatprep.subr.bf16.mxu0 0
  %448 = vmatpush1.bf16.msra.mxu0 0
  %449 = vmatprep.subr.bf16.mxu0 0
  %450 = vmatpush1.bf16.msra.mxu0 0
  %451 = vmatprep.subr.bf16.mxu0 0
  %452 = vmatpush1.bf16.msra.mxu0 0
  %453 = vmatprep.subr.bf16.mxu0 0
  %454 = vmatpush1.bf16.msra.mxu0 0
  %455 = vmatprep.subr.bf16.mxu0 0
  %456 = vmatpush1.bf16.msra.mxu0 0
  %457 = vmatprep.subr.bf16.mxu0 0
  %458 = vmatpush1.bf16.msra.mxu0 0
  %459 = vmatprep.mubr.bf16.mxu0 0
  %460 = vmatmul.mubr.bf16.gmra.mrb[0].mxu0 %v425
  %v461 = vpop.f32.mrb[0].mxu0
  %v462 = vadd.f32 %v419, %v461
  %v463 = vpop.f32.mrb[0].mxu0
  %v464 = vpop.f32.mrb[0].mxu0
  %v465 = vpop.f32.mrb[0].mxu0
  %466 = vdwg.mxu0
  %v468 = vsel %vm78, %v415, 0
  %470 = vmatprep.subr.bf16.mxu0 0
  %471 = vmatpush1.bf16.msra.mxu0 %v190
  %472 = vmatprep.subr.bf16.mxu0 0
  %473 = vmatpush1.bf16.msra.mxu0 %v191
  %474 = vmatprep.subr.bf16.mxu0 0
  %475 = vmatpush1.bf16.msra.mxu0 0
  %476 = vmatprep.subr.bf16.mxu0 0
  %477 = vmatpush1.bf16.msra.mxu0 0
  %478 = vmatprep.subr.bf16.mxu0 0
  %479 = vmatpush1.bf16.msra.mxu0 0
  %480 = vmatprep.subr.bf16.mxu0 0
  %481 = vmatpush1.bf16.msra.mxu0 0
  %482 = vmatprep.subr.bf16.mxu0 0
  %483 = vmatpush1.bf16.msra.mxu0 0
  %484 = vmatprep.subr.bf16.mxu0 0
  %485 = vmatpush1.bf16.msra.mxu0 0
  %486 = vmatprep.subr.bf16.mxu0 0
  %487 = vmatpush1.bf16.msra.mxu0 0
  %488 = vmatprep.subr.bf16.mxu0 0
  %489 = vmatpush1.bf16.msra.mxu0 0
  %490 = vmatprep.subr.bf16.mxu0 0
  %491 = vmatpush1.bf16.msra.mxu0 0
  %492 = vmatprep.subr.bf16.mxu0 0
  %493 = vmatpush1.bf16.msra.mxu0 0
  %494 = vmatprep.subr.bf16.mxu0 0
  %495 = vmatpush1.bf16.msra.mxu0 0
  %496 = vmatprep.subr.bf16.mxu0 0
  %497 = vmatpush1.bf16.msra.mxu0 0
  %498 = vmatprep.subr.bf16.mxu0 0
  %499 = vmatpush1.bf16.msra.mxu0 0
  %500 = vmatprep.subr.bf16.mxu0 0
  %501 = vmatpush1.bf16.msra.mxu0 0
  %502 = vmatprep.mubr.bf16.mxu0 0
  %503 = vmatmul.mubr.bf16.gmra.mrb[0].mxu0 %v468
  %v504 = vpop.f32.mrb[0].mxu0
  %v505 = vadd.f32 %v423, %v504
  %v506 = vpop.f32.mrb[0].mxu0
  %v507 = vpop.f32.mrb[0].mxu0
  %v508 = vpop.f32.mrb[0].mxu0
  %509 = vdwg.mxu0
  %v510 = vtanh.pop %v462
  %v511 = vtanh.pop %v505
  %v512 = vmul.f32 %v510, 0.5
  %v513 = vmul.f32 %v511, 0.5
  %v514 = vadd.f32 %v512, 0.5
  %v515 = vadd.f32 %v513, 0.5
  %517 = vrot.lane.b32.xlu0 %v412, 32
  %v518 = vpop.permute.xlu0 %517
  %v520 = vmul.f32 %v514, %v518
  %522 = vrot.lane.b32.xlu0 %v510, 32
  %v523 = vpop.permute.xlu0 %522
  %v525 = vmul.f32 %v514, %v523
  %527 = vrot.lane.b32.xlu0 %v525, 32
  %v528 = vpop.permute.xlu0 %527
  %v530 = vadd.f32 %v520, %v528
  %532 = vrot.lane.b32.xlu0 %v413, 32
  %v533 = vpop.permute.xlu0 %532
  %v535 = vmul.f32 %v515, %v533
  %537 = vrot.lane.b32.xlu0 %v511, 32
  %v538 = vpop.permute.xlu0 %537
  %v540 = vmul.f32 %v515, %v538
  %542 = vrot.lane.b32.xlu0 %v540, 32
  %v543 = vpop.permute.xlu0 %542
  %v545 = vadd.f32 %v535, %v543
  %v546 = vtanh.pop %v530
  %548 = vrot.lane.b32.xlu0 %v546, 32
  %v549 = vpop.permute.xlu0 %548
  %v551 = vmul.f32 %v514, %v549
  %v552 = vtanh.pop %v545
  %554 = vrot.lane.b32.xlu0 %v552, 32
  %v555 = vpop.permute.xlu0 %554
  %v557 = vmul.f32 %v515, %v555
  %s558 = scalar_lea.vmem %s1, 8
  %v559 = vld [vmem:[%s558] sm:$0xff]
  %s560 = scalar_lea.vmem %s1, 48
  %v561 = vld [vmem:[%s560] sm:$0xff]
  %563 = vrot.lane.b32.xlu0 %v410, 64
  %v564 = vpop.permute.xlu0 %563
  %v566 = vsub.f32 %v551, %v564
  %568 = vset.pattern.permute.xlu0 0
  %569 = vperm.xlu0 %568, %v559
  %v570 = vpop.permute.xlu0 %569
  %v572 = vmul.f32 %v570, %v566
  %574 = vrot.lane.b32.xlu0 %v572, 64
  %v575 = vpop.permute.xlu0 %574
  %v577 = vadd.f32 %v410, %v575
  %578 = vst.msk [vmem:[#allocation5] sm:$0xff] %vm78, %v577
  %580 = vrot.lane.b32.xlu0 %v411, 64
  %v581 = vpop.permute.xlu0 %580
  %v583 = vsub.f32 %v557, %v581
  %585 = vset.pattern.permute.xlu0 0
  %586 = vperm.xlu0 %585, %v561
  %v587 = vpop.permute.xlu0 %586
  %v589 = vmul.f32 %v587, %v583
  %591 = vrot.lane.b32.xlu0 %v589, 64
  %v592 = vpop.permute.xlu0 %591
  %v594 = vadd.f32 %v411, %v592
  %595 = vst.msk [vmem:[#allocation6] sm:$0xff] %vm78, %v594
  %v596 = vsub.f32 %v530, %v518
  %v597 = vmul.f32 %v570, %v596
  %599 = vrot.lane.b32.xlu0 %v597, 96
  %v600 = vpop.permute.xlu0 %599
  %v602 = vadd.f32 %v412, %v600
  %603 = vst.msk [vmem:[#allocation7] sm:$0xff] %vm78, %v602
  %v604 = vsub.f32 %v545, %v533
  %v605 = vmul.f32 %v587, %v604
  %607 = vrot.lane.b32.xlu0 %v605, 96
  %v608 = vpop.permute.xlu0 %607
  %v610 = vadd.f32 %v413, %v608
  %611 = vst.msk [vmem:[#allocation8] sm:$0xff] %vm78, %v610
  %v612 = vmul.f32 %v570, %v551
  %614 = vrot.lane.b32.xlu0 %v612, 64
  %v615 = vpop.permute.xlu0 %614
  %s617 = scalar_lea.vmem [#allocation3], 8
  %618 = vst.msk [vmem:[%s617] sm:$0xff] %vm78, %v615
  %v619 = vmul.f32 %v587, %v557
  %621 = vrot.lane.b32.xlu0 %v619, 64
  %v622 = vpop.permute.xlu0 %621
  %s624 = scalar_lea.vmem [#allocation4], 48
  %625 = vst.msk [vmem:[%s624] sm:$0xff] %vm78, %v622
  %v626 = vld [vmem:[#allocation5] sm:$0xff]
  %v627 = vld [vmem:[#allocation6] sm:$0xff]
  %v628 = vld [vmem:[#allocation7] sm:$0xff]
  %v629 = vld [vmem:[#allocation8] sm:$0xff]
  %v630 = vpack.c.bf16 %v626, %v626
  %v631 = vpack.c.bf16 %v627, %v627
  %s632 = smul.u32 2, 2
  %s633 = smul.addr %s632, 8
  %s634 = scalar_lea.vmem [#allocation2], %s633
  %v635 = vld [vmem:[%s634] sm:$0xff]
  %s636 = smul.u32 5, 2
  %s637 = smul.addr %s636, 8
  %s638 = scalar_lea.vmem [#allocation2], %s637
  %v639 = vld [vmem:[%s638 + $0x8] sm:$0xff]
  %v641 = vsel %vm78, %v630, 0
  %643 = vmatprep.subr.bf16.mxu0 0
  %644 = vmatpush1.bf16.msra.mxu0 %v184
  %645 = vmatprep.subr.bf16.mxu0 0
  %646 = vmatpush1.bf16.msra.mxu0 %v185
  %647 = vmatprep.subr.bf16.mxu0 0
  %648 = vmatpush1.bf16.msra.mxu0 0
  %649 = vmatprep.subr.bf16.mxu0 0
  %650 = vmatpush1.bf16.msra.mxu0 0
  %651 = vmatprep.subr.bf16.mxu0 0
  %652 = vmatpush1.bf16.msra.mxu0 0
  %653 = vmatprep.subr.bf16.mxu0 0
  %654 = vmatpush1.bf16.msra.mxu0 0
  %655 = vmatprep.subr.bf16.mxu0 0
  %656 = vmatpush1.bf16.msra.mxu0 0
  %657 = vmatprep.subr.bf16.mxu0 0
  %658 = vmatpush1.bf16.msra.mxu0 0
  %659 = vmatprep.subr.bf16.mxu0 0
  %660 = vmatpush1.bf16.msra.mxu0 0
  %661 = vmatprep.subr.bf16.mxu0 0
  %662 = vmatpush1.bf16.msra.mxu0 0
  %663 = vmatprep.subr.bf16.mxu0 0
  %664 = vmatpush1.bf16.msra.mxu0 0
  %665 = vmatprep.subr.bf16.mxu0 0
  %666 = vmatpush1.bf16.msra.mxu0 0
  %667 = vmatprep.subr.bf16.mxu0 0
  %668 = vmatpush1.bf16.msra.mxu0 0
  %669 = vmatprep.subr.bf16.mxu0 0
  %670 = vmatpush1.bf16.msra.mxu0 0
  %671 = vmatprep.subr.bf16.mxu0 0
  %672 = vmatpush1.bf16.msra.mxu0 0
  %673 = vmatprep.subr.bf16.mxu0 0
  %674 = vmatpush1.bf16.msra.mxu0 0
  %675 = vmatprep.mubr.bf16.mxu0 0
  %676 = vmatmul.mubr.bf16.gmra.mrb[0].mxu0 %v641
  %v677 = vpop.f32.mrb[0].mxu0
  %v678 = vadd.f32 %v635, %v677
  %v679 = vpop.f32.mrb[0].mxu0
  %v680 = vpop.f32.mrb[0].mxu0
  %v681 = vpop.f32.mrb[0].mxu0
  %682 = vdwg.mxu0
  %v684 = vsel %vm78, %v631, 0
  %686 = vmatprep.subr.bf16.mxu0 0
  %687 = vmatpush1.bf16.msra.mxu0 %v190
  %688 = vmatprep.subr.bf16.mxu0 0
  %689 = vmatpush1.bf16.msra.mxu0 %v191
  %690 = vmatprep.subr.bf16.mxu0 0
  %691 = vmatpush1.bf16.msra.mxu0 0
  %692 = vmatprep.subr.bf16.mxu0 0
  %693 = vmatpush1.bf16.msra.mxu0 0
  %694 = vmatprep.subr.bf16.mxu0 0
  %695 = vmatpush1.bf16.msra.mxu0 0
  %696 = vmatprep.subr.bf16.mxu0 0
  %697 = vmatpush1.bf16.msra.mxu0 0
  %698 = vmatprep.subr.bf16.mxu0 0
  %699 = vmatpush1.bf16.msra.mxu0 0
  %700 = vmatprep.subr.bf16.mxu0 0
  %701 = vmatpush1.bf16.msra.mxu0 0
  %702 = vmatprep.subr.bf16.mxu0 0
  %703 = vmatpush1.bf16.msra.mxu0 0
  %704 = vmatprep.subr.bf16.mxu0 0
  %705 = vmatpush1.bf16.msra.mxu0 0
  %706 = vmatprep.subr.bf16.mxu0 0
  %707 = vmatpush1.bf16.msra.mxu0 0
  %708 = vmatprep.subr.bf16.mxu0 0
  %709 = vmatpush1.bf16.msra.mxu0 0
  %710 = vmatprep.subr.bf16.mxu0 0
  %711 = vmatpush1.bf16.msra.mxu0 0
  %712 = vmatprep.subr.bf16.mxu0 0
  %713 = vmatpush1.bf16.msra.mxu0 0
  %714 = vmatprep.subr.bf16.mxu0 0
  %715 = vmatpush1.bf16.msra.mxu0 0
  %716 = vmatprep.subr.bf16.mxu0 0
  %717 = vmatpush1.bf16.msra.mxu0 0
  %718 = vmatprep.mubr.bf16.mxu0 0
  %719 = vmatmul.mubr.bf16.gmra.mrb[0].mxu0 %v684
  %v720 = vpop.f32.mrb[0].mxu0
  %v721 = vadd.f32 %v639, %v720
  %v722 = vpop.f32.mrb[0].mxu0
  %v723 = vpop.f32.mrb[0].mxu0
  %v724 = vpop.f32.mrb[0].mxu0
  %725 = vdwg.mxu0
  %v726 = vtanh.pop %v678
  %v727 = vtanh.pop %v721
  %v728 = vmul.f32 %v726, 0.5
  %v729 = vmul.f32 %v727, 0.5
  %v730 = vadd.f32 %v728, 0.5
  %v731 = vadd.f32 %v729, 0.5
  %733 = vrot.lane.b32.xlu0 %v628, 32
  %v734 = vpop.permute.xlu0 %733
  %v736 = vmul.f32 %v730, %v734
  %738 = vrot.lane.b32.xlu0 %v726, 32
  %v739 = vpop.permute.xlu0 %738
  %v741 = vmul.f32 %v730, %v739
  %743 = vrot.lane.b32.xlu0 %v741, 32
  %v744 = vpop.permute.xlu0 %743
  %v746 = vadd.f32 %v736, %v744
  %748 = vrot.lane.b32.xlu0 %v629, 32
  %v749 = vpop.permute.xlu0 %748
  %v751 = vmul.f32 %v731, %v749
  %753 = vrot.lane.b32.xlu0 %v727, 32
  %v754 = vpop.permute.xlu0 %753
  %v756 = vmul.f32 %v731, %v754
  %758 = vrot.lane.b32.xlu0 %v756, 32
  %v759 = vpop.permute.xlu0 %758
  %v761 = vadd.f32 %v751, %v759
  %v762 = vtanh.pop %v746
  %764 = vrot.lane.b32.xlu0 %v762, 32
  %v765 = vpop.permute.xlu0 %764
  %v767 = vmul.f32 %v730, %v765
  %v768 = vtanh.pop %v761
  %770 = vrot.lane.b32.xlu0 %v768, 32
  %v771 = vpop.permute.xlu0 %770
  %v773 = vmul.f32 %v731, %v771
  %s774 = scalar_lea.vmem %s1, 16
  %v775 = vld [vmem:[%s774] sm:$0xff]
  %s776 = scalar_lea.vmem %s1, 40
  %v777 = vld [vmem:[%s776] sm:$0xff]
  %779 = vrot.lane.b32.xlu0 %v626, 64
  %v780 = vpop.permute.xlu0 %779
  %v782 = vsub.f32 %v767, %v780
  %784 = vset.pattern.permute.xlu0 0
  %785 = vperm.xlu0 %784, %v775
  %v786 = vpop.permute.xlu0 %785
  %v788 = vmul.f32 %v786, %v782
  %790 = vrot.lane.b32.xlu0 %v788, 64
  %v791 = vpop.permute.xlu0 %790
  %v793 = vadd.f32 %v626, %v791
  %794 = vst.msk [vmem:[#allocation5] sm:$0xff] %vm78, %v793
  %796 = vrot.lane.b32.xlu0 %v627, 64
  %v797 = vpop.permute.xlu0 %796
  %v799 = vsub.f32 %v773, %v797
  %801 = vset.pattern.permute.xlu0 0
  %802 = vperm.xlu0 %801, %v777
  %v803 = vpop.permute.xlu0 %802
  %v805 = vmul.f32 %v803, %v799
  %807 = vrot.lane.b32.xlu0 %v805, 64
  %v808 = vpop.permute.xlu0 %807
  %v810 = vadd.f32 %v627, %v808
  %811 = vst.msk [vmem:[#allocation6] sm:$0xff] %vm78, %v810
  %v812 = vsub.f32 %v746, %v734
  %v813 = vmul.f32 %v786, %v812
  %815 = vrot.lane.b32.xlu0 %v813, 96
  %v816 = vpop.permute.xlu0 %815
  %v818 = vadd.f32 %v628, %v816
  %819 = vst.msk [vmem:[#allocation7] sm:$0xff] %vm78, %v818
  %v820 = vsub.f32 %v761, %v749
  %v821 = vmul.f32 %v803, %v820
  %823 = vrot.lane.b32.xlu0 %v821, 96
  %v824 = vpop.permute.xlu0 %823
  %v826 = vadd.f32 %v629, %v824
  %827 = vst.msk [vmem:[#allocation8] sm:$0xff] %vm78, %v826
  %v828 = vmul.f32 %v786, %v767
  %830 = vrot.lane.b32.xlu0 %v828, 64
  %v831 = vpop.permute.xlu0 %830
  %s833 = scalar_lea.vmem [#allocation3], 16
  %834 = vst.msk [vmem:[%s833] sm:$0xff] %vm78, %v831
  %v835 = vmul.f32 %v803, %v773
  %837 = vrot.lane.b32.xlu0 %v835, 64
  %v838 = vpop.permute.xlu0 %837
  %s840 = scalar_lea.vmem [#allocation4], 40
  %841 = vst.msk [vmem:[%s840] sm:$0xff] %vm78, %v838
  %v842 = vld [vmem:[#allocation5] sm:$0xff]
  %v843 = vld [vmem:[#allocation6] sm:$0xff]
  %v844 = vld [vmem:[#allocation7] sm:$0xff]
  %v845 = vld [vmem:[#allocation8] sm:$0xff]
  %v846 = vpack.c.bf16 %v842, %v842
  %v847 = vpack.c.bf16 %v843, %v843
  %s848 = smul.u32 3, 2
  %s849 = smul.addr %s848, 8
  %s850 = scalar_lea.vmem [#allocation2], %s849
  %v851 = vld [vmem:[%s850] sm:$0xff]
  %s852 = smul.u32 4, 2
  %s853 = smul.addr %s852, 8
  %s854 = scalar_lea.vmem [#allocation2], %s853
  %v855 = vld [vmem:[%s854 + $0x8] sm:$0xff]
  %v857 = vsel %vm78, %v846, 0
  %859 = vmatprep.subr.bf16.mxu0 0
  %860 = vmatpush1.bf16.msra.mxu0 %v184
  %861 = vmatprep.subr.bf16.mxu0 0
  %862 = vmatpush1.bf16.msra.mxu0 %v185
  %863 = vmatprep.subr.bf16.mxu0 0
  %864 = vmatpush1.bf16.msra.mxu0 0
  %865 = vmatprep.subr.bf16.mxu0 0
  %866 = vmatpush1.bf16.msra.mxu0 0
  %867 = vmatprep.subr.bf16.mxu0 0
  %868 = vmatpush1.bf16.msra.mxu0 0
  %869 = vmatprep.subr.bf16.mxu0 0
  %870 = vmatpush1.bf16.msra.mxu0 0
  %871 = vmatprep.subr.bf16.mxu0 0
  %872 = vmatpush1.bf16.msra.mxu0 0
  %873 = vmatprep.subr.bf16.mxu0 0
  %874 = vmatpush1.bf16.msra.mxu0 0
  %875 = vmatprep.subr.bf16.mxu0 0
  %876 = vmatpush1.bf16.msra.mxu0 0
  %877 = vmatprep.subr.bf16.mxu0 0
  %878 = vmatpush1.bf16.msra.mxu0 0
  %879 = vmatprep.subr.bf16.mxu0 0
  %880 = vmatpush1.bf16.msra.mxu0 0
  %881 = vmatprep.subr.bf16.mxu0 0
  %882 = vmatpush1.bf16.msra.mxu0 0
  %883 = vmatprep.subr.bf16.mxu0 0
  %884 = vmatpush1.bf16.msra.mxu0 0
  %885 = vmatprep.subr.bf16.mxu0 0
  %886 = vmatpush1.bf16.msra.mxu0 0
  %887 = vmatprep.subr.bf16.mxu0 0
  %888 = vmatpush1.bf16.msra.mxu0 0
  %889 = vmatprep.subr.bf16.mxu0 0
  %890 = vmatpush1.bf16.msra.mxu0 0
  %891 = vmatprep.mubr.bf16.mxu0 0
  %892 = vmatmul.mubr.bf16.gmra.mrb[0].mxu0 %v857
  %v893 = vpop.f32.mrb[0].mxu0
  %v894 = vadd.f32 %v851, %v893
  %v895 = vpop.f32.mrb[0].mxu0
  %v896 = vpop.f32.mrb[0].mxu0
  %v897 = vpop.f32.mrb[0].mxu0
  %898 = vdwg.mxu0
  %v900 = vsel %vm78, %v847, 0
  %902 = vmatprep.subr.bf16.mxu0 0
  %903 = vmatpush1.bf16.msra.mxu0 %v190
  %904 = vmatprep.subr.bf16.mxu0 0
  %905 = vmatpush1.bf16.msra.mxu0 %v191
  %906 = vmatprep.subr.bf16.mxu0 0
  %907 = vmatpush1.bf16.msra.mxu0 0
  %908 = vmatprep.subr.bf16.mxu0 0
  %909 = vmatpush1.bf16.msra.mxu0 0
  %910 = vmatprep.subr.bf16.mxu0 0
  %911 = vmatpush1.bf16.msra.mxu0 0
  %912 = vmatprep.subr.bf16.mxu0 0
  %913 = vmatpush1.bf16.msra.mxu0 0
  %914 = vmatprep.subr.bf16.mxu0 0
  %915 = vmatpush1.bf16.msra.mxu0 0
  %916 = vmatprep.subr.bf16.mxu0 0
  %917 = vmatpush1.bf16.msra.mxu0 0
  %918 = vmatprep.subr.bf16.mxu0 0
  %919 = vmatpush1.bf16.msra.mxu0 0
  %920 = vmatprep.subr.bf16.mxu0 0
  %921 = vmatpush1.bf16.msra.mxu0 0
  %922 = vmatprep.subr.bf16.mxu0 0
  %923 = vmatpush1.bf16.msra.mxu0 0
  %924 = vmatprep.subr.bf16.mxu0 0
  %925 = vmatpush1.bf16.msra.mxu0 0
  %926 = vmatprep.subr.bf16.mxu0 0
  %927 = vmatpush1.bf16.msra.mxu0 0
  %928 = vmatprep.subr.bf16.mxu0 0
  %929 = vmatpush1.bf16.msra.mxu0 0
  %930 = vmatprep.subr.bf16.mxu0 0
  %931 = vmatpush1.bf16.msra.mxu0 0
  %932 = vmatprep.subr.bf16.mxu0 0
  %933 = vmatpush1.bf16.msra.mxu0 0
  %934 = vmatprep.mubr.bf16.mxu0 0
  %935 = vmatmul.mubr.bf16.gmra.mrb[0].mxu0 %v900
  %v936 = vpop.f32.mrb[0].mxu0
  %v937 = vadd.f32 %v855, %v936
  %v938 = vpop.f32.mrb[0].mxu0
  %v939 = vpop.f32.mrb[0].mxu0
  %v940 = vpop.f32.mrb[0].mxu0
  %941 = vdwg.mxu0
  %v942 = vtanh.pop %v894
  %v943 = vtanh.pop %v937
  %v944 = vmul.f32 %v942, 0.5
  %v945 = vmul.f32 %v943, 0.5
  %v946 = vadd.f32 %v944, 0.5
  %v947 = vadd.f32 %v945, 0.5
  %949 = vrot.lane.b32.xlu0 %v844, 32
  %v950 = vpop.permute.xlu0 %949
  %v952 = vmul.f32 %v946, %v950
  %954 = vrot.lane.b32.xlu0 %v942, 32
  %v955 = vpop.permute.xlu0 %954
  %v957 = vmul.f32 %v946, %v955
  %959 = vrot.lane.b32.xlu0 %v957, 32
  %v960 = vpop.permute.xlu0 %959
  %v962 = vadd.f32 %v952, %v960
  %964 = vrot.lane.b32.xlu0 %v845, 32
  %v965 = vpop.permute.xlu0 %964
  %v967 = vmul.f32 %v947, %v965
  %969 = vrot.lane.b32.xlu0 %v943, 32
  %v970 = vpop.permute.xlu0 %969
  %v972 = vmul.f32 %v947, %v970
  %974 = vrot.lane.b32.xlu0 %v972, 32
  %v975 = vpop.permute.xlu0 %974
  %v977 = vadd.f32 %v967, %v975
  %v978 = vtanh.pop %v962
  %980 = vrot.lane.b32.xlu0 %v978, 32
  %v981 = vpop.permute.xlu0 %980
  %v983 = vmul.f32 %v946, %v981
  %v984 = vtanh.pop %v977
  %986 = vrot.lane.b32.xlu0 %v984, 32
  %v987 = vpop.permute.xlu0 %986
  %v989 = vmul.f32 %v947, %v987
  %s990 = scalar_lea.vmem %s1, 24
  %v991 = vld [vmem:[%s990] sm:$0xff]
  %s992 = scalar_lea.vmem %s1, 32
  %v993 = vld [vmem:[%s992] sm:$0xff]
  %995 = vrot.lane.b32.xlu0 %v842, 64
  %v996 = vpop.permute.xlu0 %995
  %v998 = vsub.f32 %v983, %v996
  %1000 = vset.pattern.permute.xlu0 0
  %1001 = vperm.xlu0 %1000, %v991
  %v1002 = vpop.permute.xlu0 %1001
  %v1004 = vmul.f32 %v1002, %v998
  %1006 = vrot.lane.b32.xlu0 %v1004, 64
  %v1007 = vpop.permute.xlu0 %1006
  %v1009 = vadd.f32 %v842, %v1007
  %1010 = vst.msk [vmem:[#allocation5] sm:$0xff] %vm78, %v1009
  %1012 = vrot.lane.b32.xlu0 %v843, 64
  %v1013 = vpop.permute.xlu0 %1012
  %v1015 = vsub.f32 %v989, %v1013
  %1017 = vset.pattern.permute.xlu0 0
  %1018 = vperm.xlu0 %1017, %v993
  %v1019 = vpop.permute.xlu0 %1018
  %v1021 = vmul.f32 %v1019, %v1015
  %1023 = vrot.lane.b32.xlu0 %v1021, 64
  %v1024 = vpop.permute.xlu0 %1023
  %v1026 = vadd.f32 %v843, %v1024
  %1027 = vst.msk [vmem:[#allocation6] sm:$0xff] %vm78, %v1026
  %v1028 = vsub.f32 %v962, %v950
  %v1029 = vmul.f32 %v1002, %v1028
  %1031 = vrot.lane.b32.xlu0 %v1029, 96
  %v1032 = vpop.permute.xlu0 %1031
  %v1034 = vadd.f32 %v844, %v1032
  %1035 = vst.msk [vmem:[#allocation7] sm:$0xff] %vm78, %v1034
  %v1036 = vsub.f32 %v977, %v965
  %v1037 = vmul.f32 %v1019, %v1036
  %1039 = vrot.lane.b32.xlu0 %v1037, 96
  %v1040 = vpop.permute.xlu0 %1039
  %v1042 = vadd.f32 %v845, %v1040
  %1043 = vst.msk [vmem:[#allocation8] sm:$0xff] %vm78, %v1042
  %v1044 = vmul.f32 %v1002, %v983
  %1046 = vrot.lane.b32.xlu0 %v1044, 64
  %v1047 = vpop.permute.xlu0 %1046
  %s1049 = scalar_lea.vmem [#allocation3], 24
  %1050 = vst.msk [vmem:[%s1049] sm:$0xff] %vm78, %v1047
  %v1051 = vmul.f32 %v1019, %v989
  %1053 = vrot.lane.b32.xlu0 %v1051, 64
  %v1054 = vpop.permute.xlu0 %1053
  %s1056 = scalar_lea.vmem [#allocation4], 32
  %1057 = vst.msk [vmem:[%s1056] sm:$0xff] %vm78, %v1054
  %v1058 = vld [vmem:[#allocation5] sm:$0xff]
  %v1059 = vld [vmem:[#allocation6] sm:$0xff]
  %v1060 = vld [vmem:[#allocation7] sm:$0xff]
  %v1061 = vld [vmem:[#allocation8] sm:$0xff]
  %v1062 = vpack.c.bf16 %v1058, %v1058
  %v1063 = vpack.c.bf16 %v1059, %v1059
  %v1064 = vld [vmem:[%s854] sm:$0xff]
  %v1065 = vld [vmem:[%s850 + $0x8] sm:$0xff]
  %v1067 = vsel %vm78, %v1062, 0
  %1069 = vmatprep.subr.bf16.mxu0 0
  %1070 = vmatpush1.bf16.msra.mxu0 %v184
  %1071 = vmatprep.subr.bf16.mxu0 0
  %1072 = vmatpush1.bf16.msra.mxu0 %v185
  %1073 = vmatprep.subr.bf16.mxu0 0
  %1074 = vmatpush1.bf16.msra.mxu0 0
  %1075 = vmatprep.subr.bf16.mxu0 0
  %1076 = vmatpush1.bf16.msra.mxu0 0
  %1077 = vmatprep.subr.bf16.mxu0 0
  %1078 = vmatpush1.bf16.msra.mxu0 0
  %1079 = vmatprep.subr.bf16.mxu0 0
  %1080 = vmatpush1.bf16.msra.mxu0 0
  %1081 = vmatprep.subr.bf16.mxu0 0
  %1082 = vmatpush1.bf16.msra.mxu0 0
  %1083 = vmatprep.subr.bf16.mxu0 0
  %1084 = vmatpush1.bf16.msra.mxu0 0
  %1085 = vmatprep.subr.bf16.mxu0 0
  %1086 = vmatpush1.bf16.msra.mxu0 0
  %1087 = vmatprep.subr.bf16.mxu0 0
  %1088 = vmatpush1.bf16.msra.mxu0 0
  %1089 = vmatprep.subr.bf16.mxu0 0
  %1090 = vmatpush1.bf16.msra.mxu0 0
  %1091 = vmatprep.subr.bf16.mxu0 0
  %1092 = vmatpush1.bf16.msra.mxu0 0
  %1093 = vmatprep.subr.bf16.mxu0 0
  %1094 = vmatpush1.bf16.msra.mxu0 0
  %1095 = vmatprep.subr.bf16.mxu0 0
  %1096 = vmatpush1.bf16.msra.mxu0 0
  %1097 = vmatprep.subr.bf16.mxu0 0
  %1098 = vmatpush1.bf16.msra.mxu0 0
  %1099 = vmatprep.subr.bf16.mxu0 0
  %1100 = vmatpush1.bf16.msra.mxu0 0
  %1101 = vmatprep.mubr.bf16.mxu0 0
  %1102 = vmatmul.mubr.bf16.gmra.mrb[0].mxu0 %v1067
  %v1103 = vpop.f32.mrb[0].mxu0
  %v1104 = vadd.f32 %v1064, %v1103
  %v1105 = vpop.f32.mrb[0].mxu0
  %v1106 = vpop.f32.mrb[0].mxu0
  %v1107 = vpop.f32.mrb[0].mxu0
  %1108 = vdwg.mxu0
  %v1110 = vsel %vm78, %v1063, 0
  %1112 = vmatprep.subr.bf16.mxu0 0
  %1113 = vmatpush1.bf16.msra.mxu0 %v190
  %1114 = vmatprep.subr.bf16.mxu0 0
  %1115 = vmatpush1.bf16.msra.mxu0 %v191
  %1116 = vmatprep.subr.bf16.mxu0 0
  %1117 = vmatpush1.bf16.msra.mxu0 0
  %1118 = vmatprep.subr.bf16.mxu0 0
  %1119 = vmatpush1.bf16.msra.mxu0 0
  %1120 = vmatprep.subr.bf16.mxu0 0
  %1121 = vmatpush1.bf16.msra.mxu0 0
  %1122 = vmatprep.subr.bf16.mxu0 0
  %1123 = vmatpush1.bf16.msra.mxu0 0
  %1124 = vmatprep.subr.bf16.mxu0 0
  %1125 = vmatpush1.bf16.msra.mxu0 0
  %1126 = vmatprep.subr.bf16.mxu0 0
  %1127 = vmatpush1.bf16.msra.mxu0 0
  %1128 = vmatprep.subr.bf16.mxu0 0
  %1129 = vmatpush1.bf16.msra.mxu0 0
  %1130 = vmatprep.subr.bf16.mxu0 0
  %1131 = vmatpush1.bf16.msra.mxu0 0
  %1132 = vmatprep.subr.bf16.mxu0 0
  %1133 = vmatpush1.bf16.msra.mxu0 0
  %1134 = vmatprep.subr.bf16.mxu0 0
  %1135 = vmatpush1.bf16.msra.mxu0 0
  %1136 = vmatprep.subr.bf16.mxu0 0
  %1137 = vmatpush1.bf16.msra.mxu0 0
  %1138 = vmatprep.subr.bf16.mxu0 0
  %1139 = vmatpush1.bf16.msra.mxu0 0
  %1140 = vmatprep.subr.bf16.mxu0 0
  %1141 = vmatpush1.bf16.msra.mxu0 0
  %1142 = vmatprep.subr.bf16.mxu0 0
  %1143 = vmatpush1.bf16.msra.mxu0 0
  %1144 = vmatprep.mubr.bf16.mxu0 0
  %1145 = vmatmul.mubr.bf16.gmra.mrb[0].mxu0 %v1110
  %v1146 = vpop.f32.mrb[0].mxu0
  %v1147 = vadd.f32 %v1065, %v1146
  %v1148 = vpop.f32.mrb[0].mxu0
  %v1149 = vpop.f32.mrb[0].mxu0
  %v1150 = vpop.f32.mrb[0].mxu0
  %1151 = vdwg.mxu0
  %v1152 = vtanh.pop %v1104
  %v1153 = vtanh.pop %v1147
  %v1154 = vmul.f32 %v1152, 0.5
  %v1155 = vmul.f32 %v1153, 0.5
  %v1156 = vadd.f32 %v1154, 0.5
  %v1157 = vadd.f32 %v1155, 0.5
  %1159 = vrot.lane.b32.xlu0 %v1060, 32
  %v1160 = vpop.permute.xlu0 %1159
  %v1162 = vmul.f32 %v1156, %v1160
  %1164 = vrot.lane.b32.xlu0 %v1152, 32
  %v1165 = vpop.permute.xlu0 %1164
  %v1167 = vmul.f32 %v1156, %v1165
  %1169 = vrot.lane.b32.xlu0 %v1167, 32
  %v1170 = vpop.permute.xlu0 %1169
  %v1172 = vadd.f32 %v1162, %v1170
  %1174 = vrot.lane.b32.xlu0 %v1061, 32
  %v1175 = vpop.permute.xlu0 %1174
  %v1177 = vmul.f32 %v1157, %v1175
  %1179 = vrot.lane.b32.xlu0 %v1153, 32
  %v1180 = vpop.permute.xlu0 %1179
  %v1182 = vmul.f32 %v1157, %v1180
  %1184 = vrot.lane.b32.xlu0 %v1182, 32
  %v1185 = vpop.permute.xlu0 %1184
  %v1187 = vadd.f32 %v1177, %v1185
  %v1188 = vtanh.pop %v1172
  %1190 = vrot.lane.b32.xlu0 %v1188, 32
  %v1191 = vpop.permute.xlu0 %1190
  %v1193 = vmul.f32 %v1156, %v1191
  %v1194 = vtanh.pop %v1187
  %1196 = vrot.lane.b32.xlu0 %v1194, 32
  %v1197 = vpop.permute.xlu0 %1196
  %v1199 = vmul.f32 %v1157, %v1197
  %v1200 = vld [vmem:[%s992] sm:$0xff]
  %v1201 = vld [vmem:[%s990] sm:$0xff]
  %1203 = vrot.lane.b32.xlu0 %v1058, 64
  %v1204 = vpop.permute.xlu0 %1203
  %v1206 = vsub.f32 %v1193, %v1204
  %1208 = vset.pattern.permute.xlu0 0
  %1209 = vperm.xlu0 %1208, %v1200
  %v1210 = vpop.permute.xlu0 %1209
  %v1212 = vmul.f32 %v1210, %v1206
  %1214 = vrot.lane.b32.xlu0 %v1212, 64
  %v1215 = vpop.permute.xlu0 %1214
  %v1217 = vadd.f32 %v1058, %v1215
  %1218 = vst.msk [vmem:[#allocation5] sm:$0xff] %vm78, %v1217
  %1220 = vrot.lane.b32.xlu0 %v1059, 64
  %v1221 = vpop.permute.xlu0 %1220
  %v1223 = vsub.f32 %v1199, %v1221
  %1225 = vset.pattern.permute.xlu0 0
  %1226 = vperm.xlu0 %1225, %v1201
  %v1227 = vpop.permute.xlu0 %1226
  %v1229 = vmul.f32 %v1227, %v1223
  %1231 = vrot.lane.b32.xlu0 %v1229, 64
  %v1232 = vpop.permute.xlu0 %1231
  %v1234 = vadd.f32 %v1059, %v1232
  %1235 = vst.msk [vmem:[#allocation6] sm:$0xff] %vm78, %v1234
  %v1236 = vsub.f32 %v1172, %v1160
  %v1237 = vmul.f32 %v1210, %v1236
  %1239 = vrot.lane.b32.xlu0 %v1237, 96
  %v1240 = vpop.permute.xlu0 %1239
  %v1242 = vadd.f32 %v1060, %v1240
  %1243 = vst.msk [vmem:[#allocation7] sm:$0xff] %vm78, %v1242
  %v1244 = vsub.f32 %v1187, %v1175
  %v1245 = vmul.f32 %v1227, %v1244
  %1247 = vrot.lane.b32.xlu0 %v1245, 96
  %v1248 = vpop.permute.xlu0 %1247
  %v1250 = vadd.f32 %v1061, %v1248
  %1251 = vst.msk [vmem:[#allocation8] sm:$0xff] %vm78, %v1250
  %v1252 = vmul.f32 %v1210, %v1193
  %1254 = vrot.lane.b32.xlu0 %v1252, 64
  %v1255 = vpop.permute.xlu0 %1254
  %s1257 = scalar_lea.vmem [#allocation3], 32
  %1258 = vst.msk [vmem:[%s1257] sm:$0xff] %vm78, %v1255
  %v1259 = vmul.f32 %v1227, %v1199
  %1261 = vrot.lane.b32.xlu0 %v1259, 64
  %v1262 = vpop.permute.xlu0 %1261
  %s1264 = scalar_lea.vmem [#allocation4], 24
  %1265 = vst.msk [vmem:[%s1264] sm:$0xff] %vm78, %v1262
  %v1266 = vld [vmem:[#allocation5] sm:$0xff]
  %v1267 = vld [vmem:[#allocation6] sm:$0xff]
  %v1268 = vld [vmem:[#allocation7] sm:$0xff]
  %v1269 = vld [vmem:[#allocation8] sm:$0xff]
  %v1270 = vpack.c.bf16 %v1266, %v1266
  %v1271 = vpack.c.bf16 %v1267, %v1267
  %v1272 = vld [vmem:[%s638] sm:$0xff]
  %v1273 = vld [vmem:[%s634 + $0x8] sm:$0xff]
  %v1275 = vsel %vm78, %v1270, 0
  %1277 = vmatprep.subr.bf16.mxu0 0
  %1278 = vmatpush1.bf16.msra.mxu0 %v184
  %1279 = vmatprep.subr.bf16.mxu0 0
  %1280 = vmatpush1.bf16.msra.mxu0 %v185
  %1281 = vmatprep.subr.bf16.mxu0 0
  %1282 = vmatpush1.bf16.msra.mxu0 0
  %1283 = vmatprep.subr.bf16.mxu0 0
  %1284 = vmatpush1.bf16.msra.mxu0 0
  %1285 = vmatprep.subr.bf16.mxu0 0
  %1286 = vmatpush1.bf16.msra.mxu0 0
  %1287 = vmatprep.subr.bf16.mxu0 0
  %1288 = vmatpush1.bf16.msra.mxu0 0
  %1289 = vmatprep.subr.bf16.mxu0 0
  %1290 = vmatpush1.bf16.msra.mxu0 0
  %1291 = vmatprep.subr.bf16.mxu0 0
  %1292 = vmatpush1.bf16.msra.mxu0 0
  %1293 = vmatprep.subr.bf16.mxu0 0
  %1294 = vmatpush1.bf16.msra.mxu0 0
  %1295 = vmatprep.subr.bf16.mxu0 0
  %1296 = vmatpush1.bf16.msra.mxu0 0
  %1297 = vmatprep.subr.bf16.mxu0 0
  %1298 = vmatpush1.bf16.msra.mxu0 0
  %1299 = vmatprep.subr.bf16.mxu0 0
  %1300 = vmatpush1.bf16.msra.mxu0 0
  %1301 = vmatprep.subr.bf16.mxu0 0
  %1302 = vmatpush1.bf16.msra.mxu0 0
  %1303 = vmatprep.subr.bf16.mxu0 0
  %1304 = vmatpush1.bf16.msra.mxu0 0
  %1305 = vmatprep.subr.bf16.mxu0 0
  %1306 = vmatpush1.bf16.msra.mxu0 0
  %1307 = vmatprep.subr.bf16.mxu0 0
  %1308 = vmatpush1.bf16.msra.mxu0 0
  %1309 = vmatprep.mubr.bf16.mxu0 0
  %1310 = vmatmul.mubr.bf16.gmra.mrb[0].mxu0 %v1275
  %v1311 = vpop.f32.mrb[0].mxu0
  %v1312 = vadd.f32 %v1272, %v1311
  %v1313 = vpop.f32.mrb[0].mxu0
  %v1314 = vpop.f32.mrb[0].mxu0
  %v1315 = vpop.f32.mrb[0].mxu0
  %1316 = vdwg.mxu0
  %v1318 = vsel %vm78, %v1271, 0
  %1320 = vmatprep.subr.bf16.mxu0 0
  %1321 = vmatpush1.bf16.msra.mxu0 %v190
  %1322 = vmatprep.subr.bf16.mxu0 0
  %1323 = vmatpush1.bf16.msra.mxu0 %v191
  %1324 = vmatprep.subr.bf16.mxu0 0
  %1325 = vmatpush1.bf16.msra.mxu0 0
  %1326 = vmatprep.subr.bf16.mxu0 0
  %1327 = vmatpush1.bf16.msra.mxu0 0
  %1328 = vmatprep.subr.bf16.mxu0 0
  %1329 = vmatpush1.bf16.msra.mxu0 0
  %1330 = vmatprep.subr.bf16.mxu0 0
  %1331 = vmatpush1.bf16.msra.mxu0 0
  %1332 = vmatprep.subr.bf16.mxu0 0
  %1333 = vmatpush1.bf16.msra.mxu0 0
  %1334 = vmatprep.subr.bf16.mxu0 0
  %1335 = vmatpush1.bf16.msra.mxu0 0
  %1336 = vmatprep.subr.bf16.mxu0 0
  %1337 = vmatpush1.bf16.msra.mxu0 0
  %1338 = vmatprep.subr.bf16.mxu0 0
  %1339 = vmatpush1.bf16.msra.mxu0 0
  %1340 = vmatprep.subr.bf16.mxu0 0
  %1341 = vmatpush1.bf16.msra.mxu0 0
  %1342 = vmatprep.subr.bf16.mxu0 0
  %1343 = vmatpush1.bf16.msra.mxu0 0
  %1344 = vmatprep.subr.bf16.mxu0 0
  %1345 = vmatpush1.bf16.msra.mxu0 0
  %1346 = vmatprep.subr.bf16.mxu0 0
  %1347 = vmatpush1.bf16.msra.mxu0 0
  %1348 = vmatprep.subr.bf16.mxu0 0
  %1349 = vmatpush1.bf16.msra.mxu0 0
  %1350 = vmatprep.subr.bf16.mxu0 0
  %1351 = vmatpush1.bf16.msra.mxu0 0
  %1352 = vmatprep.mubr.bf16.mxu0 0
  %1353 = vmatmul.mubr.bf16.gmra.mrb[0].mxu0 %v1318
  %v1354 = vpop.f32.mrb[0].mxu0
  %v1355 = vadd.f32 %v1273, %v1354
  %v1356 = vpop.f32.mrb[0].mxu0
  %v1357 = vpop.f32.mrb[0].mxu0
  %v1358 = vpop.f32.mrb[0].mxu0
  %1359 = vdwg.mxu0
  %v1360 = vtanh.pop %v1312
  %v1361 = vtanh.pop %v1355
  %v1362 = vmul.f32 %v1360, 0.5
  %v1363 = vmul.f32 %v1361, 0.5
  %v1364 = vadd.f32 %v1362, 0.5
  %v1365 = vadd.f32 %v1363, 0.5
  %1367 = vrot.lane.b32.xlu0 %v1268, 32
  %v1368 = vpop.permute.xlu0 %1367
  %v1370 = vmul.f32 %v1364, %v1368
  %1372 = vrot.lane.b32.xlu0 %v1360, 32
  %v1373 = vpop.permute.xlu0 %1372
  %v1375 = vmul.f32 %v1364, %v1373
  %1377 = vrot.lane.b32.xlu0 %v1375, 32
  %v1378 = vpop.permute.xlu0 %1377
  %v1380 = vadd.f32 %v1370, %v1378
  %1382 = vrot.lane.b32.xlu0 %v1269, 32
  %v1383 = vpop.permute.xlu0 %1382
  %v1385 = vmul.f32 %v1365, %v1383
  %1387 = vrot.lane.b32.xlu0 %v1361, 32
  %v1388 = vpop.permute.xlu0 %1387
  %v1390 = vmul.f32 %v1365, %v1388
  %1392 = vrot.lane.b32.xlu0 %v1390, 32
  %v1393 = vpop.permute.xlu0 %1392
  %v1395 = vadd.f32 %v1385, %v1393
  %v1396 = vtanh.pop %v1380
  %1398 = vrot.lane.b32.xlu0 %v1396, 32
  %v1399 = vpop.permute.xlu0 %1398
  %v1401 = vmul.f32 %v1364, %v1399
  %v1402 = vtanh.pop %v1395
  %1404 = vrot.lane.b32.xlu0 %v1402, 32
  %v1405 = vpop.permute.xlu0 %1404
  %v1407 = vmul.f32 %v1365, %v1405
  %v1408 = vld [vmem:[%s776] sm:$0xff]
  %v1409 = vld [vmem:[%s774] sm:$0xff]
  %1411 = vrot.lane.b32.xlu0 %v1266, 64
  %v1412 = vpop.permute.xlu0 %1411
  %v1414 = vsub.f32 %v1401, %v1412
  %1416 = vset.pattern.permute.xlu0 0
  %1417 = vperm.xlu0 %1416, %v1408
  %v1418 = vpop.permute.xlu0 %1417
  %v1420 = vmul.f32 %v1418, %v1414
  %1422 = vrot.lane.b32.xlu0 %v1420, 64
  %v1423 = vpop.permute.xlu0 %1422
  %v1425 = vadd.f32 %v1266, %v1423
  %1426 = vst.msk [vmem:[#allocation5] sm:$0xff] %vm78, %v1425
  %1428 = vrot.lane.b32.xlu0 %v1267, 64
  %v1429 = vpop.permute.xlu0 %1428
  %v1431 = vsub.f32 %v1407, %v1429
  %1433 = vset.pattern.permute.xlu0 0
  %1434 = vperm.xlu0 %1433, %v1409
  %v1435 = vpop.permute.xlu0 %1434
  %v1437 = vmul.f32 %v1435, %v1431
  %1439 = vrot.lane.b32.xlu0 %v1437, 64
  %v1440 = vpop.permute.xlu0 %1439
  %v1442 = vadd.f32 %v1267, %v1440
  %1443 = vst.msk [vmem:[#allocation6] sm:$0xff] %vm78, %v1442
  %v1444 = vsub.f32 %v1380, %v1368
  %v1445 = vmul.f32 %v1418, %v1444
  %1447 = vrot.lane.b32.xlu0 %v1445, 96
  %v1448 = vpop.permute.xlu0 %1447
  %v1450 = vadd.f32 %v1268, %v1448
  %1451 = vst.msk [vmem:[#allocation7] sm:$0xff] %vm78, %v1450
  %v1452 = vsub.f32 %v1395, %v1383
  %v1453 = vmul.f32 %v1435, %v1452
  %1455 = vrot.lane.b32.xlu0 %v1453, 96
  %v1456 = vpop.permute.xlu0 %1455
  %v1458 = vadd.f32 %v1269, %v1456
  %1459 = vst.msk [vmem:[#allocation8] sm:$0xff] %vm78, %v1458
  %v1460 = vmul.f32 %v1418, %v1401
  %1462 = vrot.lane.b32.xlu0 %v1460, 64
  %v1463 = vpop.permute.xlu0 %1462
  %s1465 = scalar_lea.vmem [#allocation3], 40
  %1466 = vst.msk [vmem:[%s1465] sm:$0xff] %vm78, %v1463
  %v1467 = vmul.f32 %v1435, %v1407
  %1469 = vrot.lane.b32.xlu0 %v1467, 64
  %v1470 = vpop.permute.xlu0 %1469
  %s1472 = scalar_lea.vmem [#allocation4], 16
  %1473 = vst.msk [vmem:[%s1472] sm:$0xff] %vm78, %v1470
  %v1474 = vld [vmem:[#allocation5] sm:$0xff]
  %v1475 = vld [vmem:[#allocation6] sm:$0xff]
  %v1476 = vld [vmem:[#allocation7] sm:$0xff]
  %v1477 = vld [vmem:[#allocation8] sm:$0xff]
  %v1478 = vpack.c.bf16 %v1474, %v1474
  %v1479 = vpack.c.bf16 %v1475, %v1475
  %v1480 = vld [vmem:[%s422] sm:$0xff]
  %v1481 = vld [vmem:[%s418 + $0x8] sm:$0xff]
  %v1483 = vsel %vm78, %v1478, 0
  %1485 = vmatprep.subr.bf16.mxu0 0
  %1486 = vmatpush1.bf16.msra.mxu0 %v184
  %1487 = vmatprep.subr.bf16.mxu0 0
  %1488 = vmatpush1.bf16.msra.mxu0 %v185
  %1489 = vmatprep.subr.bf16.mxu0 0
  %1490 = vmatpush1.bf16.msra.mxu0 0
  %1491 = vmatprep.subr.bf16.mxu0 0
  %1492 = vmatpush1.bf16.msra.mxu0 0
  %1493 = vmatprep.subr.bf16.mxu0 0
  %1494 = vmatpush1.bf16.msra.mxu0 0
  %1495 = vmatprep.subr.bf16.mxu0 0
  %1496 = vmatpush1.bf16.msra.mxu0 0
  %1497 = vmatprep.subr.bf16.mxu0 0
  %1498 = vmatpush1.bf16.msra.mxu0 0
  %1499 = vmatprep.subr.bf16.mxu0 0
  %1500 = vmatpush1.bf16.msra.mxu0 0
  %1501 = vmatprep.subr.bf16.mxu0 0
  %1502 = vmatpush1.bf16.msra.mxu0 0
  %1503 = vmatprep.subr.bf16.mxu0 0
  %1504 = vmatpush1.bf16.msra.mxu0 0
  %1505 = vmatprep.subr.bf16.mxu0 0
  %1506 = vmatpush1.bf16.msra.mxu0 0
  %1507 = vmatprep.subr.bf16.mxu0 0
  %1508 = vmatpush1.bf16.msra.mxu0 0
  %1509 = vmatprep.subr.bf16.mxu0 0
  %1510 = vmatpush1.bf16.msra.mxu0 0
  %1511 = vmatprep.subr.bf16.mxu0 0
  %1512 = vmatpush1.bf16.msra.mxu0 0
  %1513 = vmatprep.subr.bf16.mxu0 0
  %1514 = vmatpush1.bf16.msra.mxu0 0
  %1515 = vmatprep.subr.bf16.mxu0 0
  %1516 = vmatpush1.bf16.msra.mxu0 0
  %1517 = vmatprep.mubr.bf16.mxu0 0
  %1518 = vmatmul.mubr.bf16.gmra.mrb[0].mxu0 %v1483
  %v1519 = vpop.f32.mrb[0].mxu0
  %v1520 = vadd.f32 %v1480, %v1519
  %v1521 = vpop.f32.mrb[0].mxu0
  %v1522 = vpop.f32.mrb[0].mxu0
  %v1523 = vpop.f32.mrb[0].mxu0
  %1524 = vdwg.mxu0
  %v1526 = vsel %vm78, %v1479, 0
  %1528 = vmatprep.subr.bf16.mxu0 0
  %1529 = vmatpush1.bf16.msra.mxu0 %v190
  %1530 = vmatprep.subr.bf16.mxu0 0
  %1531 = vmatpush1.bf16.msra.mxu0 %v191
  %1532 = vmatprep.subr.bf16.mxu0 0
  %1533 = vmatpush1.bf16.msra.mxu0 0
  %1534 = vmatprep.subr.bf16.mxu0 0
  %1535 = vmatpush1.bf16.msra.mxu0 0
  %1536 = vmatprep.subr.bf16.mxu0 0
  %1537 = vmatpush1.bf16.msra.mxu0 0
  %1538 = vmatprep.subr.bf16.mxu0 0
  %1539 = vmatpush1.bf16.msra.mxu0 0
  %1540 = vmatprep.subr.bf16.mxu0 0
  %1541 = vmatpush1.bf16.msra.mxu0 0
  %1542 = vmatprep.subr.bf16.mxu0 0
  %1543 = vmatpush1.bf16.msra.mxu0 0
  %1544 = vmatprep.subr.bf16.mxu0 0
  %1545 = vmatpush1.bf16.msra.mxu0 0
  %1546 = vmatprep.subr.bf16.mxu0 0
  %1547 = vmatpush1.bf16.msra.mxu0 0
  %1548 = vmatprep.subr.bf16.mxu0 0
  %1549 = vmatpush1.bf16.msra.mxu0 0
  %1550 = vmatprep.subr.bf16.mxu0 0
  %1551 = vmatpush1.bf16.msra.mxu0 0
  %1552 = vmatprep.subr.bf16.mxu0 0
  %1553 = vmatpush1.bf16.msra.mxu0 0
  %1554 = vmatprep.subr.bf16.mxu0 0
  %1555 = vmatpush1.bf16.msra.mxu0 0
  %1556 = vmatprep.subr.bf16.mxu0 0
  %1557 = vmatpush1.bf16.msra.mxu0 0
  %1558 = vmatprep.subr.bf16.mxu0 0
  %1559 = vmatpush1.bf16.msra.mxu0 0
  %1560 = vmatprep.mubr.bf16.mxu0 0
  %1561 = vmatmul.mubr.bf16.gmra.mrb[0].mxu0 %v1526
  %v1562 = vpop.f32.mrb[0].mxu0
  %v1563 = vadd.f32 %v1481, %v1562
  %v1564 = vpop.f32.mrb[0].mxu0
  %v1565 = vpop.f32.mrb[0].mxu0
  %v1566 = vpop.f32.mrb[0].mxu0
  %1567 = vdwg.mxu0
  %v1568 = vtanh.pop %v1520
  %v1569 = vtanh.pop %v1563
  %v1570 = vmul.f32 %v1568, 0.5
  %v1571 = vmul.f32 %v1569, 0.5
  %v1572 = vadd.f32 %v1570, 0.5
  %v1573 = vadd.f32 %v1571, 0.5
  %1575 = vrot.lane.b32.xlu0 %v1476, 32
  %v1576 = vpop.permute.xlu0 %1575
  %v1578 = vmul.f32 %v1572, %v1576
  %1580 = vrot.lane.b32.xlu0 %v1568, 32
  %v1581 = vpop.permute.xlu0 %1580
  %v1583 = vmul.f32 %v1572, %v1581
  %1585 = vrot.lane.b32.xlu0 %v1583, 32
  %v1586 = vpop.permute.xlu0 %1585
  %v1588 = vadd.f32 %v1578, %v1586
  %1590 = vrot.lane.b32.xlu0 %v1477, 32
  %v1591 = vpop.permute.xlu0 %1590
  %v1593 = vmul.f32 %v1573, %v1591
  %1595 = vrot.lane.b32.xlu0 %v1569, 32
  %v1596 = vpop.permute.xlu0 %1595
  %v1598 = vmul.f32 %v1573, %v1596
  %1600 = vrot.lane.b32.xlu0 %v1598, 32
  %v1601 = vpop.permute.xlu0 %1600
  %v1603 = vadd.f32 %v1593, %v1601
  %v1604 = vtanh.pop %v1588
  %1606 = vrot.lane.b32.xlu0 %v1604, 32
  %v1607 = vpop.permute.xlu0 %1606
  %v1609 = vmul.f32 %v1572, %v1607
  %v1610 = vtanh.pop %v1603
  %1612 = vrot.lane.b32.xlu0 %v1610, 32
  %v1613 = vpop.permute.xlu0 %1612
  %v1615 = vmul.f32 %v1573, %v1613
  %v1616 = vld [vmem:[%s560] sm:$0xff]
  %v1617 = vld [vmem:[%s558] sm:$0xff]
  %1619 = vrot.lane.b32.xlu0 %v1474, 64
  %v1620 = vpop.permute.xlu0 %1619
  %v1622 = vsub.f32 %v1609, %v1620
  %1624 = vset.pattern.permute.xlu0 0
  %1625 = vperm.xlu0 %1624, %v1616
  %v1626 = vpop.permute.xlu0 %1625
  %v1628 = vmul.f32 %v1626, %v1622
  %1630 = vrot.lane.b32.xlu0 %v1628, 64
  %v1631 = vpop.permute.xlu0 %1630
  %v1633 = vadd.f32 %v1474, %v1631
  %1634 = vst.msk [vmem:[#allocation5] sm:$0xff] %vm78, %v1633
  %1636 = vrot.lane.b32.xlu0 %v1475, 64
  %v1637 = vpop.permute.xlu0 %1636
  %v1639 = vsub.f32 %v1615, %v1637
  %1641 = vset.pattern.permute.xlu0 0
  %1642 = vperm.xlu0 %1641, %v1617
  %v1643 = vpop.permute.xlu0 %1642
  %v1645 = vmul.f32 %v1643, %v1639
  %1647 = vrot.lane.b32.xlu0 %v1645, 64
  %v1648 = vpop.permute.xlu0 %1647
  %v1650 = vadd.f32 %v1475, %v1648
  %1651 = vst.msk [vmem:[#allocation6] sm:$0xff] %vm78, %v1650
  %v1652 = vsub.f32 %v1588, %v1576
  %v1653 = vmul.f32 %v1626, %v1652
  %1655 = vrot.lane.b32.xlu0 %v1653, 96
  %v1656 = vpop.permute.xlu0 %1655
  %v1658 = vadd.f32 %v1476, %v1656
  %1659 = vst.msk [vmem:[#allocation7] sm:$0xff] %vm78, %v1658
  %v1660 = vsub.f32 %v1603, %v1591
  %v1661 = vmul.f32 %v1643, %v1660
  %1663 = vrot.lane.b32.xlu0 %v1661, 96
  %v1664 = vpop.permute.xlu0 %1663
  %v1666 = vadd.f32 %v1477, %v1664
  %1667 = vst.msk [vmem:[#allocation8] sm:$0xff] %vm78, %v1666
  %v1668 = vmul.f32 %v1626, %v1609
  %1670 = vrot.lane.b32.xlu0 %v1668, 64
  %v1671 = vpop.permute.xlu0 %1670
  %s1673 = scalar_lea.vmem [#allocation3], 48
  %1674 = vst.msk [vmem:[%s1673] sm:$0xff] %vm78, %v1671
  %v1675 = vmul.f32 %v1643, %v1615
  %1677 = vrot.lane.b32.xlu0 %v1675, 64
  %v1678 = vpop.permute.xlu0 %1677
  %s1680 = scalar_lea.vmem [#allocation4], 8
  %1681 = vst.msk [vmem:[%s1680] sm:$0xff] %vm78, %v1678
  %v1682 = vld [vmem:[#allocation5] sm:$0xff]
  %v1683 = vld [vmem:[#allocation6] sm:$0xff]
  %v1684 = vld [vmem:[#allocation7] sm:$0xff]
  %v1685 = vld [vmem:[#allocation8] sm:$0xff]
  %v1686 = vpack.c.bf16 %v1682, %v1682
  %v1687 = vpack.c.bf16 %v1683, %v1683
  %v1688 = vld [vmem:[%s208] sm:$0xff]
  %v1689 = vld [vmem:[%s204 + $0x8] sm:$0xff]
  %v1691 = vsel %vm78, %v1686, 0
  %1693 = vmatprep.subr.bf16.mxu0 0
  %1694 = vmatpush1.bf16.msra.mxu0 %v184
  %1695 = vmatprep.subr.bf16.mxu0 0
  %1696 = vmatpush1.bf16.msra.mxu0 %v185
  %1697 = vmatprep.subr.bf16.mxu0 0
  %1698 = vmatpush1.bf16.msra.mxu0 0
  %1699 = vmatprep.subr.bf16.mxu0 0
  %1700 = vmatpush1.bf16.msra.mxu0 0
  %1701 = vmatprep.subr.bf16.mxu0 0
  %1702 = vmatpush1.bf16.msra.mxu0 0
  %1703 = vmatprep.subr.bf16.mxu0 0
  %1704 = vmatpush1.bf16.msra.mxu0 0
  %1705 = vmatprep.subr.bf16.mxu0 0
  %1706 = vmatpush1.bf16.msra.mxu0 0
  %1707 = vmatprep.subr.bf16.mxu0 0
  %1708 = vmatpush1.bf16.msra.mxu0 0
  %1709 = vmatprep.subr.bf16.mxu0 0
  %1710 = vmatpush1.bf16.msra.mxu0 0
  %1711 = vmatprep.subr.bf16.mxu0 0
  %1712 = vmatpush1.bf16.msra.mxu0 0
  %1713 = vmatprep.subr.bf16.mxu0 0
  %1714 = vmatpush1.bf16.msra.mxu0 0
  %1715 = vmatprep.subr.bf16.mxu0 0
  %1716 = vmatpush1.bf16.msra.mxu0 0
  %1717 = vmatprep.subr.bf16.mxu0 0
  %1718 = vmatpush1.bf16.msra.mxu0 0
  %1719 = vmatprep.subr.bf16.mxu0 0
  %1720 = vmatpush1.bf16.msra.mxu0 0
  %1721 = vmatprep.subr.bf16.mxu0 0
  %1722 = vmatpush1.bf16.msra.mxu0 0
  %1723 = vmatprep.subr.bf16.mxu0 0
  %1724 = vmatpush1.bf16.msra.mxu0 0
  %1725 = vmatprep.mubr.bf16.mxu0 0
  %1726 = vmatmul.mubr.bf16.gmra.mrb[0].mxu0 %v1691
  %v1727 = vpop.f32.mrb[0].mxu0
  %v1728 = vadd.f32 %v1688, %v1727
  %v1729 = vpop.f32.mrb[0].mxu0
  %v1730 = vpop.f32.mrb[0].mxu0
  %v1731 = vpop.f32.mrb[0].mxu0
  %1732 = vdwg.mxu0
  %v1734 = vsel %vm78, %v1687, 0
  %1736 = vmatprep.subr.bf16.mxu0 0
  %1737 = vmatpush1.bf16.msra.mxu0 %v190
  %1738 = vmatprep.subr.bf16.mxu0 0
  %1739 = vmatpush1.bf16.msra.mxu0 %v191
  %1740 = vmatprep.subr.bf16.mxu0 0
  %1741 = vmatpush1.bf16.msra.mxu0 0
  %1742 = vmatprep.subr.bf16.mxu0 0
  %1743 = vmatpush1.bf16.msra.mxu0 0
  %1744 = vmatprep.subr.bf16.mxu0 0
  %1745 = vmatpush1.bf16.msra.mxu0 0
  %1746 = vmatprep.subr.bf16.mxu0 0
  %1747 = vmatpush1.bf16.msra.mxu0 0
  %1748 = vmatprep.subr.bf16.mxu0 0
  %1749 = vmatpush1.bf16.msra.mxu0 0
  %1750 = vmatprep.subr.bf16.mxu0 0
  %1751 = vmatpush1.bf16.msra.mxu0 0
  %1752 = vmatprep.subr.bf16.mxu0 0
  %1753 = vmatpush1.bf16.msra.mxu0 0
  %1754 = vmatprep.subr.bf16.mxu0 0
  %1755 = vmatpush1.bf16.msra.mxu0 0
  %1756 = vmatprep.subr.bf16.mxu0 0
  %1757 = vmatpush1.bf16.msra.mxu0 0
  %1758 = vmatprep.subr.bf16.mxu0 0
  %1759 = vmatpush1.bf16.msra.mxu0 0
  %1760 = vmatprep.subr.bf16.mxu0 0
  %1761 = vmatpush1.bf16.msra.mxu0 0
  %1762 = vmatprep.subr.bf16.mxu0 0
  %1763 = vmatpush1.bf16.msra.mxu0 0
  %1764 = vmatprep.subr.bf16.mxu0 0
  %1765 = vmatpush1.bf16.msra.mxu0 0
  %1766 = vmatprep.subr.bf16.mxu0 0
  %1767 = vmatpush1.bf16.msra.mxu0 0
  %1768 = vmatprep.mubr.bf16.mxu0 0
  %1769 = vmatmul.mubr.bf16.gmra.mrb[0].mxu0 %v1734
  %v1770 = vpop.f32.mrb[0].mxu0
  %v1771 = vadd.f32 %v1689, %v1770
  %v1772 = vpop.f32.mrb[0].mxu0
  %v1773 = vpop.f32.mrb[0].mxu0
  %v1774 = vpop.f32.mrb[0].mxu0
  %1775 = vdwg.mxu0
  %v1776 = vtanh.pop %v1728
  %v1777 = vtanh.pop %v1771
  %v1778 = vmul.f32 %v1776, 0.5
  %v1779 = vmul.f32 %v1777, 0.5
  %v1780 = vadd.f32 %v1778, 0.5
  %v1781 = vadd.f32 %v1779, 0.5
  %1783 = vrot.lane.b32.xlu0 %v1684, 32
  %v1784 = vpop.permute.xlu0 %1783
  %v1786 = vmul.f32 %v1780, %v1784
  %1788 = vrot.lane.b32.xlu0 %v1776, 32
  %v1789 = vpop.permute.xlu0 %1788
  %v1791 = vmul.f32 %v1780, %v1789
  %1793 = vrot.lane.b32.xlu0 %v1791, 32
  %v1794 = vpop.permute.xlu0 %1793
  %v1796 = vadd.f32 %v1786, %v1794
  %1798 = vrot.lane.b32.xlu0 %v1685, 32
  %v1799 = vpop.permute.xlu0 %1798
  %v1801 = vmul.f32 %v1781, %v1799
  %1803 = vrot.lane.b32.xlu0 %v1777, 32
  %v1804 = vpop.permute.xlu0 %1803
  %v1806 = vmul.f32 %v1781, %v1804
  %1808 = vrot.lane.b32.xlu0 %v1806, 32
  %v1809 = vpop.permute.xlu0 %1808
  %v1811 = vadd.f32 %v1801, %v1809
  %v1812 = vtanh.pop %v1796
  %1814 = vrot.lane.b32.xlu0 %v1812, 32
  %v1815 = vpop.permute.xlu0 %1814
  %v1817 = vmul.f32 %v1780, %v1815
  %v1818 = vtanh.pop %v1811
  %1820 = vrot.lane.b32.xlu0 %v1818, 32
  %v1821 = vpop.permute.xlu0 %1820
  %v1823 = vmul.f32 %v1781, %v1821
  %v1824 = vld [vmem:[%s345] sm:$0xff]
  %v1825 = vld [vmem:[%s1] sm:$0xff]
  %1827 = vrot.lane.b32.xlu0 %v1682, 64
  %v1828 = vpop.permute.xlu0 %1827
  %v1830 = vsub.f32 %v1817, %v1828
  %1832 = vset.pattern.permute.xlu0 0
  %1833 = vperm.xlu0 %1832, %v1824
  %v1834 = vpop.permute.xlu0 %1833
  %v1836 = vmul.f32 %v1834, %v1830
  %1838 = vrot.lane.b32.xlu0 %v1836, 64
  %v1839 = vpop.permute.xlu0 %1838
  %v1841 = vadd.f32 %v1682, %v1839
  %1842 = vst.msk [vmem:[#allocation5] sm:$0xff] %vm78, %v1841
  %1844 = vrot.lane.b32.xlu0 %v1683, 64
  %v1845 = vpop.permute.xlu0 %1844
  %v1847 = vsub.f32 %v1823, %v1845
  %1849 = vset.pattern.permute.xlu0 0
  %1850 = vperm.xlu0 %1849, %v1825
  %v1851 = vpop.permute.xlu0 %1850
  %v1853 = vmul.f32 %v1851, %v1847
  %1855 = vrot.lane.b32.xlu0 %v1853, 64
  %v1856 = vpop.permute.xlu0 %1855
  %v1858 = vadd.f32 %v1683, %v1856
  %1859 = vst.msk [vmem:[#allocation6] sm:$0xff] %vm78, %v1858
  %v1860 = vsub.f32 %v1796, %v1784
  %v1861 = vmul.f32 %v1834, %v1860
  %1863 = vrot.lane.b32.xlu0 %v1861, 96
  %v1864 = vpop.permute.xlu0 %1863
  %v1866 = vadd.f32 %v1684, %v1864
  %1867 = vst.msk [vmem:[#allocation7] sm:$0xff] %vm78, %v1866
  %v1868 = vsub.f32 %v1811, %v1799
  %v1869 = vmul.f32 %v1851, %v1868
  %1871 = vrot.lane.b32.xlu0 %v1869, 96
  %v1872 = vpop.permute.xlu0 %1871
  %v1874 = vadd.f32 %v1685, %v1872
  %1875 = vst.msk [vmem:[#allocation8] sm:$0xff] %vm78, %v1874
  %v1876 = vmul.f32 %v1834, %v1817
  %1878 = vrot.lane.b32.xlu0 %v1876, 64
  %v1879 = vpop.permute.xlu0 %1878
  %s1881 = scalar_lea.vmem [#allocation3], 56
  %1882 = vst.msk [vmem:[%s1881] sm:$0xff] %vm78, %v1879
  %v1883 = vmul.f32 %v1851, %v1823
  %1885 = vrot.lane.b32.xlu0 %v1883, 64
  %v1886 = vpop.permute.xlu0 %1885
  %1888 = vst.msk [vmem:[#allocation4] sm:$0xff] %vm78, %v1886
  %v1889 = vld [vmem:[#allocation3] sm:$0xff]
  %v1890 = vld [vmem:[#allocation3 + $0x8] sm:$0xff]
  %v1891 = vld [vmem:[#allocation3 + $0x10] sm:$0xff]
  %v1892 = vld [vmem:[#allocation3 + $0x18] sm:$0xff]
  %v1893 = vld [vmem:[#allocation3 + $0x20] sm:$0xff]
  %v1894 = vld [vmem:[#allocation3 + $0x28] sm:$0xff]
  %v1895 = vld [vmem:[#allocation3 + $0x30] sm:$0xff]
  %v1896 = vld [vmem:[#allocation3 + $0x38] sm:$0xff]
  %v1897 = vpack.c.bf16 %v1890, %v1889
  %v1898 = vpack.c.bf16 %v1892, %v1891
  %v1899 = vpack.c.bf16 %v1894, %v1893
  %v1900 = vpack.c.bf16 %v1896, %v1895
  %v1901 = vld [vmem:[%s6] sm:$0xff]
  %v1902 = vld [vmem:[%s6 + $0x8] sm:$0xff]
  %v1903 = vld [vmem:[%s6 + $0x10] sm:$0xff]
  %v1904 = vld [vmem:[%s6 + $0x18] sm:$0xff]
  %v1905 = vpack.c.bf16 %v1902, %v1901
  %v1906 = vpack.c.bf16 %v1904, %v1903
  %v1907 = vld [vmem:[#allocation4] sm:$0xff]
  %v1908 = vld [vmem:[#allocation4 + $0x8] sm:$0xff]
  %v1909 = vld [vmem:[#allocation4 + $0x10] sm:$0xff]
  %v1910 = vld [vmem:[#allocation4 + $0x18] sm:$0xff]
  %v1911 = vld [vmem:[#allocation4 + $0x20] sm:$0xff]
  %v1912 = vld [vmem:[#allocation4 + $0x28] sm:$0xff]
  %v1913 = vld [vmem:[#allocation4 + $0x30] sm:$0xff]
  %v1914 = vld [vmem:[#allocation4 + $0x38] sm:$0xff]
  %v1915 = vpack.c.bf16 %v1908, %v1907
  %v1916 = vpack.c.bf16 %v1910, %v1909
  %v1917 = vpack.c.bf16 %v1912, %v1911
  %v1918 = vpack.c.bf16 %v1914, %v1913
  %v1919 = vld [vmem:[%s6 + $0x20] sm:$0xff]
  %v1920 = vld [vmem:[%s6 + $0x28] sm:$0xff]
  %v1921 = vld [vmem:[%s6 + $0x30] sm:$0xff]
  %v1922 = vld [vmem:[%s6 + $0x38] sm:$0xff]
  %v1923 = vpack.c.bf16 %v1920, %v1919
  %v1924 = vpack.c.bf16 %v1922, %v1921
  %v1926 = vsel %vm78, %v1915, 0
  %v1929 = vsel %vm78, %v1916, 0
  %v1932 = vsel %vm78, %v1917, 0
  %v1935 = vsel %vm78, %v1918, 0
  %1937 = vmatprep.subr.bf16.mxu0 0
  %1938 = vmatpush1.bf16.msra.mxu0 %v1923
  %1939 = vmatprep.subr.bf16.mxu0 0
  %1940 = vmatpush1.bf16.msra.mxu0 %v1924
  %1941 = vmatprep.subr.bf16.mxu0 0
  %1942 = vmatpush1.bf16.msra.mxu0 0
  %1943 = vmatprep.subr.bf16.mxu0 0
  %1944 = vmatpush1.bf16.msra.mxu0 0
  %1945 = vmatprep.subr.bf16.mxu0 0
  %1946 = vmatpush1.bf16.msra.mxu0 0
  %1947 = vmatprep.subr.bf16.mxu0 0
  %1948 = vmatpush1.bf16.msra.mxu0 0
  %1949 = vmatprep.subr.bf16.mxu0 0
  %1950 = vmatpush1.bf16.msra.mxu0 0
  %1951 = vmatprep.subr.bf16.mxu0 0
  %1952 = vmatpush1.bf16.msra.mxu0 0
  %1953 = vmatprep.subr.bf16.mxu0 0
  %1954 = vmatpush1.bf16.msra.mxu0 0
  %1955 = vmatprep.subr.bf16.mxu0 0
  %1956 = vmatpush1.bf16.msra.mxu0 0
  %1957 = vmatprep.subr.bf16.mxu0 0
  %1958 = vmatpush1.bf16.msra.mxu0 0
  %1959 = vmatprep.subr.bf16.mxu0 0
  %1960 = vmatpush1.bf16.msra.mxu0 0
  %1961 = vmatprep.subr.bf16.mxu0 0
  %1962 = vmatpush1.bf16.msra.mxu0 0
  %1963 = vmatprep.subr.bf16.mxu0 0
  %1964 = vmatpush1.bf16.msra.mxu0 0
  %1965 = vmatprep.subr.bf16.mxu0 0
  %1966 = vmatpush1.bf16.msra.mxu0 0
  %1967 = vmatprep.subr.bf16.mxu0 0
  %1968 = vmatpush1.bf16.msra.mxu0 0
  %1969 = vmatprep.mubr.bf16.mxu0 0
  %1970 = vmatmul.mubr.bf16.gmra.mrb[0].mxu0 %v1926
  %v1971 = vpop.f32.mrb[0].mxu0
  %v1972 = vadd.f32 0.0, %v1971
  %v1973 = vpop.f32.mrb[0].mxu0
  %v1974 = vpop.f32.mrb[0].mxu0
  %v1975 = vadd.f32 0.0, %v1974
  %v1976 = vpop.f32.mrb[0].mxu0
  %1977 = vmatprep.mubr.bf16.mxu0 0
  %1978 = vmatmul.mubr.bf16.gmra.mrb[0].mxu0 %v1929
  %v1979 = vpop.f32.mrb[0].mxu0
  %v1980 = vadd.f32 0.0, %v1979
  %v1981 = vpop.f32.mrb[0].mxu0
  %v1982 = vpop.f32.mrb[0].mxu0
  %v1983 = vadd.f32 0.0, %v1982
  %v1984 = vpop.f32.mrb[0].mxu0
  %1985 = vmatprep.mubr.bf16.mxu0 0
  %1986 = vmatmul.mubr.bf16.gmra.mrb[0].mxu0 %v1932
  %v1987 = vpop.f32.mrb[0].mxu0
  %v1988 = vadd.f32 0.0, %v1987
  %v1989 = vpop.f32.mrb[0].mxu0
  %v1990 = vpop.f32.mrb[0].mxu0
  %v1991 = vadd.f32 0.0, %v1990
  %v1992 = vpop.f32.mrb[0].mxu0
  %1993 = vmatprep.mubr.bf16.mxu0 0
  %1994 = vmatmul.mubr.bf16.gmra.mrb[0].mxu0 %v1935
  %v1995 = vpop.f32.mrb[0].mxu0
  %v1996 = vadd.f32 0.0, %v1995
  %v1997 = vpop.f32.mrb[0].mxu0
  %v1998 = vpop.f32.mrb[0].mxu0
  %v1999 = vadd.f32 0.0, %v1998
  %v2000 = vpop.f32.mrb[0].mxu0
  %2001 = vdwg.mxu0
  %v2003 = vsel %vm78, %v1897, 0
  %v2006 = vsel %vm78, %v1898, 0
  %v2009 = vsel %vm78, %v1899, 0
  %v2012 = vsel %vm78, %v1900, 0
  %2014 = vmatprep.subr.bf16.mxu0 0
  %2015 = vmatpush1.bf16.msra.mxu0 %v1905
  %2016 = vmatprep.subr.bf16.mxu0 0
  %2017 = vmatpush1.bf16.msra.mxu0 %v1906
  %2018 = vmatprep.subr.bf16.mxu0 0
  %2019 = vmatpush1.bf16.msra.mxu0 0
  %2020 = vmatprep.subr.bf16.mxu0 0
  %2021 = vmatpush1.bf16.msra.mxu0 0
  %2022 = vmatprep.subr.bf16.mxu0 0
  %2023 = vmatpush1.bf16.msra.mxu0 0
  %2024 = vmatprep.subr.bf16.mxu0 0
  %2025 = vmatpush1.bf16.msra.mxu0 0
  %2026 = vmatprep.subr.bf16.mxu0 0
  %2027 = vmatpush1.bf16.msra.mxu0 0
  %2028 = vmatprep.subr.bf16.mxu0 0
  %2029 = vmatpush1.bf16.msra.mxu0 0
  %2030 = vmatprep.subr.bf16.mxu0 0
  %2031 = vmatpush1.bf16.msra.mxu0 0
  %2032 = vmatprep.subr.bf16.mxu0 0
  %2033 = vmatpush1.bf16.msra.mxu0 0
  %2034 = vmatprep.subr.bf16.mxu0 0
  %2035 = vmatpush1.bf16.msra.mxu0 0
  %2036 = vmatprep.subr.bf16.mxu0 0
  %2037 = vmatpush1.bf16.msra.mxu0 0
  %2038 = vmatprep.subr.bf16.mxu0 0
  %2039 = vmatpush1.bf16.msra.mxu0 0
  %2040 = vmatprep.subr.bf16.mxu0 0
  %2041 = vmatpush1.bf16.msra.mxu0 0
  %2042 = vmatprep.subr.bf16.mxu0 0
  %2043 = vmatpush1.bf16.msra.mxu0 0
  %2044 = vmatprep.subr.bf16.mxu0 0
  %2045 = vmatpush1.bf16.msra.mxu0 0
  %2046 = vmatprep.mubr.bf16.mxu0 0
  %2047 = vmatmul.mubr.bf16.gmra.mrb[0].mxu0 %v2003
  %v2048 = vpop.f32.mrb[0].mxu0
  %v2049 = vadd.f32 %v1972, %v2048
  %v2050 = vpop.f32.mrb[0].mxu0
  %v2051 = vpop.f32.mrb[0].mxu0
  %v2052 = vadd.f32 %v1975, %v2051
  %v2053 = vpop.f32.mrb[0].mxu0
  %2054 = vmatprep.mubr.bf16.mxu0 0
  %2055 = vmatmul.mubr.bf16.gmra.mrb[0].mxu0 %v2006
  %v2056 = vpop.f32.mrb[0].mxu0
  %v2057 = vadd.f32 %v1980, %v2056
  %v2058 = vpop.f32.mrb[0].mxu0
  %v2059 = vpop.f32.mrb[0].mxu0
  %v2060 = vadd.f32 %v1983, %v2059
  %v2061 = vpop.f32.mrb[0].mxu0
  %2062 = vmatprep.mubr.bf16.mxu0 0
  %2063 = vmatmul.mubr.bf16.gmra.mrb[0].mxu0 %v2009
  %v2064 = vpop.f32.mrb[0].mxu0
  %v2065 = vadd.f32 %v1988, %v2064
  %v2066 = vpop.f32.mrb[0].mxu0
  %v2067 = vpop.f32.mrb[0].mxu0
  %v2068 = vadd.f32 %v1991, %v2067
  %v2069 = vpop.f32.mrb[0].mxu0
  %2070 = vmatprep.mubr.bf16.mxu0 0
  %2071 = vmatmul.mubr.bf16.gmra.mrb[0].mxu0 %v2012
  %v2072 = vpop.f32.mrb[0].mxu0
  %v2073 = vadd.f32 %v1996, %v2072
  %v2074 = vpop.f32.mrb[0].mxu0
  %v2075 = vpop.f32.mrb[0].mxu0
  %v2076 = vadd.f32 %v1999, %v2075
  %v2077 = vpop.f32.mrb[0].mxu0
  %2078 = vdwg.mxu0
  %v2079 = vld [vmem:[%s7] sm:$0x1]
  %v2081 = vlaneseq
  %v2082 = vshrl.u32 %v2081, 7
  %v2083 = vsub.s32 0, %v2082
  %v2084 = vrot.slane %v2079, %v2083
  %v2086 = vadd.f32 %v2049, %v2084
  %v2087 = vadd.f32 %v2052, %v2084
  %v2088 = vadd.f32 %v2057, %v2084
  %v2089 = vadd.f32 %v2060, %v2084
  %v2090 = vadd.f32 %v2065, %v2084
  %v2091 = vadd.f32 %v2068, %v2084
  %v2092 = vadd.f32 %v2073, %v2084
  %v2093 = vadd.f32 %v2076, %v2084
  %vm2094 = vcmask 64512
  %2095 = vst.msk [vmem:[#allocation9] sm:$0xff] %vm2094, %v2086
  %2096 = vst.msk [vmem:[#allocation9 + $0x8] sm:$0xff] %vm2094, %v2087
  %2097 = vst.msk [vmem:[#allocation9 + $0x10] sm:$0xff] %vm2094, %v2088
  %2098 = vst.msk [vmem:[#allocation9 + $0x18] sm:$0xff] %vm2094, %v2089
  %2099 = vst.msk [vmem:[#allocation9 + $0x20] sm:$0xff] %vm2094, %v2090
  %2100 = vst.msk [vmem:[#allocation9 + $0x28] sm:$0xff] %vm2094, %v2091
  %2101 = vst.msk [vmem:[#allocation9 + $0x30] sm:$0xff] %vm2094, %v2092
  %2102 = vst.msk [vmem:[#allocation9 + $0x38] sm:$0xff] %vm2094, %v2093
  %v2103 = vld [vmem:[%s8] sm:$0xff]
  %v2104 = vld [vmem:[%s9] sm:$0x1]
  %v2105 = vld [vmem:[#allocation9] sm:$0xff]
  %v2107 = vlaneseq
  %v2108 = vshrl.u32 %v2107, 7
  %v2109 = vsub.s32 0, %v2108
  %v2110 = vrot.slane %v2104, %v2109
  %v2112 = vadd.f32 %v2110, %v2105
  %2113 = vst.msk [vmem:[#allocation10] sm:$0xff] %vm2094, %v2112
  %2114 = vst.msk [vmem:[%s13] sm:$0xff] %vm2094, 0
  %s2115 = scalar_lea.vmem [#allocation9], 8
  %v2116 = vld [vmem:[%s2115] sm:$0xff]
  %v2117 = vld [vmem:[#allocation10] sm:$0xff]
  %2119 = vset.pattern.permute.xlu0 0
  %2120 = vperm.xlu0 %2119, %v2117
  %v2121 = vpop.permute.xlu0 %2120
  %v2123 = vlaneseq
  %v2124 = vshrl.u32 %v2123, 7
  %v2125 = vsub.s32 0, %v2124
  %v2126 = vrot.slane %v2103, %v2125
  %v2127 = vadd.f32 %v2121, %v2126
  %2128 = vset.pattern.permute.xlu0 1
  %2129 = vperm.xlu0 %2128, %v2117
  %v2130 = vpop.permute.xlu0 %2129
  %v2132 = vlaneseq
  %v2133 = vshrl.u32 %v2132, 7
  %v2134 = vsub.s32 1, %v2133
  %v2135 = vrot.slane %v2103, %v2134
  %v2136 = vadd.f32 %v2130, %v2135
  %vm2137 = vcmp.gt.f32.partialorder %v2136, %v2127
  %v2138 = vsel %vm2137, 1, 0
  %v2139 = vmax.f32 %v2127, %v2136
  %2140 = vset.pattern.permute.xlu0 2
  %2141 = vperm.xlu0 %2140, %v2117
  %v2142 = vpop.permute.xlu0 %2141
  %v2144 = vlaneseq
  %v2145 = vshrl.u32 %v2144, 7
  %v2146 = vsub.s32 2, %v2145
  %v2147 = vrot.slane %v2103, %v2146
  %v2148 = vadd.f32 %v2142, %v2147
  %vm2149 = vcmp.gt.f32.partialorder %v2148, %v2139
  %v2150 = vsel %vm2149, 2, %v2138
  %v2151 = vmax.f32 %v2139, %v2148
  %2152 = vset.pattern.permute.xlu0 3
  %2153 = vperm.xlu0 %2152, %v2117
  %v2154 = vpop.permute.xlu0 %2153
  %v2156 = vlaneseq
  %v2157 = vshrl.u32 %v2156, 7
  %v2158 = vsub.s32 3, %v2157
  %v2159 = vrot.slane %v2103, %v2158
  %v2160 = vadd.f32 %v2154, %v2159
  %vm2161 = vcmp.gt.f32.partialorder %v2160, %v2151
  %v2162 = vsel %vm2161, 3, %v2150
  %v2163 = vmax.f32 %v2151, %v2160
  %2164 = vset.pattern.permute.xlu0 4
  %2165 = vperm.xlu0 %2164, %v2117
  %v2166 = vpop.permute.xlu0 %2165
  %v2168 = vlaneseq
  %v2169 = vshrl.u32 %v2168, 7
  %v2170 = vsub.s32 4, %v2169
  %v2171 = vrot.slane %v2103, %v2170
  %v2172 = vadd.f32 %v2166, %v2171
  %vm2173 = vcmp.gt.f32.partialorder %v2172, %v2163
  %v2174 = vsel %vm2173, 4, %v2162
  %v2175 = vmax.f32 %v2163, %v2172
  %2176 = vset.pattern.permute.xlu0 5
  %2177 = vperm.xlu0 %2176, %v2117
  %v2178 = vpop.permute.xlu0 %2177
  %v2180 = vlaneseq
  %v2181 = vshrl.u32 %v2180, 7
  %v2182 = vsub.s32 5, %v2181
  %v2183 = vrot.slane %v2103, %v2182
  %v2184 = vadd.f32 %v2178, %v2183
  %vm2185 = vcmp.gt.f32.partialorder %v2184, %v2175
  %v2186 = vsel %vm2185, 5, %v2174
  %v2187 = vmax.f32 %v2175, %v2184
  %2188 = vset.pattern.permute.xlu0 6
  %2189 = vperm.xlu0 %2188, %v2117
  %v2190 = vpop.permute.xlu0 %2189
  %v2192 = vlaneseq
  %v2193 = vshrl.u32 %v2192, 7
  %v2194 = vsub.s32 6, %v2193
  %v2195 = vrot.slane %v2103, %v2194
  %v2196 = vadd.f32 %v2190, %v2195
  %vm2197 = vcmp.gt.f32.partialorder %v2196, %v2187
  %v2198 = vsel %vm2197, 6, %v2186
  %v2199 = vmax.f32 %v2187, %v2196
  %2200 = vset.pattern.permute.xlu0 7
  %2201 = vperm.xlu0 %2200, %v2117
  %v2202 = vpop.permute.xlu0 %2201
  %v2204 = vlaneseq
  %v2205 = vshrl.u32 %v2204, 7
  %v2206 = vsub.s32 7, %v2205
  %v2207 = vrot.slane %v2103, %v2206
  %v2208 = vadd.f32 %v2202, %v2207
  %vm2209 = vcmp.gt.f32.partialorder %v2208, %v2199
  %v2210 = vsel %vm2209, 7, %v2198
  %v2211 = vmax.f32 %v2199, %v2208
  %v2212 = vld [vmem:[%s558] sm:$0xff]
  %v2213 = vadd.f32 %v2211, %v2116
  %v2214 = vsub.f32 %v2213, %v2117
  %2216 = vset.pattern.permute.xlu0 0
  %2217 = vperm.xlu0 %2216, %v2212
  %v2218 = vpop.permute.xlu0 %2217
  %v2220 = vmul.f32 %v2218, %v2214
  %v2221 = vadd.f32 %v2117, %v2220
  %2222 = vst.msk [vmem:[#allocation10] sm:$0xff] %vm2094, %v2221
  %s2223 = scalar_lea.vmem %s13, 8
  %2224 = vst.msk [vmem:[%s2223] sm:$0xff] %vm2094, %v2210
  %s2225 = scalar_lea.vmem [#allocation9], 16
  %v2226 = vld [vmem:[%s2225] sm:$0xff]
  %v2227 = vld [vmem:[#allocation10] sm:$0xff]
  %2229 = vset.pattern.permute.xlu0 0
  %2230 = vperm.xlu0 %2229, %v2227
  %v2231 = vpop.permute.xlu0 %2230
  %v2233 = vadd.f32 %v2231, %v2126
  %2234 = vset.pattern.permute.xlu0 1
  %2235 = vperm.xlu0 %2234, %v2227
  %v2236 = vpop.permute.xlu0 %2235
  %v2238 = vadd.f32 %v2236, %v2135
  %vm2239 = vcmp.gt.f32.partialorder %v2238, %v2233
  %v2240 = vsel %vm2239, 1, 0
  %v2241 = vmax.f32 %v2233, %v2238
  %2242 = vset.pattern.permute.xlu0 2
  %2243 = vperm.xlu0 %2242, %v2227
  %v2244 = vpop.permute.xlu0 %2243
  %v2246 = vadd.f32 %v2244, %v2147
  %vm2247 = vcmp.gt.f32.partialorder %v2246, %v2241
  %v2248 = vsel %vm2247, 2, %v2240
  %v2249 = vmax.f32 %v2241, %v2246
  %2250 = vset.pattern.permute.xlu0 3
  %2251 = vperm.xlu0 %2250, %v2227
  %v2252 = vpop.permute.xlu0 %2251
  %v2254 = vadd.f32 %v2252, %v2159
  %vm2255 = vcmp.gt.f32.partialorder %v2254, %v2249
  %v2256 = vsel %vm2255, 3, %v2248
  %v2257 = vmax.f32 %v2249, %v2254
  %2258 = vset.pattern.permute.xlu0 4
  %2259 = vperm.xlu0 %2258, %v2227
  %v2260 = vpop.permute.xlu0 %2259
  %v2262 = vadd.f32 %v2260, %v2171
  %vm2263 = vcmp.gt.f32.partialorder %v2262, %v2257
  %v2264 = vsel %vm2263, 4, %v2256
  %v2265 = vmax.f32 %v2257, %v2262
  %2266 = vset.pattern.permute.xlu0 5
  %2267 = vperm.xlu0 %2266, %v2227
  %v2268 = vpop.permute.xlu0 %2267
  %v2270 = vadd.f32 %v2268, %v2183
  %vm2271 = vcmp.gt.f32.partialorder %v2270, %v2265
  %v2272 = vsel %vm2271, 5, %v2264
  %v2273 = vmax.f32 %v2265, %v2270
  %2274 = vset.pattern.permute.xlu0 6
  %2275 = vperm.xlu0 %2274, %v2227
  %v2276 = vpop.permute.xlu0 %2275
  %v2278 = vadd.f32 %v2276, %v2195
  %vm2279 = vcmp.gt.f32.partialorder %v2278, %v2273
  %v2280 = vsel %vm2279, 6, %v2272
  %v2281 = vmax.f32 %v2273, %v2278
  %2282 = vset.pattern.permute.xlu0 7
  %2283 = vperm.xlu0 %2282, %v2227
  %v2284 = vpop.permute.xlu0 %2283
  %v2286 = vadd.f32 %v2284, %v2207
  %vm2287 = vcmp.gt.f32.partialorder %v2286, %v2281
  %v2288 = vsel %vm2287, 7, %v2280
  %v2289 = vmax.f32 %v2281, %v2286
  %v2290 = vld [vmem:[%s774] sm:$0xff]
  %v2291 = vadd.f32 %v2289, %v2226
  %v2292 = vsub.f32 %v2291, %v2227
  %2294 = vset.pattern.permute.xlu0 0
  %2295 = vperm.xlu0 %2294, %v2290
  %v2296 = vpop.permute.xlu0 %2295
  %v2298 = vmul.f32 %v2296, %v2292
  %v2299 = vadd.f32 %v2227, %v2298
  %2300 = vst.msk [vmem:[#allocation10] sm:$0xff] %vm2094, %v2299
  %s2301 = scalar_lea.vmem %s13, 16
  %2302 = vst.msk [vmem:[%s2301] sm:$0xff] %vm2094, %v2288
  %s2303 = scalar_lea.vmem [#allocation9], 24
  %v2304 = vld [vmem:[%s2303] sm:$0xff]
  %v2305 = vld [vmem:[#allocation10] sm:$0xff]
  %2307 = vset.pattern.permute.xlu0 0
  %2308 = vperm.xlu0 %2307, %v2305
  %v2309 = vpop.permute.xlu0 %2308
  %v2311 = vadd.f32 %v2309, %v2126
  %2312 = vset.pattern.permute.xlu0 1
  %2313 = vperm.xlu0 %2312, %v2305
  %v2314 = vpop.permute.xlu0 %2313
  %v2316 = vadd.f32 %v2314, %v2135
  %vm2317 = vcmp.gt.f32.partialorder %v2316, %v2311
  %v2318 = vsel %vm2317, 1, 0
  %v2319 = vmax.f32 %v2311, %v2316
  %2320 = vset.pattern.permute.xlu0 2
  %2321 = vperm.xlu0 %2320, %v2305
  %v2322 = vpop.permute.xlu0 %2321
  %v2324 = vadd.f32 %v2322, %v2147
  %vm2325 = vcmp.gt.f32.partialorder %v2324, %v2319
  %v2326 = vsel %vm2325, 2, %v2318
  %v2327 = vmax.f32 %v2319, %v2324
  %2328 = vset.pattern.permute.xlu0 3
  %2329 = vperm.xlu0 %2328, %v2305
  %v2330 = vpop.permute.xlu0 %2329
  %v2332 = vadd.f32 %v2330, %v2159
  %vm2333 = vcmp.gt.f32.partialorder %v2332, %v2327
  %v2334 = vsel %vm2333, 3, %v2326
  %v2335 = vmax.f32 %v2327, %v2332
  %2336 = vset.pattern.permute.xlu0 4
  %2337 = vperm.xlu0 %2336, %v2305
  %v2338 = vpop.permute.xlu0 %2337
  %v2340 = vadd.f32 %v2338, %v2171
  %vm2341 = vcmp.gt.f32.partialorder %v2340, %v2335
  %v2342 = vsel %vm2341, 4, %v2334
  %v2343 = vmax.f32 %v2335, %v2340
  %2344 = vset.pattern.permute.xlu0 5
  %2345 = vperm.xlu0 %2344, %v2305
  %v2346 = vpop.permute.xlu0 %2345
  %v2348 = vadd.f32 %v2346, %v2183
  %vm2349 = vcmp.gt.f32.partialorder %v2348, %v2343
  %v2350 = vsel %vm2349, 5, %v2342
  %v2351 = vmax.f32 %v2343, %v2348
  %2352 = vset.pattern.permute.xlu0 6
  %2353 = vperm.xlu0 %2352, %v2305
  %v2354 = vpop.permute.xlu0 %2353
  %v2356 = vadd.f32 %v2354, %v2195
  %vm2357 = vcmp.gt.f32.partialorder %v2356, %v2351
  %v2358 = vsel %vm2357, 6, %v2350
  %v2359 = vmax.f32 %v2351, %v2356
  %2360 = vset.pattern.permute.xlu0 7
  %2361 = vperm.xlu0 %2360, %v2305
  %v2362 = vpop.permute.xlu0 %2361
  %v2364 = vadd.f32 %v2362, %v2207
  %vm2365 = vcmp.gt.f32.partialorder %v2364, %v2359
  %v2366 = vsel %vm2365, 7, %v2358
  %v2367 = vmax.f32 %v2359, %v2364
  %v2368 = vld [vmem:[%s990] sm:$0xff]
  %v2369 = vadd.f32 %v2367, %v2304
  %v2370 = vsub.f32 %v2369, %v2305
  %2372 = vset.pattern.permute.xlu0 0
  %2373 = vperm.xlu0 %2372, %v2368
  %v2374 = vpop.permute.xlu0 %2373
  %v2376 = vmul.f32 %v2374, %v2370
  %v2377 = vadd.f32 %v2305, %v2376
  %2378 = vst.msk [vmem:[#allocation10] sm:$0xff] %vm2094, %v2377
  %s2379 = scalar_lea.vmem %s13, 24
  %2380 = vst.msk [vmem:[%s2379] sm:$0xff] %vm2094, %v2366
  %s2381 = scalar_lea.vmem [#allocation9], 32
  %v2382 = vld [vmem:[%s2381] sm:$0xff]
  %v2383 = vld [vmem:[#allocation10] sm:$0xff]
  %2385 = vset.pattern.permute.xlu0 0
  %2386 = vperm.xlu0 %2385, %v2383
  %v2387 = vpop.permute.xlu0 %2386
  %v2389 = vadd.f32 %v2387, %v2126
  %2390 = vset.pattern.permute.xlu0 1
  %2391 = vperm.xlu0 %2390, %v2383
  %v2392 = vpop.permute.xlu0 %2391
  %v2394 = vadd.f32 %v2392, %v2135
  %vm2395 = vcmp.gt.f32.partialorder %v2394, %v2389
  %v2396 = vsel %vm2395, 1, 0
  %v2397 = vmax.f32 %v2389, %v2394
  %2398 = vset.pattern.permute.xlu0 2
  %2399 = vperm.xlu0 %2398, %v2383
  %v2400 = vpop.permute.xlu0 %2399
  %v2402 = vadd.f32 %v2400, %v2147
  %vm2403 = vcmp.gt.f32.partialorder %v2402, %v2397
  %v2404 = vsel %vm2403, 2, %v2396
  %v2405 = vmax.f32 %v2397, %v2402
  %2406 = vset.pattern.permute.xlu0 3
  %2407 = vperm.xlu0 %2406, %v2383
  %v2408 = vpop.permute.xlu0 %2407
  %v2410 = vadd.f32 %v2408, %v2159
  %vm2411 = vcmp.gt.f32.partialorder %v2410, %v2405
  %v2412 = vsel %vm2411, 3, %v2404
  %v2413 = vmax.f32 %v2405, %v2410
  %2414 = vset.pattern.permute.xlu0 4
  %2415 = vperm.xlu0 %2414, %v2383
  %v2416 = vpop.permute.xlu0 %2415
  %v2418 = vadd.f32 %v2416, %v2171
  %vm2419 = vcmp.gt.f32.partialorder %v2418, %v2413
  %v2420 = vsel %vm2419, 4, %v2412
  %v2421 = vmax.f32 %v2413, %v2418
  %2422 = vset.pattern.permute.xlu0 5
  %2423 = vperm.xlu0 %2422, %v2383
  %v2424 = vpop.permute.xlu0 %2423
  %v2426 = vadd.f32 %v2424, %v2183
  %vm2427 = vcmp.gt.f32.partialorder %v2426, %v2421
  %v2428 = vsel %vm2427, 5, %v2420
  %v2429 = vmax.f32 %v2421, %v2426
  %2430 = vset.pattern.permute.xlu0 6
  %2431 = vperm.xlu0 %2430, %v2383
  %v2432 = vpop.permute.xlu0 %2431
  %v2434 = vadd.f32 %v2432, %v2195
  %vm2435 = vcmp.gt.f32.partialorder %v2434, %v2429
  %v2436 = vsel %vm2435, 6, %v2428
  %v2437 = vmax.f32 %v2429, %v2434
  %2438 = vset.pattern.permute.xlu0 7
  %2439 = vperm.xlu0 %2438, %v2383
  %v2440 = vpop.permute.xlu0 %2439
  %v2442 = vadd.f32 %v2440, %v2207
  %vm2443 = vcmp.gt.f32.partialorder %v2442, %v2437
  %v2444 = vsel %vm2443, 7, %v2436
  %v2445 = vmax.f32 %v2437, %v2442
  %v2446 = vld [vmem:[%s992] sm:$0xff]
  %v2447 = vadd.f32 %v2445, %v2382
  %v2448 = vsub.f32 %v2447, %v2383
  %2450 = vset.pattern.permute.xlu0 0
  %2451 = vperm.xlu0 %2450, %v2446
  %v2452 = vpop.permute.xlu0 %2451
  %v2454 = vmul.f32 %v2452, %v2448
  %v2455 = vadd.f32 %v2383, %v2454
  %2456 = vst.msk [vmem:[#allocation10] sm:$0xff] %vm2094, %v2455
  %s2457 = scalar_lea.vmem %s13, 32
  %2458 = vst.msk [vmem:[%s2457] sm:$0xff] %vm2094, %v2444
  %s2459 = scalar_lea.vmem [#allocation9], 40
  %v2460 = vld [vmem:[%s2459] sm:$0xff]
  %v2461 = vld [vmem:[#allocation10] sm:$0xff]
  %2463 = vset.pattern.permute.xlu0 0
  %2464 = vperm.xlu0 %2463, %v2461
  %v2465 = vpop.permute.xlu0 %2464
  %v2467 = vadd.f32 %v2465, %v2126
  %2468 = vset.pattern.permute.xlu0 1
  %2469 = vperm.xlu0 %2468, %v2461
  %v2470 = vpop.permute.xlu0 %2469
  %v2472 = vadd.f32 %v2470, %v2135
  %vm2473 = vcmp.gt.f32.partialorder %v2472, %v2467
  %v2474 = vsel %vm2473, 1, 0
  %v2475 = vmax.f32 %v2467, %v2472
  %2476 = vset.pattern.permute.xlu0 2
  %2477 = vperm.xlu0 %2476, %v2461
  %v2478 = vpop.permute.xlu0 %2477
  %v2480 = vadd.f32 %v2478, %v2147
  %vm2481 = vcmp.gt.f32.partialorder %v2480, %v2475
  %v2482 = vsel %vm2481, 2, %v2474
  %v2483 = vmax.f32 %v2475, %v2480
  %2484 = vset.pattern.permute.xlu0 3
  %2485 = vperm.xlu0 %2484, %v2461
  %v2486 = vpop.permute.xlu0 %2485
  %v2488 = vadd.f32 %v2486, %v2159
  %vm2489 = vcmp.gt.f32.partialorder %v2488, %v2483
  %v2490 = vsel %vm2489, 3, %v2482
  %v2491 = vmax.f32 %v2483, %v2488
  %2492 = vset.pattern.permute.xlu0 4
  %2493 = vperm.xlu0 %2492, %v2461
  %v2494 = vpop.permute.xlu0 %2493
  %v2496 = vadd.f32 %v2494, %v2171
  %vm2497 = vcmp.gt.f32.partialorder %v2496, %v2491
  %v2498 = vsel %vm2497, 4, %v2490
  %v2499 = vmax.f32 %v2491, %v2496
  %2500 = vset.pattern.permute.xlu0 5
  %2501 = vperm.xlu0 %2500, %v2461
  %v2502 = vpop.permute.xlu0 %2501
  %v2504 = vadd.f32 %v2502, %v2183
  %vm2505 = vcmp.gt.f32.partialorder %v2504, %v2499
  %v2506 = vsel %vm2505, 5, %v2498
  %v2507 = vmax.f32 %v2499, %v2504
  %2508 = vset.pattern.permute.xlu0 6
  %2509 = vperm.xlu0 %2508, %v2461
  %v2510 = vpop.permute.xlu0 %2509
  %v2512 = vadd.f32 %v2510, %v2195
  %vm2513 = vcmp.gt.f32.partialorder %v2512, %v2507
  %v2514 = vsel %vm2513, 6, %v2506
  %v2515 = vmax.f32 %v2507, %v2512
  %2516 = vset.pattern.permute.xlu0 7
  %2517 = vperm.xlu0 %2516, %v2461
  %v2518 = vpop.permute.xlu0 %2517
  %v2520 = vadd.f32 %v2518, %v2207
  %vm2521 = vcmp.gt.f32.partialorder %v2520, %v2515
  %v2522 = vsel %vm2521, 7, %v2514
  %v2523 = vmax.f32 %v2515, %v2520
  %v2524 = vld [vmem:[%s776] sm:$0xff]
  %v2525 = vadd.f32 %v2523, %v2460
  %v2526 = vsub.f32 %v2525, %v2461
  %2528 = vset.pattern.permute.xlu0 0
  %2529 = vperm.xlu0 %2528, %v2524
  %v2530 = vpop.permute.xlu0 %2529
  %v2532 = vmul.f32 %v2530, %v2526
  %v2533 = vadd.f32 %v2461, %v2532
  %2534 = vst.msk [vmem:[#allocation10] sm:$0xff] %vm2094, %v2533
  %s2535 = scalar_lea.vmem %s13, 40
  %2536 = vst.msk [vmem:[%s2535] sm:$0xff] %vm2094, %v2522
  %s2537 = scalar_lea.vmem [#allocation9], 48
  %v2538 = vld [vmem:[%s2537] sm:$0xff]
  %v2539 = vld [vmem:[#allocation10] sm:$0xff]
  %2541 = vset.pattern.permute.xlu0 0
  %2542 = vperm.xlu0 %2541, %v2539
  %v2543 = vpop.permute.xlu0 %2542
  %v2545 = vadd.f32 %v2543, %v2126
  %2546 = vset.pattern.permute.xlu0 1
  %2547 = vperm.xlu0 %2546, %v2539
  %v2548 = vpop.permute.xlu0 %2547
  %v2550 = vadd.f32 %v2548, %v2135
  %vm2551 = vcmp.gt.f32.partialorder %v2550, %v2545
  %v2552 = vsel %vm2551, 1, 0
  %v2553 = vmax.f32 %v2545, %v2550
  %2554 = vset.pattern.permute.xlu0 2
  %2555 = vperm.xlu0 %2554, %v2539
  %v2556 = vpop.permute.xlu0 %2555
  %v2558 = vadd.f32 %v2556, %v2147
  %vm2559 = vcmp.gt.f32.partialorder %v2558, %v2553
  %v2560 = vsel %vm2559, 2, %v2552
  %v2561 = vmax.f32 %v2553, %v2558
  %2562 = vset.pattern.permute.xlu0 3
  %2563 = vperm.xlu0 %2562, %v2539
  %v2564 = vpop.permute.xlu0 %2563
  %v2566 = vadd.f32 %v2564, %v2159
  %vm2567 = vcmp.gt.f32.partialorder %v2566, %v2561
  %v2568 = vsel %vm2567, 3, %v2560
  %v2569 = vmax.f32 %v2561, %v2566
  %2570 = vset.pattern.permute.xlu0 4
  %2571 = vperm.xlu0 %2570, %v2539
  %v2572 = vpop.permute.xlu0 %2571
  %v2574 = vadd.f32 %v2572, %v2171
  %vm2575 = vcmp.gt.f32.partialorder %v2574, %v2569
  %v2576 = vsel %vm2575, 4, %v2568
  %v2577 = vmax.f32 %v2569, %v2574
  %2578 = vset.pattern.permute.xlu0 5
  %2579 = vperm.xlu0 %2578, %v2539
  %v2580 = vpop.permute.xlu0 %2579
  %v2582 = vadd.f32 %v2580, %v2183
  %vm2583 = vcmp.gt.f32.partialorder %v2582, %v2577
  %v2584 = vsel %vm2583, 5, %v2576
  %v2585 = vmax.f32 %v2577, %v2582
  %2586 = vset.pattern.permute.xlu0 6
  %2587 = vperm.xlu0 %2586, %v2539
  %v2588 = vpop.permute.xlu0 %2587
  %v2590 = vadd.f32 %v2588, %v2195
  %vm2591 = vcmp.gt.f32.partialorder %v2590, %v2585
  %v2592 = vsel %vm2591, 6, %v2584
  %v2593 = vmax.f32 %v2585, %v2590
  %2594 = vset.pattern.permute.xlu0 7
  %2595 = vperm.xlu0 %2594, %v2539
  %v2596 = vpop.permute.xlu0 %2595
  %v2598 = vadd.f32 %v2596, %v2207
  %vm2599 = vcmp.gt.f32.partialorder %v2598, %v2593
  %v2600 = vsel %vm2599, 7, %v2592
  %v2601 = vmax.f32 %v2593, %v2598
  %v2602 = vld [vmem:[%s560] sm:$0xff]
  %v2603 = vadd.f32 %v2601, %v2538
  %v2604 = vsub.f32 %v2603, %v2539
  %2606 = vset.pattern.permute.xlu0 0
  %2607 = vperm.xlu0 %2606, %v2602
  %v2608 = vpop.permute.xlu0 %2607
  %v2610 = vmul.f32 %v2608, %v2604
  %v2611 = vadd.f32 %v2539, %v2610
  %2612 = vst.msk [vmem:[#allocation10] sm:$0xff] %vm2094, %v2611
  %s2613 = scalar_lea.vmem %s13, 48
  %2614 = vst.msk [vmem:[%s2613] sm:$0xff] %vm2094, %v2600
  %s2615 = scalar_lea.vmem [#allocation9], 56
  %v2616 = vld [vmem:[%s2615] sm:$0xff]
  %v2617 = vld [vmem:[#allocation10] sm:$0xff]
  %2619 = vset.pattern.permute.xlu0 0
  %2620 = vperm.xlu0 %2619, %v2617
  %v2621 = vpop.permute.xlu0 %2620
  %v2623 = vadd.f32 %v2621, %v2126
  %2624 = vset.pattern.permute.xlu0 1
  %2625 = vperm.xlu0 %2624, %v2617
  %v2626 = vpop.permute.xlu0 %2625
  %v2628 = vadd.f32 %v2626, %v2135
  %vm2629 = vcmp.gt.f32.partialorder %v2628, %v2623
  %v2630 = vsel %vm2629, 1, 0
  %v2631 = vmax.f32 %v2623, %v2628
  %2632 = vset.pattern.permute.xlu0 2
  %2633 = vperm.xlu0 %2632, %v2617
  %v2634 = vpop.permute.xlu0 %2633
  %v2636 = vadd.f32 %v2634, %v2147
  %vm2637 = vcmp.gt.f32.partialorder %v2636, %v2631
  %v2638 = vsel %vm2637, 2, %v2630
  %v2639 = vmax.f32 %v2631, %v2636
  %2640 = vset.pattern.permute.xlu0 3
  %2641 = vperm.xlu0 %2640, %v2617
  %v2642 = vpop.permute.xlu0 %2641
  %v2644 = vadd.f32 %v2642, %v2159
  %vm2645 = vcmp.gt.f32.partialorder %v2644, %v2639
  %v2646 = vsel %vm2645, 3, %v2638
  %v2647 = vmax.f32 %v2639, %v2644
  %2648 = vset.pattern.permute.xlu0 4
  %2649 = vperm.xlu0 %2648, %v2617
  %v2650 = vpop.permute.xlu0 %2649
  %v2652 = vadd.f32 %v2650, %v2171
  %vm2653 = vcmp.gt.f32.partialorder %v2652, %v2647
  %v2654 = vsel %vm2653, 4, %v2646
  %v2655 = vmax.f32 %v2647, %v2652
  %2656 = vset.pattern.permute.xlu0 5
  %2657 = vperm.xlu0 %2656, %v2617
  %v2658 = vpop.permute.xlu0 %2657
  %v2660 = vadd.f32 %v2658, %v2183
  %vm2661 = vcmp.gt.f32.partialorder %v2660, %v2655
  %v2662 = vsel %vm2661, 5, %v2654
  %v2663 = vmax.f32 %v2655, %v2660
  %2664 = vset.pattern.permute.xlu0 6
  %2665 = vperm.xlu0 %2664, %v2617
  %v2666 = vpop.permute.xlu0 %2665
  %v2668 = vadd.f32 %v2666, %v2195
  %vm2669 = vcmp.gt.f32.partialorder %v2668, %v2663
  %v2670 = vsel %vm2669, 6, %v2662
  %v2671 = vmax.f32 %v2663, %v2668
  %2672 = vset.pattern.permute.xlu0 7
  %2673 = vperm.xlu0 %2672, %v2617
  %v2674 = vpop.permute.xlu0 %2673
  %v2676 = vadd.f32 %v2674, %v2207
  %vm2677 = vcmp.gt.f32.partialorder %v2676, %v2671
  %v2678 = vsel %vm2677, 7, %v2670
  %v2679 = vmax.f32 %v2671, %v2676
  %v2680 = vld [vmem:[%s345] sm:$0xff]
  %v2681 = vadd.f32 %v2679, %v2616
  %v2682 = vsub.f32 %v2681, %v2617
  %2684 = vset.pattern.permute.xlu0 0
  %2685 = vperm.xlu0 %2684, %v2680
  %v2686 = vpop.permute.xlu0 %2685
  %v2688 = vmul.f32 %v2686, %v2682
  %v2689 = vadd.f32 %v2617, %v2688
  %2690 = vst.msk [vmem:[#allocation10] sm:$0xff] %vm2094, %v2689
  %s2691 = scalar_lea.vmem %s13, 56
  %2692 = vst.msk [vmem:[%s2691] sm:$0xff] %vm2094, %v2678
  %v2693 = vld [vmem:[#allocation10] sm:$0xff]
  %v2694 = vld [vmem:[%s10] sm:$0x1]
  %v2696 = vlaneseq
  %v2697 = vshrl.u32 %v2696, 7
  %v2698 = vsub.s32 0, %v2697
  %v2699 = vrot.slane %v2694, %v2698
  %v2701 = vadd.f32 %v2693, %v2699
  %2703 = vrot.lane.b32.xlu0 %v2701, 1
  %v2704 = vpop.permute.xlu0 %2703
  %vm2706 = vcmp.gt.f32.partialorder %v2701, %v2704
  %v2707 = vsel %vm2706, 1, 0
  %2708 = vrot.lane.b32.xlu0 %v2701, 127
  %v2709 = vpop.permute.xlu0 %2708
  %v2711 = vmax.f32 %v2701, %v2709
  %2713 = vrot.lane.b32.xlu0 %v2711, 2
  %v2714 = vpop.permute.xlu0 %2713
  %vm2716 = vcmp.gt.f32.partialorder %v2701, %v2714
  %2717 = vrot.lane.b32.xlu0 %v2707, 1
  %v2718 = vpop.permute.xlu0 %2717
  %v2719 = vsel %vm2716, 2, %v2718
  %2720 = vrot.lane.b32.xlu0 %v2701, 126
  %v2721 = vpop.permute.xlu0 %2720
  %v2723 = vmax.f32 %v2711, %v2721
  %2725 = vrot.lane.b32.xlu0 %v2723, 3
  %v2726 = vpop.permute.xlu0 %2725
  %vm2728 = vcmp.gt.f32.partialorder %v2701, %v2726
  %2729 = vrot.lane.b32.xlu0 %v2719, 1
  %v2730 = vpop.permute.xlu0 %2729
  %v2731 = vsel %vm2728, 3, %v2730
  %2732 = vrot.lane.b32.xlu0 %v2701, 125
  %v2733 = vpop.permute.xlu0 %2732
  %v2735 = vmax.f32 %v2723, %v2733
  %2737 = vrot.lane.b32.xlu0 %v2735, 4
  %v2738 = vpop.permute.xlu0 %2737
  %vm2740 = vcmp.gt.f32.partialorder %v2701, %v2738
  %2741 = vrot.lane.b32.xlu0 %v2731, 1
  %v2742 = vpop.permute.xlu0 %2741
  %v2743 = vsel %vm2740, 4, %v2742
  %2744 = vrot.lane.b32.xlu0 %v2701, 124
  %v2745 = vpop.permute.xlu0 %2744
  %v2747 = vmax.f32 %v2735, %v2745
  %2749 = vrot.lane.b32.xlu0 %v2747, 5
  %v2750 = vpop.permute.xlu0 %2749
  %vm2752 = vcmp.gt.f32.partialorder %v2701, %v2750
  %2753 = vrot.lane.b32.xlu0 %v2743, 1
  %v2754 = vpop.permute.xlu0 %2753
  %v2755 = vsel %vm2752, 5, %v2754
  %2756 = vrot.lane.b32.xlu0 %v2701, 123
  %v2757 = vpop.permute.xlu0 %2756
  %v2759 = vmax.f32 %v2747, %v2757
  %2761 = vrot.lane.b32.xlu0 %v2759, 6
  %v2762 = vpop.permute.xlu0 %2761
  %vm2764 = vcmp.gt.f32.partialorder %v2701, %v2762
  %2765 = vrot.lane.b32.xlu0 %v2755, 1
  %v2766 = vpop.permute.xlu0 %2765
  %v2767 = vsel %vm2764, 6, %v2766
  %2768 = vrot.lane.b32.xlu0 %v2701, 122
  %v2769 = vpop.permute.xlu0 %2768
  %v2771 = vmax.f32 %v2759, %v2769
  %2773 = vrot.lane.b32.xlu0 %v2771, 7
  %v2774 = vpop.permute.xlu0 %2773
  %vm2776 = vcmp.gt.f32.partialorder %v2701, %v2774
  %2777 = vrot.lane.b32.xlu0 %v2767, 1
  %v2778 = vpop.permute.xlu0 %2777
  %v2779 = vsel %vm2776, 7, %v2778
  %2780 = vrot.lane.b32.xlu0 %v2701, 121
  %v2781 = vpop.permute.xlu0 %2780
  %v2783 = vmax.f32 %v2771, %v2781
  %vm2784 = vcmask 7168
  %2785 = vst.msk [vmem:[%s11] sm:$0xff] %vm2784, %v2783
  %2786 = vrot.lane.b32.xlu0 %v2779, 121
  %v2787 = vpop.permute.xlu0 %2786
  %2788 = vst.msk [vmem:[%s12] sm:$0xff] %vm2784, %v2787
  // Predicated region
  $region46: #{bilstm_crf_forward.1} parent=0 // pred_check
    _
  $region47: #{bilstm_crf_forward.1} parent=0 // pred_check_branch
    %2790 = sbr.rel (0) target = $region49
  $region48: #{bilstm_crf_forward.1} parent=0 // pred_region
    _
  $region49: #{bilstm_crf_forward.1} parent=0 // pred_fallthru
    _
  // Predicated region
  $region50: #{bilstm_crf_forward.1} parent=0 // pred_check
    _
  $region51: #{bilstm_crf_forward.1} parent=0 // pred_check_branch
    %2792 = sbr.rel (0) target = $region53
  $region52: #{bilstm_crf_forward.1} parent=0 // pred_region
    _
  $region53: #{bilstm_crf_forward.1} parent=0 // pred_fallthru
    _
  // Predicated region
  $region54: #{bilstm_crf_forward.1} parent=0 // pred_check
    _
  $region55: #{bilstm_crf_forward.1} parent=0 // pred_check_branch
    %2794 = sbr.rel (0) target = $region57
  $region56: #{bilstm_crf_forward.1} parent=0 // pred_region
    _
  $region57: #{bilstm_crf_forward.1} parent=0 // pred_fallthru
    _
  // Predicated region
  $region58: #{bilstm_crf_forward.1} parent=0 // pred_check
    _
  $region59: #{bilstm_crf_forward.1} parent=0 // pred_check_branch
    %2796 = sbr.rel (0) target = $region61
  $region60: #{bilstm_crf_forward.1} parent=0 // pred_region
    _
  $region61: #{bilstm_crf_forward.1} parent=0 // pred_fallthru
    _
  // Predicated region
  $region62: #{bilstm_crf_forward.1} parent=0 // pred_check
    _
  $region63: #{bilstm_crf_forward.1} parent=0 // pred_check_branch
    %2798 = sbr.rel (0) target = $region65
  $region64: #{bilstm_crf_forward.1} parent=0 // pred_region
    _
  $region65: #{bilstm_crf_forward.1} parent=0 // pred_fallthru
    _
  // Predicated region
  $region66: #{bilstm_crf_forward.1} parent=0 // pred_check
    _
  $region67: #{bilstm_crf_forward.1} parent=0 // pred_check_branch
    %2800 = sbr.rel (0) target = $region69
  $region68: #{bilstm_crf_forward.1} parent=0 // pred_region
    _
  $region69: #{bilstm_crf_forward.1} parent=0 // pred_fallthru
    _

</llo_original>
